<compile_context>
chip_gen: v7x
topology: tpu7x:2x2x1
jax: 0.10.0
libtpu: 0.0.40
codegen_flags: <defaults>
</compile_context>

<pallas_src>
import functools

import jax
import jax.numpy as jnp
from jax.experimental import pallas as pl
from jax.experimental.pallas import tpu as pltpu


def _round_up(x, m):
    return ((x + m - 1) // m) * m


# ----------------------------------------------------------------------------
# Pallas kernel: (M,K) @ (K,N) + bias, then activation, in ONE reduction step
# ----------------------------------------------------------------------------
def _mm_bias_act_kernel(x_ref, w_ref, b_ref, o_ref, *, act):
    y = jnp.dot(x_ref[...], w_ref[...], preferred_element_type=jnp.float32)
    y = y + b_ref[...]
    if act == "tanh":
        y = jnp.tanh(y)
    elif act == "sigmoid":
        # exp + reciprocal both run on the EUP/VPU; spelled out explicitly to
        # keep the lowering trivially supported.
        y = 1.0 / (1.0 + jnp.exp(-y))
    # act == "linear": no-op
    o_ref[...] = y.astype(o_ref.dtype)


def matmul_bias_act(x, w, b, act):
    """x: (M,K) f32, w: (K,N) f32, b: (N,) f32 -> act(x@w + b) via Pallas."""
    M, K = x.shape
    K2, N = w.shape
    assert K == K2

    Kp = _round_up(K, 128)                       # full K in one tile
    Np = _round_up(N, 128)
    TN = Np if Np <= 512 else 512
    Np = _round_up(Np, TN)
    # Split M into "parallel" blocks when large enough (multi-TC chips).
    TM = 256 if M >= 512 else _round_up(M, 8)
    Mp = _round_up(M, TM)

    xp = jnp.pad(x, ((0, Mp - M), (0, Kp - K)))
    wp = jnp.pad(w, ((0, Kp - K), (0, Np - N)))
    bp = jnp.pad(b, (0, Np - N)).reshape(1, Np)

    grid = (Mp // TM, Np // TN)

    out = pl.pallas_call(
        functools.partial(_mm_bias_act_kernel, act=act),
        out_shape=jax.ShapeDtypeStruct((Mp, Np), jnp.float32),
        grid_spec=pltpu.PrefetchScalarGridSpec(
            num_scalar_prefetch=0,
            grid=grid,
            in_specs=[
                pl.BlockSpec((TM, Kp), lambda i, j: (i, 0)),
                pl.BlockSpec((Kp, TN), lambda i, j: (0, j)),
                pl.BlockSpec((1, TN), lambda i, j: (0, j)),
            ],
            out_specs=pl.BlockSpec((TM, TN), lambda i, j: (i, j)),
        ),
        compiler_params=pltpu.CompilerParams(
            dimension_semantics=("parallel", "parallel"),
            vmem_limit_bytes=32 * 1024 * 1024,
        ),
    )(xp, wp, bp)
    return out[:M, :N]


# ----------------------------------------------------------------------------
# Conv / pixel-shuffle glue (plain JAX feeding the Pallas kernel)
# ----------------------------------------------------------------------------
def conv2d_same(x, p, act):
    """KxK conv, stride 1, 'same' padding.  x: (N,H,W,Cin) -> (N,H,W,Cout)."""
    N, H, W, Cin = x.shape
    k = p["ksize"]
    pad = k // 2
    xp = jnp.pad(x, ((0, 0), (pad, pad), (pad, pad), (0, 0)))
    # TODO(synk): the k*k im2col taps are materialized by XLA outside the
    # kernel; at these sizes (<1.2 MB) that traffic is negligible — folding
    # the taps into the kernel grid would be a further (minor) win.
    cols = [xp[:, i:i + H, j:j + W, :] for i in range(k) for j in range(k)]
    xcol = jnp.concatenate(cols, axis=-1).reshape(N * H * W, k * k * Cin)
    y = matmul_bias_act(xcol, p["w"], p["b"], act)
    return y.reshape(N, H, W, -1)


def pixel_shuffle_nhwc(x, r):
    """PyTorch PixelShuffle semantics, NHWC layout."""
    N, H, W, Crr = x.shape
    C = Crr // (r * r)
    y = x.reshape(N, H, W, C, r, r)
    y = jnp.transpose(y, (0, 1, 4, 2, 5, 3))     # (N, H, rh, W, rw, C)
    return y.reshape(N, H * r, W * r, C)


# ----------------------------------------------------------------------------
# ESPCN forward (mirrors the PyTorch forward exactly)
# ----------------------------------------------------------------------------
def espcn_forward(x_nchw, P, upscale):
    x = jnp.transpose(x_nchw, (0, 2, 3, 1)).astype(jnp.float32)   # NHWC
    out = conv2d_same(x, P["conv1"], act="tanh")
    out = conv2d_same(out, P["conv2"], act="tanh")
    # sigmoid(pixel_shuffle(z)) == pixel_shuffle(sigmoid(z)): fuse the sigmoid
    # into the conv3 kernel epilogue, then just rearrange.
    out = conv2d_same(out, P["conv3"], act="sigmoid")
    out = pixel_shuffle_nhwc(out, upscale)
    return jnp.transpose(out, (0, 3, 1, 2))                       # NCHW


# ----------------------------------------------------------------------------
# Parameters (PyTorch OIHW weights, converted to im2col matmul layout)
# ----------------------------------------------------------------------------
def make_conv_params(key, cin, cout, ksize, std=0.05):
    kw_, kb_ = jax.random.split(key)
    w = jax.random.normal(kw_, (cout, cin, ksize, ksize), jnp.float32) * std
    b = jax.random.normal(kb_, (cout,), jnp.float32) * std
    # (Cout,Cin,kh,kw) -> (kh,kw,Cin,Cout) -> (k*k*Cin, Cout): matches im2col
    wmat = jnp.transpose(w, (2, 3, 1, 0)).reshape(ksize * ksize * cin, cout)
    return {"w": wmat, "b": b, "ksize": ksize, "w_oihw": w}


# ----------------------------------------------------------------------------
# Pure-JAX reference for a sanity check
# ----------------------------------------------------------------------------
def espcn_reference(x_nchw, P, upscale):
    def conv(x, p):
        pad = p["ksize"] // 2
        y = jax.lax.conv_general_dilated(
            x, p["w_oihw"], window_strides=(1, 1),
            padding=[(pad, pad), (pad, pad)],
            dimension_numbers=("NCHW", "OIHW", "NCHW"))
        return y + p["b"][None, :, None, None]

    out = jnp.tanh(conv(x_nchw, P["conv1"]))
    out = jnp.tanh(conv(out, P["conv2"]))
    out = conv(out, P["conv3"])
    N, Crr, H, W = out.shape
    r = upscale
    C = Crr // (r * r)
    out = out.reshape(N, C, r, r, H, W)
    out = jnp.transpose(out, (0, 1, 4, 2, 5, 3)).reshape(N, C, H * r, W * r)
    return jax.nn.sigmoid(out)


if __name__ == "__main__":
    key = jax.random.PRNGKey(0)
    kx, k1, k2, k3 = jax.random.split(key, 4)

    in_nc, upscale = 3, 2
    H = W = 16
    x = jax.random.normal(kx, (2, in_nc, H, W), jnp.float32)

    P = {
        "conv1": make_conv_params(k1, in_nc, 64, 5),
        "conv2": make_conv_params(k2, 64, 32, 3),
        "conv3": make_conv_params(k3, 32, in_nc * upscale ** 2, 3),
    }

    fwd = jax.jit(functools.partial(espcn_forward, P=P, upscale=upscale))
    y = fwd(x)
    jax.block_until_ready(y)
    assert y.shape == (2, in_nc, H * upscale, W * upscale), y.shape

    # Sanity check against a pure-JAX reference (loose tol for MXU matmul).
    y_ref = espcn_reference(x, P, upscale)
    err = float(jnp.max(jnp.abs(y - y_ref)))
    assert err < 5e-2, f"max abs err {err}"

    print("KERNEL_OK")
</pallas_src>

<mosaic_0001>
module attributes {stable_mosaic.version = 11 : i64} {
  func.func @_mm_bias_act_kernel(%arg0: i32, %arg1: i32, %arg2: memref<256x128xf32, #tpu.memory_space<vmem>>, %arg3: memref<128x128xf32, #tpu.memory_space<vmem>>, %arg4: memref<1x128xf32, #tpu.memory_space<vmem>>, %arg5: memref<256x128xf32, #tpu.memory_space<vmem>>) attributes {dimension_semantics = [#tpu.dimension_semantics<parallel>, #tpu.dimension_semantics<parallel>], iteration_bounds = array<i64: 2, 1>, scalar_prefetch = 0 : i64, scratch_operands = 0 : i64, tpu.core_type = #tpu.core_type<tc>, window_params = [{transform_indices = @transform_0, window_bounds = array<i64: 256, 128>}, {transform_indices = @transform_1, window_bounds = array<i64: 128, 128>}, {transform_indices = @transform_2, window_bounds = array<i64: 1, 128>}, {transform_indices = @transform_3, window_bounds = array<i64: 256, 128>}]} {
    %c0 = arith.constant 0 : index
    %c0_0 = arith.constant 0 : index
    %0 = vector.load %arg2[%c0, %c0_0] : memref<256x128xf32, #tpu.memory_space<vmem>>, vector<256x128xf32>
    %c0_1 = arith.constant 0 : index
    %c0_2 = arith.constant 0 : index
    %1 = vector.load %arg3[%c0_1, %c0_2] : memref<128x128xf32, #tpu.memory_space<vmem>>, vector<128x128xf32>
    %cst = arith.constant dense<0.000000e+00> : vector<256x128xf32>
    %2 = tpu.matmul %0, %1, %cst {dimension_numbers = #tpu.dot_dimension_numbers<[1], [0], [0], [1], [0, 0, 1, 1], [], []>} : vector<256x128xf32>, vector<128x128xf32>, vector<256x128xf32> -> vector<256x128xf32>
    %c0_3 = arith.constant 0 : index
    %c0_4 = arith.constant 0 : index
    %3 = vector.load %arg4[%c0_3, %c0_4] : memref<1x128xf32, #tpu.memory_space<vmem>>, vector<1x128xf32>
    %4 = vector.broadcast %3 : vector<1x128xf32> to vector<256x128xf32>
    %5 = arith.addf %2, %4 : vector<256x128xf32>
    %6 = math.tanh %5 : vector<256x128xf32>
    %c0_5 = arith.constant 0 : index
    %c0_6 = arith.constant 0 : index
    %7 = vector.load %arg5[%c0_5, %c0_6] : memref<256x128xf32, #tpu.memory_space<vmem>>, vector<256x128xf32>
    tpu.vector_store %arg5[%c0_5, %c0_6], %6 {strides = array<i32>} : memref<256x128xf32, #tpu.memory_space<vmem>>, vector<256x128xf32>,
    return
  }
  func.func @transform_0(%arg0: i32, %arg1: i32) -> (i32, i32) {
    %c0_i32 = arith.constant 0 : i32
    %c0_i32_0 = arith.constant 0 : i32
    return %arg0, %c0_i32 : i32, i32
  }
  func.func @transform_1(%arg0: i32, %arg1: i32) -> (i32, i32) {
    %c0_i32 = arith.constant 0 : i32
    %c0_i32_0 = arith.constant 0 : i32
    return %c0_i32, %arg1 : i32, i32
  }
  func.func @transform_2(%arg0: i32, %arg1: i32) -> (i32, i32) {
    %c0_i32 = arith.constant 0 : i32
    %c0_i32_0 = arith.constant 0 : i32
    return %c0_i32, %arg1 : i32, i32
  }
  func.func @transform_3(%arg0: i32, %arg1: i32) -> (i32, i32) {
    %c0_i32 = arith.constant 0 : i32
    return %arg0, %arg1 : i32, i32
  }
}

module attributes {stable_mosaic.version = 11 : i64} {
  func.func @_mm_bias_act_kernel(%arg0: i32, %arg1: i32, %arg2: memref<256x640xf32, #tpu.memory_space<vmem>>, %arg3: memref<640x128xf32, #tpu.memory_space<vmem>>, %arg4: memref<1x128xf32, #tpu.memory_space<vmem>>, %arg5: memref<256x128xf32, #tpu.memory_space<vmem>>) attributes {dimension_semantics = [#tpu.dimension_semantics<parallel>, #tpu.dimension_semantics<parallel>], iteration_bounds = array<i64: 2, 1>, scalar_prefetch = 0 : i64, scratch_operands = 0 : i64, tpu.core_type = #tpu.core_type<tc>, window_params = [{transform_indices = @transform_0, window_bounds = array<i64: 256, 640>}, {transform_indices = @transform_1, window_bounds = array<i64: 640, 128>}, {transform_indices = @transform_2, window_bounds = array<i64: 1, 128>}, {transform_indices = @transform_3, window_bounds = array<i64: 256, 128>}]} {
    %c0 = arith.constant 0 : index
    %c0_0 = arith.constant 0 : index
    %0 = vector.load %arg2[%c0, %c0_0] : memref<256x640xf32, #tpu.memory_space<vmem>>, vector<256x640xf32>
    %c0_1 = arith.constant 0 : index
    %c0_2 = arith.constant 0 : index
    %1 = vector.load %arg3[%c0_1, %c0_2] : memref<640x128xf32, #tpu.memory_space<vmem>>, vector<640x128xf32>
    %cst = arith.constant dense<0.000000e+00> : vector<256x128xf32>
    %2 = tpu.matmul %0, %1, %cst {dimension_numbers = #tpu.dot_dimension_numbers<[1], [0], [0], [1], [0, 0, 1, 1], [], []>} : vector<256x640xf32>, vector<640x128xf32>, vector<256x128xf32> -> vector<256x128xf32>
    %c0_3 = arith.constant 0 : index
    %c0_4 = arith.constant 0 : index
    %3 = vector.load %arg4[%c0_3, %c0_4] : memref<1x128xf32, #tpu.memory_space<vmem>>, vector<1x128xf32>
    %4 = vector.broadcast %3 : vector<1x128xf32> to vector<256x128xf32>
    %5 = arith.addf %2, %4 : vector<256x128xf32>
    %6 = math.tanh %5 : vector<256x128xf32>
    %c0_5 = arith.constant 0 : index
    %c0_6 = arith.constant 0 : index
    %7 = vector.load %arg5[%c0_5, %c0_6] : memref<256x128xf32, #tpu.memory_space<vmem>>, vector<256x128xf32>
    tpu.vector_store %arg5[%c0_5, %c0_6], %6 {strides = array<i32>} : memref<256x128xf32, #tpu.memory_space<vmem>>, vector<256x128xf32>,
    return
  }
  func.func @transform_0(%arg0: i32, %arg1: i32) -> (i32, i32) {
    %c0_i32 = arith.constant 0 : i32
    %c0_i32_0 = arith.constant 0 : i32
    return %arg0, %c0_i32 : i32, i32
  }
  func.func @transform_1(%arg0: i32, %arg1: i32) -> (i32, i32) {
    %c0_i32 = arith.constant 0 : i32
    %c0_i32_0 = arith.constant 0 : i32
    return %c0_i32, %arg1 : i32, i32
  }
  func.func @transform_2(%arg0: i32, %arg1: i32) -> (i32, i32) {
    %c0_i32 = arith.constant 0 : i32
    %c0_i32_0 = arith.constant 0 : i32
    return %c0_i32, %arg1 : i32, i32
  }
  func.func @transform_3(%arg0: i32, %arg1: i32) -> (i32, i32) {
    %c0_i32 = arith.constant 0 : i32
    return %arg0, %arg1 : i32, i32
  }
}

module attributes {stable_mosaic.version = 11 : i64} {
  func.func @_mm_bias_act_kernel(%arg0: i32, %arg1: i32, %arg2: memref<256x384xf32, #tpu.memory_space<vmem>>, %arg3: memref<384x128xf32, #tpu.memory_space<vmem>>, %arg4: memref<1x128xf32, #tpu.memory_space<vmem>>, %arg5: memref<256x128xf32, #tpu.memory_space<vmem>>) attributes {dimension_semantics = [#tpu.dimension_semantics<parallel>, #tpu.dimension_semantics<parallel>], iteration_bounds = array<i64: 2, 1>, scalar_prefetch = 0 : i64, scratch_operands = 0 : i64, tpu.core_type = #tpu.core_type<tc>, window_params = [{transform_indices = @transform_0, window_bounds = array<i64: 256, 384>}, {transform_indices = @transform_1, window_bounds = array<i64: 384, 128>}, {transform_indices = @transform_2, window_bounds = array<i64: 1, 128>}, {transform_indices = @transform_3, window_bounds = array<i64: 256, 128>}]} {
    %c0 = arith.constant 0 : index
    %c0_0 = arith.constant 0 : index
    %0 = vector.load %arg2[%c0, %c0_0] : memref<256x384xf32, #tpu.memory_space<vmem>>, vector<256x384xf32>
    %c0_1 = arith.constant 0 : index
    %c0_2 = arith.constant 0 : index
    %1 = vector.load %arg3[%c0_1, %c0_2] : memref<384x128xf32, #tpu.memory_space<vmem>>, vector<384x128xf32>
    %cst = arith.constant dense<0.000000e+00> : vector<256x128xf32>
    %2 = tpu.matmul %0, %1, %cst {dimension_numbers = #tpu.dot_dimension_numbers<[1], [0], [0], [1], [0, 0, 1, 1], [], []>} : vector<256x384xf32>, vector<384x128xf32>, vector<256x128xf32> -> vector<256x128xf32>
    %c0_3 = arith.constant 0 : index
    %c0_4 = arith.constant 0 : index
    %3 = vector.load %arg4[%c0_3, %c0_4] : memref<1x128xf32, #tpu.memory_space<vmem>>, vector<1x128xf32>
    %4 = vector.broadcast %3 : vector<1x128xf32> to vector<256x128xf32>
    %5 = arith.addf %2, %4 : vector<256x128xf32>
    %cst_5 = arith.constant 0.000000e+00 : f32
    %6 = vector.broadcast %cst_5 : f32 to vector<256x128xf32>
    %7 = arith.subf %6, %5 : vector<256x128xf32>
    %8 = math.exp %7 : vector<256x128xf32>
    %cst_6 = arith.constant 1.000000e+00 : f32
    %9 = vector.broadcast %cst_6 : f32 to vector<256x128xf32>
    %10 = arith.addf %9, %8 : vector<256x128xf32>
    %cst_7 = arith.constant 1.000000e+00 : f32
    %11 = vector.broadcast %cst_7 : f32 to vector<256x128xf32>
    %12 = arith.divf %11, %10 : vector<256x128xf32>
    %c0_8 = arith.constant 0 : index
    %c0_9 = arith.constant 0 : index
    %13 = vector.load %arg5[%c0_8, %c0_9] : memref<256x128xf32, #tpu.memory_space<vmem>>, vector<256x128xf32>
    tpu.vector_store %arg5[%c0_8, %c0_9], %12 {strides = array<i32>} : memref<256x128xf32, #tpu.memory_space<vmem>>, vector<256x128xf32>,
    return
  }
  func.func @transform_0(%arg0: i32, %arg1: i32) -> (i32, i32) {
    %c0_i32 = arith.constant 0 : i32
    %c0_i32_0 = arith.constant 0 : i32
    return %arg0, %c0_i32 : i32, i32
  }
  func.func @transform_1(%arg0: i32, %arg1: i32) -> (i32, i32) {
    %c0_i32 = arith.constant 0 : i32
    %c0_i32_0 = arith.constant 0 : i32
    return %c0_i32, %arg1 : i32, i32
  }
  func.func @transform_2(%arg0: i32, %arg1: i32) -> (i32, i32) {
    %c0_i32 = arith.constant 0 : i32
    %c0_i32_0 = arith.constant 0 : i32
    return %c0_i32, %arg1 : i32, i32
  }
  func.func @transform_3(%arg0: i32, %arg1: i32) -> (i32, i32) {
    %c0_i32 = arith.constant 0 : i32
    return %arg0, %arg1 : i32, i32
  }
}

</mosaic_0001>

<llo_original>
// kernel: espcn_forward.3
$region0: #{espcn_forward.3}
  #allocation0 [shape = 'u32[]', space=smem, size = 0x4, offset = 0x4, fixed_abs, tag = 'smem constant byte address 0x4 - core index']
  #allocation1 [shape = 'u32[144,128]{1,0:T(1,128)}', space=vmem, size = 0x12000, scoped, tag = 'internal scratch']
  %s0 = inlined_call_operand.vmem [shape: f32[512,128], index: 0, kind: input, shape index: {}]
  %s1 = inlined_call_operand.vmem [shape: f32[128,128], index: 1, kind: input, shape index: {}]
  %s2 = inlined_call_operand.vmem [shape: f32[1,128], index: 2, kind: input, shape index: {}]
  %s3 = inlined_call_operand.vmem [shape: f32[512,128], index: 3, kind: output, shape index: {}]
  %s4 = sld [smem:[#allocation0]]
  $region45: #{espcn_forward.3} parent=0
    _
  %s6 = ssub.s32 1, %s4
  %s7 = scalar_select 0, %s6, %s4
  loop: start=0, step=1, limit=4
  $region2: #{espcn_forward.3} parent=0 // loop_pre_header
    _
  $region3: #{espcn_forward.3} parent=0 // loop_header
    %s9 = sphi 0, %s13
    %p10 = scmp.ge.s32.totalorder %s9, 4
    %s16 = sphi 0, %s28
    %s17 = sphi 0, %s24
    %s18 = sphi 0, %s16
    %s19 = sphi 0, %s17
    %s20 = sphi 0, %s18
    %s21 = sphi 0, %s19
    %s31 = sphi 0, %s33
    %s34 = sphi 0, %s31
    %s35 = sphi 0, %s34
    %s51 = sphi 0, %s35
    %s57 = sphi 0, %s59
    %s60 = sphi 0, %s57
    %s61 = sphi 0, %s60
    %s77 = sphi 0, %s61
    %s83 = sphi 0, %s85
    %s86 = sphi 0, %s83
    %s87 = sphi 0, %s86
    %s103 = sphi 0, %s87
    %s111 = sphi 0, %s113
    %s114 = sphi 0, %s111
    %s115 = sphi 0, %s114
    %s131 = sphi 0, %s115
  $region4: #{espcn_forward.3} parent=0 // loop_header_branch
    %12 = sbr.rel (%p10) target = $region8
  $region5: #{espcn_forward.3} parent=0 // loop_body
    %s14 = ssub.s32 %s9, 1
    %s15 = ssub.s32 %s9, 2
    %s22 = sadd.s32 1, %s17
    %p23 = scmp.ge.s32.totalorder %s22, 1
    %s24 = scalar_select %p23, 0, %s22
    %s25 = sadd.s32 1, %s16
    %s26 = scalar_select %p23, %s25, %s16
    %p27 = scmp.ge.s32.totalorder %s26, 2
    %s28 = scalar_select %p27, 0, %s26
    %s29 = ssub.s32 %s16, %s28
    %p30 = scmp.eq.s32.totalorder %s29, 0
    %s32 = sadd.s32 %s31, 1
    %s33 = scalar_select %p30, %s31, %s32
    %p36 = pneg %p30
    %p37 = scmp.eq.s32.totalorder %s9, 1
    %p38 = por %p36, %p37
    %p39 = scmp.ne.s32.totalorder %s31, %s34
    %p40 = scmp.eq.s32.totalorder %s9, 0
    %p41 = por %p39, %p40
    %p42 = scmp.ne.s32.totalorder %s31, %s34
    %p43 = scmp.eq.s32.totalorder %s14, 1
    %p44 = por %p42, %p43
    %p45 = scmp.ne.s32.totalorder %s34, %s35
    %p46 = scmp.eq.s32.totalorder %s14, 0
    %p47 = por %p45, %p46
    %p48 = scmp.ne.s32.totalorder %s34, %s35
    %p49 = scmp.eq.s32.totalorder %s15, 1
    %p50 = por %p48, %p49
    %p52 = scmp.ne.s32.totalorder %s35, %s51
    %p53 = scmp.eq.s32.totalorder %s15, 0
    %p54 = por %p52, %p53
    %s55 = ssub.s32 %s17, %s24
    %p56 = scmp.eq.s32.totalorder %s55, 0
    %s58 = sadd.s32 %s57, 1
    %s59 = scalar_select %p56, %s57, %s58
    %p62 = pneg %p56
    %p63 = scmp.eq.s32.totalorder %s9, 1
    %p64 = por %p62, %p63
    %p65 = scmp.ne.s32.totalorder %s57, %s60
    %p66 = scmp.eq.s32.totalorder %s9, 0
    %p67 = por %p65, %p66
    %p68 = scmp.ne.s32.totalorder %s57, %s60
    %p69 = scmp.eq.s32.totalorder %s14, 1
    %p70 = por %p68, %p69
    %p71 = scmp.ne.s32.totalorder %s60, %s61
    %p72 = scmp.eq.s32.totalorder %s14, 0
    %p73 = por %p71, %p72
    %p74 = scmp.ne.s32.totalorder %s60, %s61
    %p75 = scmp.eq.s32.totalorder %s15, 1
    %p76 = por %p74, %p75
    %p78 = scmp.ne.s32.totalorder %s61, %s77
    %p79 = scmp.eq.s32.totalorder %s15, 0
    %p80 = por %p78, %p79
    %s81 = ssub.s32 %s17, %s24
    %p82 = scmp.eq.s32.totalorder %s81, 0
    %s84 = sadd.s32 %s83, 1
    %s85 = scalar_select %p82, %s83, %s84
    %p88 = pneg %p82
    %p89 = scmp.eq.s32.totalorder %s9, 1
    %p90 = por %p88, %p89
    %p91 = scmp.ne.s32.totalorder %s83, %s86
    %p92 = scmp.eq.s32.totalorder %s9, 0
    %p93 = por %p91, %p92
    %p94 = scmp.ne.s32.totalorder %s83, %s86
    %p95 = scmp.eq.s32.totalorder %s14, 1
    %p96 = por %p94, %p95
    %p97 = scmp.ne.s32.totalorder %s86, %s87
    %p98 = scmp.eq.s32.totalorder %s14, 0
    %p99 = por %p97, %p98
    %p100 = scmp.ne.s32.totalorder %s86, %s87
    %p101 = scmp.eq.s32.totalorder %s15, 1
    %p102 = por %p100, %p101
    %p104 = scmp.ne.s32.totalorder %s87, %s103
    %p105 = scmp.eq.s32.totalorder %s15, 0
    %p106 = por %p104, %p105
    %s107 = ssub.s32 %s16, %s28
    %s108 = ssub.s32 %s17, %s24
    %s109 = sor.u32 %s107, %s108
    %p110 = scmp.eq.s32.totalorder %s109, 0
    %s112 = sadd.s32 %s111, 1
    %s113 = scalar_select %p110, %s111, %s112
    %p116 = pneg %p110
    %p117 = scmp.eq.s32.totalorder %s9, 1
    %p118 = por %p116, %p117
    %p119 = scmp.ne.s32.totalorder %s111, %s114
    %p120 = scmp.eq.s32.totalorder %s9, 0
    %p121 = por %p119, %p120
    %p122 = scmp.ne.s32.totalorder %s111, %s114
    %p123 = scmp.eq.s32.totalorder %s14, 1
    %p124 = por %p122, %p123
    %p125 = scmp.ne.s32.totalorder %s114, %s115
    %p126 = scmp.eq.s32.totalorder %s14, 0
    %p127 = por %p125, %p126
    %p128 = scmp.ne.s32.totalorder %s114, %s115
    %p129 = scmp.eq.s32.totalorder %s15, 1
    %p130 = por %p128, %p129
    %p132 = scmp.ne.s32.totalorder %s115, %s131
    %p133 = scmp.eq.s32.totalorder %s15, 0
    %p134 = por %p132, %p133
    %p135 = scmp.le.s32.totalorder 1, %s9
    %p136 = scmp.lt.s32.totalorder %s9, 3
    %p137 = pnand %p135, %p136
    %p138 = pneg %p137
    // Predicated region
    $region9: #{espcn_forward.3} parent=5 // pred_check
      _
    $region10: #{espcn_forward.3} parent=5 // pred_check_branch
      %140 = sbr.rel (%p137) target = $region12
    $region11: #{espcn_forward.3} parent=5 // pred_region
      %s141 = ssub.s32 %s9, 1
      // Predicated region
      $region13: #{espcn_forward.3} parent=11 // pred_check
        %p142 = pneg %p73
      $region14: #{espcn_forward.3} parent=11 // pred_check_branch
        %144 = sbr.rel (%p142) target = $region16
      $region15: #{espcn_forward.3} parent=11 // pred_region
        %p145 = scmp.lt.s32.totalorder %s19, 0
        %s146 = scalar_select %p145, %s19, 0
        %s147 = smul.addr %s146, 8
        %s148 = scalar_lea.vmem %s1, %s147
      $region16: #{espcn_forward.3} parent=11 // pred_fallthru
        _
      // Predicated region
      $region17: #{espcn_forward.3} parent=11 // pred_check
        %p149 = pneg %p99
      $region18: #{espcn_forward.3} parent=11 // pred_check_branch
        %151 = sbr.rel (%p149) target = $region20
      $region19: #{espcn_forward.3} parent=11 // pred_region
        %p152 = scmp.lt.s32.totalorder %s19, 0
        %s153 = scalar_select %p152, %s19, 0
        %s154 = scalar_lea.vmem %s2, %s153
      $region20: #{espcn_forward.3} parent=11 // pred_fallthru
        _
    $region12: #{espcn_forward.3} parent=5 // pred_fallthru
      _
    %p155 = scmp.lt.s32.totalorder %s9, 2
    // Predicated region
    $region21: #{espcn_forward.3} parent=5 // pred_check
      %p156 = pneg %p155
    $region22: #{espcn_forward.3} parent=5 // pred_check_branch
      %158 = sbr.rel (%p156) target = $region24
    $region23: #{espcn_forward.3} parent=5 // pred_region
      // Predicated region
      $region25: #{espcn_forward.3} parent=23 // pred_check
        %p159 = pneg %p41
      $region26: #{espcn_forward.3} parent=23 // pred_check_branch
        %161 = sbr.rel (%p159) target = $region28
      $region27: #{espcn_forward.3} parent=23 // pred_region
        %s162 = smul.u32 32, %s16
        %p163 = scmp.lt.s32.totalorder %s162, 63
        %s164 = scalar_select %p163, %s162, 63
        %s165 = smul.addr %s164, 8
        %s166 = scalar_lea.vmem %s0, %s165
        %s167 = smul.u32 32, %s16
      $region28: #{espcn_forward.3} parent=23 // pred_fallthru
        _
    $region24: #{espcn_forward.3} parent=5 // pred_fallthru
      _
    %p168 = scmp.le.s32.totalorder 1, %s9
    %p169 = scmp.lt.s32.totalorder %s9, 3
    %p170 = pnand %p168, %p169
    %p171 = pneg %p170
    // Predicated region
    $region29: #{espcn_forward.3} parent=5 // pred_check
      _
    $region30: #{espcn_forward.3} parent=5 // pred_check_branch
      %173 = sbr.rel (%p170) target = $region32
    $region31: #{espcn_forward.3} parent=5 // pred_region
      %s174 = ssub.s32 %s9, 1
      %s175 = smul.u32 32, %s18
      %p176 = scmp.lt.s32.totalorder %s175, 63
      %s177 = scalar_select %p176, %s175, 63
      %s178 = smul.addr %s177, 8
      %s179 = scalar_lea.vmem %s0, %s178
      %p180 = pneg %p47
      %p181 = pneg %p44
      %p182 = scmp.lt.s32.totalorder %s19, 0
      %s183 = scalar_select %p182, %s19, 0
      %s184 = smul.addr %s183, 8
      %s185 = scalar_lea.vmem %s1, %s184
      %p186 = pneg %p73
      %p187 = pneg %p70
      %p188 = scmp.lt.s32.totalorder %s19, 0
      %s189 = scalar_select %p188, %s19, 0
      %s190 = scalar_lea.vmem %s2, %s189
      %p191 = pneg %p99
      %p192 = pneg %p96
      %p193 = pneg %p127
      %p194 = pneg %p124
      %s195 = smul.u32 32, %s18
      %p196 = scmp.lt.s32.totalorder %s195, 63
      %s197 = scalar_select %p196, %s195, 63
      %p198 = scmp.lt.s32.totalorder %s19, 0
      %s199 = scalar_select %p198, %s19, 0
      %s200 = sadd.s32 %s199, %s197
      %s201 = smul.addr %s200, 8
      %s202 = scalar_lea.vmem %s3, %s201
      %s203 = smul.u32 32, %s18
      %p204 = scmp.lt.s32.totalorder %s203, 63
      %s205 = scalar_select %p204, %s203, 63
      %s206 = smul.addr %s205, 8
      %s207 = scalar_lea.vmem %s0, %s206
      %s208 = smul.u32 32, %s18
      %p209 = scmp.lt.s32.totalorder %s19, 0
      %s210 = scalar_select %p209, %s19, 0
      %s211 = smul.addr %s210, 8
      %s212 = scalar_lea.vmem %s1, %s211
      %p213 = scmp.lt.s32.totalorder %s19, 0
      %s214 = scalar_select %p213, %s19, 0
      %s215 = scalar_lea.vmem %s2, %s214
      %s216 = smul.u32 32, %s18
      %p217 = scmp.lt.s32.totalorder %s216, 63
      %s218 = scalar_select %p217, %s216, 63
      %p219 = scmp.lt.s32.totalorder %s19, 0
      %s220 = scalar_select %p219, %s19, 0
      %s221 = sadd.s32 %s220, %s218
      %s222 = smul.addr %s221, 8
      %s223 = scalar_lea.vmem %s3, %s222
      %s224 = smul.u32 32, %s18
      %v225 = vld [vmem:[%s207] sm:$0xff]
      %v226 = vld [vmem:[%s207 + $0x8] sm:$0xff]
      %v227 = vld [vmem:[%s207 + $0x10] sm:$0xff]
      %v228 = vld [vmem:[%s207 + $0x18] sm:$0xff]
      %v229 = vld [vmem:[%s207 + $0x20] sm:$0xff]
      %v230 = vld [vmem:[%s207 + $0x28] sm:$0xff]
      %v231 = vld [vmem:[%s207 + $0x30] sm:$0xff]
      %v232 = vld [vmem:[%s207 + $0x38] sm:$0xff]
      %v233 = vld [vmem:[%s207 + $0x40] sm:$0xff]
      %v234 = vld [vmem:[%s207 + $0x48] sm:$0xff]
      %v235 = vld [vmem:[%s207 + $0x50] sm:$0xff]
      %v236 = vld [vmem:[%s207 + $0x58] sm:$0xff]
      %v237 = vld [vmem:[%s207 + $0x60] sm:$0xff]
      %v238 = vld [vmem:[%s207 + $0x68] sm:$0xff]
      %v239 = vld [vmem:[%s207 + $0x70] sm:$0xff]
      %v240 = vld [vmem:[%s207 + $0x78] sm:$0xff]
      %v241 = vld [vmem:[%s207 + $0x80] sm:$0xff]
      %v242 = vld [vmem:[%s207 + $0x88] sm:$0xff]
      %v243 = vld [vmem:[%s207 + $0x90] sm:$0xff]
      %v244 = vld [vmem:[%s207 + $0x98] sm:$0xff]
      %v245 = vld [vmem:[%s207 + $0xa0] sm:$0xff]
      %v246 = vld [vmem:[%s207 + $0xa8] sm:$0xff]
      %v247 = vld [vmem:[%s207 + $0xb0] sm:$0xff]
      %v248 = vld [vmem:[%s207 + $0xb8] sm:$0xff]
      %v249 = vld [vmem:[%s207 + $0xc0] sm:$0xff]
      %v250 = vld [vmem:[%s207 + $0xc8] sm:$0xff]
      %v251 = vld [vmem:[%s207 + $0xd0] sm:$0xff]
      %v252 = vld [vmem:[%s207 + $0xd8] sm:$0xff]
      %v253 = vld [vmem:[%s207 + $0xe0] sm:$0xff]
      %v254 = vld [vmem:[%s207 + $0xe8] sm:$0xff]
      %v255 = vld [vmem:[%s207 + $0xf0] sm:$0xff]
      %v256 = vld [vmem:[%s207 + $0xf8] sm:$0xff]
      %v257 = vld [vmem:[%s212] sm:$0xff]
      %v258 = vld [vmem:[%s212 + $0x8] sm:$0xff]
      %v259 = vld [vmem:[%s212 + $0x10] sm:$0xff]
      %v260 = vld [vmem:[%s212 + $0x18] sm:$0xff]
      %v261 = vld [vmem:[%s212 + $0x20] sm:$0xff]
      %v262 = vld [vmem:[%s212 + $0x28] sm:$0xff]
      %v263 = vld [vmem:[%s212 + $0x30] sm:$0xff]
      %v264 = vld [vmem:[%s212 + $0x38] sm:$0xff]
      %v265 = vld [vmem:[%s212 + $0x40] sm:$0xff]
      %v266 = vld [vmem:[%s212 + $0x48] sm:$0xff]
      %v267 = vld [vmem:[%s212 + $0x50] sm:$0xff]
      %v268 = vld [vmem:[%s212 + $0x58] sm:$0xff]
      %v269 = vld [vmem:[%s212 + $0x60] sm:$0xff]
      %v270 = vld [vmem:[%s212 + $0x68] sm:$0xff]
      %v271 = vld [vmem:[%s212 + $0x70] sm:$0xff]
      %v272 = vld [vmem:[%s212 + $0x78] sm:$0xff]
      %v273 = vld [vmem:[%s215] sm:$0x1]
      %v275 = vlaneseq
      %v276 = vshrl.u32 %v275, 7
      %v277 = vsub.s32 0, %v276
      %v278 = vrot.slane %v273, %v277
      %280 = vmatprep.subr.mxu0 0.0
      %281 = vmatpush1.msra.mxu0 %v257
      %282 = vmatprep.subr.mxu0 0.0
      %283 = vmatpush1.msra.mxu0 %v258
      %284 = vmatprep.subr.mxu0 0.0
      %285 = vmatpush1.msra.mxu0 %v259
      %286 = vmatprep.subr.mxu0 0.0
      %287 = vmatpush1.msra.mxu0 %v260
      %288 = vmatprep.subr.mxu0 0.0
      %289 = vmatpush1.msra.mxu0 %v261
      %290 = vmatprep.subr.mxu0 0.0
      %291 = vmatpush1.msra.mxu0 %v262
      %292 = vmatprep.subr.mxu0 0.0
      %293 = vmatpush1.msra.mxu0 %v263
      %294 = vmatprep.subr.mxu0 0.0
      %295 = vmatpush1.msra.mxu0 %v264
      %296 = vmatprep.subr.mxu0 0.0
      %297 = vmatpush1.msra.mxu0 %v265
      %298 = vmatprep.subr.mxu0 0.0
      %299 = vmatpush1.msra.mxu0 %v266
      %300 = vmatprep.subr.mxu0 0.0
      %301 = vmatpush1.msra.mxu0 %v267
      %302 = vmatprep.subr.mxu0 0.0
      %303 = vmatpush1.msra.mxu0 %v268
      %304 = vmatprep.subr.mxu0 0.0
      %305 = vmatpush1.msra.mxu0 %v269
      %306 = vmatprep.subr.mxu0 0.0
      %307 = vmatpush1.msra.mxu0 %v270
      %308 = vmatprep.subr.mxu0 0.0
      %309 = vmatpush1.msra.mxu0 %v271
      %310 = vmatprep.subr.mxu0 0.0
      %311 = vmatpush1.msra.mxu0 %v272
      %312 = vmatprep.subr.mxu0 0.0
      %313 = vmatpush1.msra.mxu0 0.0
      %314 = vmatprep.subr.mxu0 0.0
      %315 = vmatpush1.msra.mxu0 0.0
      %316 = vmatprep.subr.mxu0 0.0
      %317 = vmatpush1.msra.mxu0 0.0
      %318 = vmatprep.subr.mxu0 0.0
      %319 = vmatpush1.msra.mxu0 0.0
      %320 = vmatprep.subr.mxu0 0.0
      %321 = vmatpush1.msra.mxu0 0.0
      %322 = vmatprep.subr.mxu0 0.0
      %323 = vmatpush1.msra.mxu0 0.0
      %324 = vmatprep.subr.mxu0 0.0
      %325 = vmatpush1.msra.mxu0 0.0
      %326 = vmatprep.subr.mxu0 0.0
      %327 = vmatpush1.msra.mxu0 0.0
      %328 = vmatprep.subr.mxu0 0.0
      %329 = vmatpush1.msra.mxu0 0.0
      %330 = vmatprep.subr.mxu0 0.0
      %331 = vmatpush1.msra.mxu0 0.0
      %332 = vmatprep.subr.mxu0 0.0
      %333 = vmatpush1.msra.mxu0 0.0
      %334 = vmatprep.subr.mxu0 0.0
      %335 = vmatpush1.msra.mxu0 0.0
      %336 = vmatprep.subr.mxu0 0.0
      %337 = vmatpush1.msra.mxu0 0.0
      %338 = vmatprep.subr.mxu0 0.0
      %339 = vmatpush1.msra.mxu0 0.0
      %340 = vmatprep.subr.mxu0 0.0
      %341 = vmatpush1.msra.mxu0 0.0
      %342 = vmatprep.subr.mxu0 0.0
      %343 = vmatpush1.msra.mxu0 0.0
      %344 = vmatprep.mubr.f32.mxu0 0.0
      %345 = vmatmul.mubr.f32.gmra.mrb[0].mxu0 %v225
      %v346 = vpop.f32.mrb[0].mxu0
      %v347 = vadd.f32 %v278, %v346
      %v348 = vpop.f32.mrb[0].mxu0
      %349 = vmatprep.mubr.f32.mxu0 0.0
      %350 = vmatmul.mubr.f32.gmra.mrb[0].mxu0 %v226
      %v351 = vpop.f32.mrb[0].mxu0
      %v352 = vadd.f32 %v278, %v351
      %v353 = vpop.f32.mrb[0].mxu0
      %354 = vmatprep.mubr.f32.mxu0 0.0
      %355 = vmatmul.mubr.f32.gmra.mrb[0].mxu0 %v227
      %v356 = vpop.f32.mrb[0].mxu0
      %v357 = vadd.f32 %v278, %v356
      %v358 = vpop.f32.mrb[0].mxu0
      %359 = vmatprep.mubr.f32.mxu0 0.0
      %360 = vmatmul.mubr.f32.gmra.mrb[0].mxu0 %v228
      %v361 = vpop.f32.mrb[0].mxu0
      %v362 = vadd.f32 %v278, %v361
      %v363 = vpop.f32.mrb[0].mxu0
      %364 = vmatprep.mubr.f32.mxu0 0.0
      %365 = vmatmul.mubr.f32.gmra.mrb[0].mxu0 %v229
      %v366 = vpop.f32.mrb[0].mxu0
      %v367 = vadd.f32 %v278, %v366
      %v368 = vpop.f32.mrb[0].mxu0
      %369 = vmatprep.mubr.f32.mxu0 0.0
      %370 = vmatmul.mubr.f32.gmra.mrb[0].mxu0 %v230
      %v371 = vpop.f32.mrb[0].mxu0
      %v372 = vadd.f32 %v278, %v371
      %v373 = vpop.f32.mrb[0].mxu0
      %374 = vmatprep.mubr.f32.mxu0 0.0
      %375 = vmatmul.mubr.f32.gmra.mrb[0].mxu0 %v231
      %v376 = vpop.f32.mrb[0].mxu0
      %v377 = vadd.f32 %v278, %v376
      %v378 = vpop.f32.mrb[0].mxu0
      %379 = vmatprep.mubr.f32.mxu0 0.0
      %380 = vmatmul.mubr.f32.gmra.mrb[0].mxu0 %v232
      %v381 = vpop.f32.mrb[0].mxu0
      %v382 = vadd.f32 %v278, %v381
      %v383 = vpop.f32.mrb[0].mxu0
      %384 = vmatprep.mubr.f32.mxu0 0.0
      %385 = vmatmul.mubr.f32.gmra.mrb[0].mxu0 %v233
      %v386 = vpop.f32.mrb[0].mxu0
      %v387 = vadd.f32 %v278, %v386
      %v388 = vpop.f32.mrb[0].mxu0
      %389 = vmatprep.mubr.f32.mxu0 0.0
      %390 = vmatmul.mubr.f32.gmra.mrb[0].mxu0 %v234
      %v391 = vpop.f32.mrb[0].mxu0
      %v392 = vadd.f32 %v278, %v391
      %v393 = vpop.f32.mrb[0].mxu0
      %394 = vmatprep.mubr.f32.mxu0 0.0
      %395 = vmatmul.mubr.f32.gmra.mrb[0].mxu0 %v235
      %v396 = vpop.f32.mrb[0].mxu0
      %v397 = vadd.f32 %v278, %v396
      %v398 = vpop.f32.mrb[0].mxu0
      %399 = vmatprep.mubr.f32.mxu0 0.0
      %400 = vmatmul.mubr.f32.gmra.mrb[0].mxu0 %v236
      %v401 = vpop.f32.mrb[0].mxu0
      %v402 = vadd.f32 %v278, %v401
      %v403 = vpop.f32.mrb[0].mxu0
      %404 = vmatprep.mubr.f32.mxu0 0.0
      %405 = vmatmul.mubr.f32.gmra.mrb[0].mxu0 %v237
      %v406 = vpop.f32.mrb[0].mxu0
      %v407 = vadd.f32 %v278, %v406
      %v408 = vpop.f32.mrb[0].mxu0
      %409 = vmatprep.mubr.f32.mxu0 0.0
      %410 = vmatmul.mubr.f32.gmra.mrb[0].mxu0 %v238
      %v411 = vpop.f32.mrb[0].mxu0
      %v412 = vadd.f32 %v278, %v411
      %v413 = vpop.f32.mrb[0].mxu0
      %414 = vmatprep.mubr.f32.mxu0 0.0
      %415 = vmatmul.mubr.f32.gmra.mrb[0].mxu0 %v239
      %v416 = vpop.f32.mrb[0].mxu0
      %v417 = vadd.f32 %v278, %v416
      %v418 = vpop.f32.mrb[0].mxu0
      %419 = vmatprep.mubr.f32.mxu0 0.0
      %420 = vmatmul.mubr.f32.gmra.mrb[0].mxu0 %v240
      %v421 = vpop.f32.mrb[0].mxu0
      %v422 = vadd.f32 %v278, %v421
      %v423 = vpop.f32.mrb[0].mxu0
      %424 = vmatprep.mubr.f32.mxu0 0.0
      %425 = vmatmul.mubr.f32.gmra.mrb[0].mxu0 %v241
      %v426 = vpop.f32.mrb[0].mxu0
      %v427 = vadd.f32 %v278, %v426
      %v428 = vpop.f32.mrb[0].mxu0
      %429 = vmatprep.mubr.f32.mxu0 0.0
      %430 = vmatmul.mubr.f32.gmra.mrb[0].mxu0 %v242
      %v431 = vpop.f32.mrb[0].mxu0
      %v432 = vadd.f32 %v278, %v431
      %v433 = vpop.f32.mrb[0].mxu0
      %434 = vmatprep.mubr.f32.mxu0 0.0
      %435 = vmatmul.mubr.f32.gmra.mrb[0].mxu0 %v243
      %v436 = vpop.f32.mrb[0].mxu0
      %v437 = vadd.f32 %v278, %v436
      %v438 = vpop.f32.mrb[0].mxu0
      %439 = vmatprep.mubr.f32.mxu0 0.0
      %440 = vmatmul.mubr.f32.gmra.mrb[0].mxu0 %v244
      %v441 = vpop.f32.mrb[0].mxu0
      %v442 = vadd.f32 %v278, %v441
      %v443 = vpop.f32.mrb[0].mxu0
      %444 = vmatprep.mubr.f32.mxu0 0.0
      %445 = vmatmul.mubr.f32.gmra.mrb[0].mxu0 %v245
      %v446 = vpop.f32.mrb[0].mxu0
      %v447 = vadd.f32 %v278, %v446
      %v448 = vpop.f32.mrb[0].mxu0
      %449 = vmatprep.mubr.f32.mxu0 0.0
      %450 = vmatmul.mubr.f32.gmra.mrb[0].mxu0 %v246
      %v451 = vpop.f32.mrb[0].mxu0
      %v452 = vadd.f32 %v278, %v451
      %v453 = vpop.f32.mrb[0].mxu0
      %454 = vmatprep.mubr.f32.mxu0 0.0
      %455 = vmatmul.mubr.f32.gmra.mrb[0].mxu0 %v247
      %v456 = vpop.f32.mrb[0].mxu0
      %v457 = vadd.f32 %v278, %v456
      %v458 = vpop.f32.mrb[0].mxu0
      %459 = vmatprep.mubr.f32.mxu0 0.0
      %460 = vmatmul.mubr.f32.gmra.mrb[0].mxu0 %v248
      %v461 = vpop.f32.mrb[0].mxu0
      %v462 = vadd.f32 %v278, %v461
      %v463 = vpop.f32.mrb[0].mxu0
      %464 = vmatprep.mubr.f32.mxu0 0.0
      %465 = vmatmul.mubr.f32.gmra.mrb[0].mxu0 %v249
      %v466 = vpop.f32.mrb[0].mxu0
      %v467 = vadd.f32 %v278, %v466
      %v468 = vpop.f32.mrb[0].mxu0
      %469 = vmatprep.mubr.f32.mxu0 0.0
      %470 = vmatmul.mubr.f32.gmra.mrb[0].mxu0 %v250
      %v471 = vpop.f32.mrb[0].mxu0
      %v472 = vadd.f32 %v278, %v471
      %v473 = vpop.f32.mrb[0].mxu0
      %474 = vmatprep.mubr.f32.mxu0 0.0
      %475 = vmatmul.mubr.f32.gmra.mrb[0].mxu0 %v251
      %v476 = vpop.f32.mrb[0].mxu0
      %v477 = vadd.f32 %v278, %v476
      %v478 = vpop.f32.mrb[0].mxu0
      %479 = vmatprep.mubr.f32.mxu0 0.0
      %480 = vmatmul.mubr.f32.gmra.mrb[0].mxu0 %v252
      %v481 = vpop.f32.mrb[0].mxu0
      %v482 = vadd.f32 %v278, %v481
      %v483 = vpop.f32.mrb[0].mxu0
      %484 = vmatprep.mubr.f32.mxu0 0.0
      %485 = vmatmul.mubr.f32.gmra.mrb[0].mxu0 %v253
      %v486 = vpop.f32.mrb[0].mxu0
      %v487 = vadd.f32 %v278, %v486
      %v488 = vpop.f32.mrb[0].mxu0
      %489 = vmatprep.mubr.f32.mxu0 0.0
      %490 = vmatmul.mubr.f32.gmra.mrb[0].mxu0 %v254
      %v491 = vpop.f32.mrb[0].mxu0
      %v492 = vadd.f32 %v278, %v491
      %v493 = vpop.f32.mrb[0].mxu0
      %494 = vmatprep.mubr.f32.mxu0 0.0
      %495 = vmatmul.mubr.f32.gmra.mrb[0].mxu0 %v255
      %v496 = vpop.f32.mrb[0].mxu0
      %v497 = vadd.f32 %v278, %v496
      %v498 = vpop.f32.mrb[0].mxu0
      %499 = vmatprep.mubr.f32.mxu0 0.0
      %500 = vmatmul.mubr.f32.gmra.mrb[0].mxu0 %v256
      %v501 = vpop.f32.mrb[0].mxu0
      %v502 = vadd.f32 %v278, %v501
      %v503 = vpop.f32.mrb[0].mxu0
      %504 = vdwg.mxu0
      %v505 = vtanh.pop %v347
      %v506 = vtanh.pop %v352
      %v507 = vtanh.pop %v357
      %v508 = vtanh.pop %v362
      %v509 = vtanh.pop %v367
      %v510 = vtanh.pop %v372
      %v511 = vtanh.pop %v377
      %v512 = vtanh.pop %v382
      %v513 = vtanh.pop %v387
      %v514 = vtanh.pop %v392
      %v515 = vtanh.pop %v397
      %v516 = vtanh.pop %v402
      %v517 = vtanh.pop %v407
      %v518 = vtanh.pop %v412
      %v519 = vtanh.pop %v417
      %v520 = vtanh.pop %v422
      %v521 = vtanh.pop %v427
      %v522 = vtanh.pop %v432
      %v523 = vtanh.pop %v437
      %v524 = vtanh.pop %v442
      %v525 = vtanh.pop %v447
      %v526 = vtanh.pop %v452
      %v527 = vtanh.pop %v457
      %v528 = vtanh.pop %v462
      %v529 = vtanh.pop %v467
      %v530 = vtanh.pop %v472
      %v531 = vtanh.pop %v477
      %v532 = vtanh.pop %v482
      %v533 = vtanh.pop %v487
      %v534 = vtanh.pop %v492
      %v535 = vtanh.pop %v497
      %v536 = vtanh.pop %v502
      %537 = vst [vmem:[%s223] sm:$0xff] %v505
      %538 = vst [vmem:[%s223 + $0x8] sm:$0xff] %v506
      %539 = vst [vmem:[%s223 + $0x10] sm:$0xff] %v507
      %540 = vst [vmem:[%s223 + $0x18] sm:$0xff] %v508
      %541 = vst [vmem:[%s223 + $0x20] sm:$0xff] %v509
      %542 = vst [vmem:[%s223 + $0x28] sm:$0xff] %v510
      %543 = vst [vmem:[%s223 + $0x30] sm:$0xff] %v511
      %544 = vst [vmem:[%s223 + $0x38] sm:$0xff] %v512
      %545 = vst [vmem:[%s223 + $0x40] sm:$0xff] %v513
      %546 = vst [vmem:[%s223 + $0x48] sm:$0xff] %v514
      %547 = vst [vmem:[%s223 + $0x50] sm:$0xff] %v515
      %548 = vst [vmem:[%s223 + $0x58] sm:$0xff] %v516
      %549 = vst [vmem:[%s223 + $0x60] sm:$0xff] %v517
      %550 = vst [vmem:[%s223 + $0x68] sm:$0xff] %v518
      %551 = vst [vmem:[%s223 + $0x70] sm:$0xff] %v519
      %552 = vst [vmem:[%s223 + $0x78] sm:$0xff] %v520
      %553 = vst [vmem:[%s223 + $0x80] sm:$0xff] %v521
      %554 = vst [vmem:[%s223 + $0x88] sm:$0xff] %v522
      %555 = vst [vmem:[%s223 + $0x90] sm:$0xff] %v523
      %556 = vst [vmem:[%s223 + $0x98] sm:$0xff] %v524
      %557 = vst [vmem:[%s223 + $0xa0] sm:$0xff] %v525
      %558 = vst [vmem:[%s223 + $0xa8] sm:$0xff] %v526
      %559 = vst [vmem:[%s223 + $0xb0] sm:$0xff] %v527
      %560 = vst [vmem:[%s223 + $0xb8] sm:$0xff] %v528
      %561 = vst [vmem:[%s223 + $0xc0] sm:$0xff] %v529
      %562 = vst [vmem:[%s223 + $0xc8] sm:$0xff] %v530
      %563 = vst [vmem:[%s223 + $0xd0] sm:$0xff] %v531
      %564 = vst [vmem:[%s223 + $0xd8] sm:$0xff] %v532
      %565 = vst [vmem:[%s223 + $0xe0] sm:$0xff] %v533
      %566 = vst [vmem:[%s223 + $0xe8] sm:$0xff] %v534
      %567 = vst [vmem:[%s223 + $0xf0] sm:$0xff] %v535
      %568 = vst [vmem:[%s223 + $0xf8] sm:$0xff] %v536
      %s569 = smul.u32 32, %s18
      %p570 = scmp.lt.s32.totalorder %s569, 63
      %s571 = scalar_select %p570, %s569, 63
      %p572 = scmp.lt.s32.totalorder %s19, 0
      %s573 = scalar_select %p572, %s19, 0
      %s574 = sadd.s32 %s573, %s571
      %s575 = smul.addr %s574, 8
      %s576 = scalar_lea.vmem %s3, %s575
      // Predicated region
      $region33: #{espcn_forward.3} parent=31 // pred_check
        %p577 = pneg %p124
      $region34: #{espcn_forward.3} parent=31 // pred_check_branch
        %579 = sbr.rel (%p577) target = $region36
      $region35: #{espcn_forward.3} parent=31 // pred_region
        %s580 = smul.u32 32, %s18
      $region36: #{espcn_forward.3} parent=31 // pred_fallthru
        _
    $region32: #{espcn_forward.3} parent=5 // pred_fallthru
      _
    %p581 = scmp.le.s32.totalorder 2, %s9
    // Predicated region
    $region37: #{espcn_forward.3} parent=5 // pred_check
      %p582 = pneg %p581
    $region38: #{espcn_forward.3} parent=5 // pred_check_branch
      %584 = sbr.rel (%p582) target = $region40
    $region39: #{espcn_forward.3} parent=5 // pred_region
      %s585 = ssub.s32 %s9, 2
      // Predicated region
      $region41: #{espcn_forward.3} parent=39 // pred_check
        %p586 = pneg %p130
      $region42: #{espcn_forward.3} parent=39 // pred_check_branch
        %588 = sbr.rel (%p586) target = $region44
      $region43: #{espcn_forward.3} parent=39 // pred_region
        %s589 = smul.u32 32, %s20
        %p590 = scmp.lt.s32.totalorder %s589, 63
        %s591 = scalar_select %p590, %s589, 63
        %p592 = scmp.lt.s32.totalorder %s21, 0
        %s593 = scalar_select %p592, %s21, 0
        %s594 = sadd.s32 %s593, %s591
        %s595 = smul.addr %s594, 8
        %s596 = scalar_lea.vmem %s3, %s595
      $region44: #{espcn_forward.3} parent=39 // pred_fallthru
        _
    $region40: #{espcn_forward.3} parent=5 // pred_fallthru
      _
  $region6: #{espcn_forward.3} parent=0 // loop_footer
    %s13 = sadd.s32 1, %s9
  $region7: #{espcn_forward.3} parent=0 // loop_footer_branch
    %8 = sbr.rel target = $region3
  $region8: #{espcn_forward.3} parent=0 // loop_exit
    _

// kernel: espcn_forward.4
$region0: #{espcn_forward.4}
  #allocation0 [shape = 'u32[]', space=smem, size = 0x4, offset = 0x4, fixed_abs, tag = 'smem constant byte address 0x4 - core index']
  #allocation1 [shape = 'u32[144,128]{1,0:T(1,128)}', space=vmem, size = 0x12000, scoped, tag = 'internal scratch']
  %s0 = inlined_call_operand.vmem [shape: f32[512,640], index: 0, kind: input, shape index: {}]
  %s1 = inlined_call_operand.vmem [shape: f32[640,128], index: 1, kind: input, shape index: {}]
  %s2 = inlined_call_operand.vmem [shape: f32[1,128], index: 2, kind: input, shape index: {}]
  %s3 = inlined_call_operand.vmem [shape: f32[512,128], index: 3, kind: output, shape index: {}]
  %s4 = sld [smem:[#allocation0]]
  $region45: #{espcn_forward.4} parent=0
    _
  %s6 = ssub.s32 1, %s4
  %s7 = scalar_select 0, %s6, %s4
  loop: start=0, step=1, limit=4
  $region2: #{espcn_forward.4} parent=0 // loop_pre_header
    _
  $region3: #{espcn_forward.4} parent=0 // loop_header
    %s9 = sphi 0, %s13
    %p10 = scmp.ge.s32.totalorder %s9, 4
    %s16 = sphi 0, %s28
    %s17 = sphi 0, %s24
    %s18 = sphi 0, %s16
    %s19 = sphi 0, %s17
    %s20 = sphi 0, %s18
    %s21 = sphi 0, %s19
    %s31 = sphi 0, %s33
    %s34 = sphi 0, %s31
    %s35 = sphi 0, %s34
    %s51 = sphi 0, %s35
    %s57 = sphi 0, %s59
    %s60 = sphi 0, %s57
    %s61 = sphi 0, %s60
    %s77 = sphi 0, %s61
    %s83 = sphi 0, %s85
    %s86 = sphi 0, %s83
    %s87 = sphi 0, %s86
    %s103 = sphi 0, %s87
    %s111 = sphi 0, %s113
    %s114 = sphi 0, %s111
    %s115 = sphi 0, %s114
    %s131 = sphi 0, %s115
  $region4: #{espcn_forward.4} parent=0 // loop_header_branch
    %12 = sbr.rel (%p10) target = $region8
  $region5: #{espcn_forward.4} parent=0 // loop_body
    %s14 = ssub.s32 %s9, 1
    %s15 = ssub.s32 %s9, 2
    %s22 = sadd.s32 1, %s17
    %p23 = scmp.ge.s32.totalorder %s22, 1
    %s24 = scalar_select %p23, 0, %s22
    %s25 = sadd.s32 1, %s16
    %s26 = scalar_select %p23, %s25, %s16
    %p27 = scmp.ge.s32.totalorder %s26, 2
    %s28 = scalar_select %p27, 0, %s26
    %s29 = ssub.s32 %s16, %s28
    %p30 = scmp.eq.s32.totalorder %s29, 0
    %s32 = sadd.s32 %s31, 1
    %s33 = scalar_select %p30, %s31, %s32
    %p36 = pneg %p30
    %p37 = scmp.eq.s32.totalorder %s9, 1
    %p38 = por %p36, %p37
    %p39 = scmp.ne.s32.totalorder %s31, %s34
    %p40 = scmp.eq.s32.totalorder %s9, 0
    %p41 = por %p39, %p40
    %p42 = scmp.ne.s32.totalorder %s31, %s34
    %p43 = scmp.eq.s32.totalorder %s14, 1
    %p44 = por %p42, %p43
    %p45 = scmp.ne.s32.totalorder %s34, %s35
    %p46 = scmp.eq.s32.totalorder %s14, 0
    %p47 = por %p45, %p46
    %p48 = scmp.ne.s32.totalorder %s34, %s35
    %p49 = scmp.eq.s32.totalorder %s15, 1
    %p50 = por %p48, %p49
    %p52 = scmp.ne.s32.totalorder %s35, %s51
    %p53 = scmp.eq.s32.totalorder %s15, 0
    %p54 = por %p52, %p53
    %s55 = ssub.s32 %s17, %s24
    %p56 = scmp.eq.s32.totalorder %s55, 0
    %s58 = sadd.s32 %s57, 1
    %s59 = scalar_select %p56, %s57, %s58
    %p62 = pneg %p56
    %p63 = scmp.eq.s32.totalorder %s9, 1
    %p64 = por %p62, %p63
    %p65 = scmp.ne.s32.totalorder %s57, %s60
    %p66 = scmp.eq.s32.totalorder %s9, 0
    %p67 = por %p65, %p66
    %p68 = scmp.ne.s32.totalorder %s57, %s60
    %p69 = scmp.eq.s32.totalorder %s14, 1
    %p70 = por %p68, %p69
    %p71 = scmp.ne.s32.totalorder %s60, %s61
    %p72 = scmp.eq.s32.totalorder %s14, 0
    %p73 = por %p71, %p72
    %p74 = scmp.ne.s32.totalorder %s60, %s61
    %p75 = scmp.eq.s32.totalorder %s15, 1
    %p76 = por %p74, %p75
    %p78 = scmp.ne.s32.totalorder %s61, %s77
    %p79 = scmp.eq.s32.totalorder %s15, 0
    %p80 = por %p78, %p79
    %s81 = ssub.s32 %s17, %s24
    %p82 = scmp.eq.s32.totalorder %s81, 0
    %s84 = sadd.s32 %s83, 1
    %s85 = scalar_select %p82, %s83, %s84
    %p88 = pneg %p82
    %p89 = scmp.eq.s32.totalorder %s9, 1
    %p90 = por %p88, %p89
    %p91 = scmp.ne.s32.totalorder %s83, %s86
    %p92 = scmp.eq.s32.totalorder %s9, 0
    %p93 = por %p91, %p92
    %p94 = scmp.ne.s32.totalorder %s83, %s86
    %p95 = scmp.eq.s32.totalorder %s14, 1
    %p96 = por %p94, %p95
    %p97 = scmp.ne.s32.totalorder %s86, %s87
    %p98 = scmp.eq.s32.totalorder %s14, 0
    %p99 = por %p97, %p98
    %p100 = scmp.ne.s32.totalorder %s86, %s87
    %p101 = scmp.eq.s32.totalorder %s15, 1
    %p102 = por %p100, %p101
    %p104 = scmp.ne.s32.totalorder %s87, %s103
    %p105 = scmp.eq.s32.totalorder %s15, 0
    %p106 = por %p104, %p105
    %s107 = ssub.s32 %s16, %s28
    %s108 = ssub.s32 %s17, %s24
    %s109 = sor.u32 %s107, %s108
    %p110 = scmp.eq.s32.totalorder %s109, 0
    %s112 = sadd.s32 %s111, 1
    %s113 = scalar_select %p110, %s111, %s112
    %p116 = pneg %p110
    %p117 = scmp.eq.s32.totalorder %s9, 1
    %p118 = por %p116, %p117
    %p119 = scmp.ne.s32.totalorder %s111, %s114
    %p120 = scmp.eq.s32.totalorder %s9, 0
    %p121 = por %p119, %p120
    %p122 = scmp.ne.s32.totalorder %s111, %s114
    %p123 = scmp.eq.s32.totalorder %s14, 1
    %p124 = por %p122, %p123
    %p125 = scmp.ne.s32.totalorder %s114, %s115
    %p126 = scmp.eq.s32.totalorder %s14, 0
    %p127 = por %p125, %p126
    %p128 = scmp.ne.s32.totalorder %s114, %s115
    %p129 = scmp.eq.s32.totalorder %s15, 1
    %p130 = por %p128, %p129
    %p132 = scmp.ne.s32.totalorder %s115, %s131
    %p133 = scmp.eq.s32.totalorder %s15, 0
    %p134 = por %p132, %p133
    %p135 = scmp.le.s32.totalorder 1, %s9
    %p136 = scmp.lt.s32.totalorder %s9, 3
    %p137 = pnand %p135, %p136
    %p138 = pneg %p137
    // Predicated region
    $region9: #{espcn_forward.4} parent=5 // pred_check
      _
    $region10: #{espcn_forward.4} parent=5 // pred_check_branch
      %140 = sbr.rel (%p137) target = $region12
    $region11: #{espcn_forward.4} parent=5 // pred_region
      %s141 = ssub.s32 %s9, 1
      // Predicated region
      $region13: #{espcn_forward.4} parent=11 // pred_check
        %p142 = pneg %p73
      $region14: #{espcn_forward.4} parent=11 // pred_check_branch
        %144 = sbr.rel (%p142) target = $region16
      $region15: #{espcn_forward.4} parent=11 // pred_region
        %p145 = scmp.lt.s32.totalorder %s19, 0
        %s146 = scalar_select %p145, %s19, 0
        %s147 = smul.addr %s146, 8
        %s148 = scalar_lea.vmem %s1, %s147
      $region16: #{espcn_forward.4} parent=11 // pred_fallthru
        _
      // Predicated region
      $region17: #{espcn_forward.4} parent=11 // pred_check
        %p149 = pneg %p99
      $region18: #{espcn_forward.4} parent=11 // pred_check_branch
        %151 = sbr.rel (%p149) target = $region20
      $region19: #{espcn_forward.4} parent=11 // pred_region
        %p152 = scmp.lt.s32.totalorder %s19, 0
        %s153 = scalar_select %p152, %s19, 0
        %s154 = scalar_lea.vmem %s2, %s153
      $region20: #{espcn_forward.4} parent=11 // pred_fallthru
        _
    $region12: #{espcn_forward.4} parent=5 // pred_fallthru
      _
    %p155 = scmp.lt.s32.totalorder %s9, 2
    // Predicated region
    $region21: #{espcn_forward.4} parent=5 // pred_check
      %p156 = pneg %p155
    $region22: #{espcn_forward.4} parent=5 // pred_check_branch
      %158 = sbr.rel (%p156) target = $region24
    $region23: #{espcn_forward.4} parent=5 // pred_region
      // Predicated region
      $region25: #{espcn_forward.4} parent=23 // pred_check
        %p159 = pneg %p41
      $region26: #{espcn_forward.4} parent=23 // pred_check_branch
        %161 = sbr.rel (%p159) target = $region28
      $region27: #{espcn_forward.4} parent=23 // pred_region
        %s162 = smul.u32 32, %s16
        %p163 = scmp.lt.s32.totalorder %s162, 63
        %s164 = scalar_select %p163, %s162, 63
        %s165 = smul.addr %s164, 5
        %s166 = smul.addr %s165, 8
        %s167 = scalar_lea.vmem %s0, %s166
        %s168 = smul.u32 32, %s16
      $region28: #{espcn_forward.4} parent=23 // pred_fallthru
        _
    $region24: #{espcn_forward.4} parent=5 // pred_fallthru
      _
    %p169 = scmp.le.s32.totalorder 1, %s9
    %p170 = scmp.lt.s32.totalorder %s9, 3
    %p171 = pnand %p169, %p170
    %p172 = pneg %p171
    // Predicated region
    $region29: #{espcn_forward.4} parent=5 // pred_check
      _
    $region30: #{espcn_forward.4} parent=5 // pred_check_branch
      %174 = sbr.rel (%p171) target = $region32
    $region31: #{espcn_forward.4} parent=5 // pred_region
      %s175 = ssub.s32 %s9, 1
      %s176 = smul.u32 32, %s18
      %p177 = scmp.lt.s32.totalorder %s176, 63
      %s178 = scalar_select %p177, %s176, 63
      %s179 = smul.addr %s178, 5
      %s180 = smul.addr %s179, 8
      %s181 = scalar_lea.vmem %s0, %s180
      %p182 = pneg %p47
      %p183 = pneg %p44
      %p184 = scmp.lt.s32.totalorder %s19, 0
      %s185 = scalar_select %p184, %s19, 0
      %s186 = smul.addr %s185, 8
      %s187 = scalar_lea.vmem %s1, %s186
      %p188 = pneg %p73
      %p189 = pneg %p70
      %p190 = scmp.lt.s32.totalorder %s19, 0
      %s191 = scalar_select %p190, %s19, 0
      %s192 = scalar_lea.vmem %s2, %s191
      %p193 = pneg %p99
      %p194 = pneg %p96
      %p195 = pneg %p127
      %p196 = pneg %p124
      %s197 = smul.u32 32, %s18
      %p198 = scmp.lt.s32.totalorder %s197, 63
      %s199 = scalar_select %p198, %s197, 63
      %p200 = scmp.lt.s32.totalorder %s19, 0
      %s201 = scalar_select %p200, %s19, 0
      %s202 = sadd.s32 %s201, %s199
      %s203 = smul.addr %s202, 8
      %s204 = scalar_lea.vmem %s3, %s203
      %s205 = smul.u32 32, %s18
      %p206 = scmp.lt.s32.totalorder %s205, 63
      %s207 = scalar_select %p206, %s205, 63
      %s208 = smul.addr %s207, 5
      %s209 = smul.addr %s208, 8
      %s210 = scalar_lea.vmem %s0, %s209
      %s211 = smul.u32 32, %s18
      %p212 = scmp.lt.s32.totalorder %s19, 0
      %s213 = scalar_select %p212, %s19, 0
      %s214 = smul.addr %s213, 8
      %s215 = scalar_lea.vmem %s1, %s214
      %p216 = scmp.lt.s32.totalorder %s19, 0
      %s217 = scalar_select %p216, %s19, 0
      %s218 = scalar_lea.vmem %s2, %s217
      %s219 = smul.u32 32, %s18
      %p220 = scmp.lt.s32.totalorder %s219, 63
      %s221 = scalar_select %p220, %s219, 63
      %p222 = scmp.lt.s32.totalorder %s19, 0
      %s223 = scalar_select %p222, %s19, 0
      %s224 = sadd.s32 %s223, %s221
      %s225 = smul.addr %s224, 8
      %s226 = scalar_lea.vmem %s3, %s225
      %s227 = smul.u32 32, %s18
      %v228 = vld [vmem:[%s210] sm:$0xff]
      %v229 = vld [vmem:[%s210 + $0x8] sm:$0xff]
      %v230 = vld [vmem:[%s210 + $0x10] sm:$0xff]
      %v231 = vld [vmem:[%s210 + $0x18] sm:$0xff]
      %v232 = vld [vmem:[%s210 + $0x20] sm:$0xff]
      %v233 = vld [vmem:[%s210 + $0x28] sm:$0xff]
      %v234 = vld [vmem:[%s210 + $0x30] sm:$0xff]
      %v235 = vld [vmem:[%s210 + $0x38] sm:$0xff]
      %v236 = vld [vmem:[%s210 + $0x40] sm:$0xff]
      %v237 = vld [vmem:[%s210 + $0x48] sm:$0xff]
      %v238 = vld [vmem:[%s210 + $0x50] sm:$0xff]
      %v239 = vld [vmem:[%s210 + $0x58] sm:$0xff]
      %v240 = vld [vmem:[%s210 + $0x60] sm:$0xff]
      %v241 = vld [vmem:[%s210 + $0x68] sm:$0xff]
      %v242 = vld [vmem:[%s210 + $0x70] sm:$0xff]
      %v243 = vld [vmem:[%s210 + $0x78] sm:$0xff]
      %v244 = vld [vmem:[%s210 + $0x80] sm:$0xff]
      %v245 = vld [vmem:[%s210 + $0x88] sm:$0xff]
      %v246 = vld [vmem:[%s210 + $0x90] sm:$0xff]
      %v247 = vld [vmem:[%s210 + $0x98] sm:$0xff]
      %v248 = vld [vmem:[%s210 + $0xa0] sm:$0xff]
      %v249 = vld [vmem:[%s210 + $0xa8] sm:$0xff]
      %v250 = vld [vmem:[%s210 + $0xb0] sm:$0xff]
      %v251 = vld [vmem:[%s210 + $0xb8] sm:$0xff]
      %v252 = vld [vmem:[%s210 + $0xc0] sm:$0xff]
      %v253 = vld [vmem:[%s210 + $0xc8] sm:$0xff]
      %v254 = vld [vmem:[%s210 + $0xd0] sm:$0xff]
      %v255 = vld [vmem:[%s210 + $0xd8] sm:$0xff]
      %v256 = vld [vmem:[%s210 + $0xe0] sm:$0xff]
      %v257 = vld [vmem:[%s210 + $0xe8] sm:$0xff]
      %v258 = vld [vmem:[%s210 + $0xf0] sm:$0xff]
      %v259 = vld [vmem:[%s210 + $0xf8] sm:$0xff]
      %v260 = vld [vmem:[%s210 + $0x100] sm:$0xff]
      %v261 = vld [vmem:[%s210 + $0x108] sm:$0xff]
      %v262 = vld [vmem:[%s210 + $0x110] sm:$0xff]
      %v263 = vld [vmem:[%s210 + $0x118] sm:$0xff]
      %v264 = vld [vmem:[%s210 + $0x120] sm:$0xff]
      %v265 = vld [vmem:[%s210 + $0x128] sm:$0xff]
      %v266 = vld [vmem:[%s210 + $0x130] sm:$0xff]
      %v267 = vld [vmem:[%s210 + $0x138] sm:$0xff]
      %v268 = vld [vmem:[%s210 + $0x140] sm:$0xff]
      %v269 = vld [vmem:[%s210 + $0x148] sm:$0xff]
      %v270 = vld [vmem:[%s210 + $0x150] sm:$0xff]
      %v271 = vld [vmem:[%s210 + $0x158] sm:$0xff]
      %v272 = vld [vmem:[%s210 + $0x160] sm:$0xff]
      %v273 = vld [vmem:[%s210 + $0x168] sm:$0xff]
      %v274 = vld [vmem:[%s210 + $0x170] sm:$0xff]
      %v275 = vld [vmem:[%s210 + $0x178] sm:$0xff]
      %v276 = vld [vmem:[%s210 + $0x180] sm:$0xff]
      %v277 = vld [vmem:[%s210 + $0x188] sm:$0xff]
      %v278 = vld [vmem:[%s210 + $0x190] sm:$0xff]
      %v279 = vld [vmem:[%s210 + $0x198] sm:$0xff]
      %v280 = vld [vmem:[%s210 + $0x1a0] sm:$0xff]
      %v281 = vld [vmem:[%s210 + $0x1a8] sm:$0xff]
      %v282 = vld [vmem:[%s210 + $0x1b0] sm:$0xff]
      %v283 = vld [vmem:[%s210 + $0x1b8] sm:$0xff]
      %v284 = vld [vmem:[%s210 + $0x1c0] sm:$0xff]
      %v285 = vld [vmem:[%s210 + $0x1c8] sm:$0xff]
      %v286 = vld [vmem:[%s210 + $0x1d0] sm:$0xff]
      %v287 = vld [vmem:[%s210 + $0x1d8] sm:$0xff]
      %v288 = vld [vmem:[%s210 + $0x1e0] sm:$0xff]
      %v289 = vld [vmem:[%s210 + $0x1e8] sm:$0xff]
      %v290 = vld [vmem:[%s210 + $0x1f0] sm:$0xff]
      %v291 = vld [vmem:[%s210 + $0x1f8] sm:$0xff]
      %v292 = vld [vmem:[%s210 + $0x200] sm:$0xff]
      %v293 = vld [vmem:[%s210 + $0x208] sm:$0xff]
      %v294 = vld [vmem:[%s210 + $0x210] sm:$0xff]
      %v295 = vld [vmem:[%s210 + $0x218] sm:$0xff]
      %v296 = vld [vmem:[%s210 + $0x220] sm:$0xff]
      %v297 = vld [vmem:[%s210 + $0x228] sm:$0xff]
      %v298 = vld [vmem:[%s210 + $0x230] sm:$0xff]
      %v299 = vld [vmem:[%s210 + $0x238] sm:$0xff]
      %v300 = vld [vmem:[%s210 + $0x240] sm:$0xff]
      %v301 = vld [vmem:[%s210 + $0x248] sm:$0xff]
      %v302 = vld [vmem:[%s210 + $0x250] sm:$0xff]
      %v303 = vld [vmem:[%s210 + $0x258] sm:$0xff]
      %v304 = vld [vmem:[%s210 + $0x260] sm:$0xff]
      %v305 = vld [vmem:[%s210 + $0x268] sm:$0xff]
      %v306 = vld [vmem:[%s210 + $0x270] sm:$0xff]
      %v307 = vld [vmem:[%s210 + $0x278] sm:$0xff]
      %v308 = vld [vmem:[%s210 + $0x280] sm:$0xff]
      %v309 = vld [vmem:[%s210 + $0x288] sm:$0xff]
      %v310 = vld [vmem:[%s210 + $0x290] sm:$0xff]
      %v311 = vld [vmem:[%s210 + $0x298] sm:$0xff]
      %v312 = vld [vmem:[%s210 + $0x2a0] sm:$0xff]
      %v313 = vld [vmem:[%s210 + $0x2a8] sm:$0xff]
      %v314 = vld [vmem:[%s210 + $0x2b0] sm:$0xff]
      %v315 = vld [vmem:[%s210 + $0x2b8] sm:$0xff]
      %v316 = vld [vmem:[%s210 + $0x2c0] sm:$0xff]
      %v317 = vld [vmem:[%s210 + $0x2c8] sm:$0xff]
      %v318 = vld [vmem:[%s210 + $0x2d0] sm:$0xff]
      %v319 = vld [vmem:[%s210 + $0x2d8] sm:$0xff]
      %v320 = vld [vmem:[%s210 + $0x2e0] sm:$0xff]
      %v321 = vld [vmem:[%s210 + $0x2e8] sm:$0xff]
      %v322 = vld [vmem:[%s210 + $0x2f0] sm:$0xff]
      %v323 = vld [vmem:[%s210 + $0x2f8] sm:$0xff]
      %v324 = vld [vmem:[%s210 + $0x300] sm:$0xff]
      %v325 = vld [vmem:[%s210 + $0x308] sm:$0xff]
      %v326 = vld [vmem:[%s210 + $0x310] sm:$0xff]
      %v327 = vld [vmem:[%s210 + $0x318] sm:$0xff]
      %v328 = vld [vmem:[%s210 + $0x320] sm:$0xff]
      %v329 = vld [vmem:[%s210 + $0x328] sm:$0xff]
      %v330 = vld [vmem:[%s210 + $0x330] sm:$0xff]
      %v331 = vld [vmem:[%s210 + $0x338] sm:$0xff]
      %v332 = vld [vmem:[%s210 + $0x340] sm:$0xff]
      %v333 = vld [vmem:[%s210 + $0x348] sm:$0xff]
      %v334 = vld [vmem:[%s210 + $0x350] sm:$0xff]
      %v335 = vld [vmem:[%s210 + $0x358] sm:$0xff]
      %v336 = vld [vmem:[%s210 + $0x360] sm:$0xff]
      %v337 = vld [vmem:[%s210 + $0x368] sm:$0xff]
      %v338 = vld [vmem:[%s210 + $0x370] sm:$0xff]
      %v339 = vld [vmem:[%s210 + $0x378] sm:$0xff]
      %v340 = vld [vmem:[%s210 + $0x380] sm:$0xff]
      %v341 = vld [vmem:[%s210 + $0x388] sm:$0xff]
      %v342 = vld [vmem:[%s210 + $0x390] sm:$0xff]
      %v343 = vld [vmem:[%s210 + $0x398] sm:$0xff]
      %v344 = vld [vmem:[%s210 + $0x3a0] sm:$0xff]
      %v345 = vld [vmem:[%s210 + $0x3a8] sm:$0xff]
      %v346 = vld [vmem:[%s210 + $0x3b0] sm:$0xff]
      %v347 = vld [vmem:[%s210 + $0x3b8] sm:$0xff]
      %v348 = vld [vmem:[%s210 + $0x3c0] sm:$0xff]
      %v349 = vld [vmem:[%s210 + $0x3c8] sm:$0xff]
      %v350 = vld [vmem:[%s210 + $0x3d0] sm:$0xff]
      %v351 = vld [vmem:[%s210 + $0x3d8] sm:$0xff]
      %v352 = vld [vmem:[%s210 + $0x3e0] sm:$0xff]
      %v353 = vld [vmem:[%s210 + $0x3e8] sm:$0xff]
      %v354 = vld [vmem:[%s210 + $0x3f0] sm:$0xff]
      %v355 = vld [vmem:[%s210 + $0x3f8] sm:$0xff]
      %v356 = vld [vmem:[%s210 + $0x400] sm:$0xff]
      %v357 = vld [vmem:[%s210 + $0x408] sm:$0xff]
      %v358 = vld [vmem:[%s210 + $0x410] sm:$0xff]
      %v359 = vld [vmem:[%s210 + $0x418] sm:$0xff]
      %v360 = vld [vmem:[%s210 + $0x420] sm:$0xff]
      %v361 = vld [vmem:[%s210 + $0x428] sm:$0xff]
      %v362 = vld [vmem:[%s210 + $0x430] sm:$0xff]
      %v363 = vld [vmem:[%s210 + $0x438] sm:$0xff]
      %v364 = vld [vmem:[%s210 + $0x440] sm:$0xff]
      %v365 = vld [vmem:[%s210 + $0x448] sm:$0xff]
      %v366 = vld [vmem:[%s210 + $0x450] sm:$0xff]
      %v367 = vld [vmem:[%s210 + $0x458] sm:$0xff]
      %v368 = vld [vmem:[%s210 + $0x460] sm:$0xff]
      %v369 = vld [vmem:[%s210 + $0x468] sm:$0xff]
      %v370 = vld [vmem:[%s210 + $0x470] sm:$0xff]
      %v371 = vld [vmem:[%s210 + $0x478] sm:$0xff]
      %v372 = vld [vmem:[%s210 + $0x480] sm:$0xff]
      %v373 = vld [vmem:[%s210 + $0x488] sm:$0xff]
      %v374 = vld [vmem:[%s210 + $0x490] sm:$0xff]
      %v375 = vld [vmem:[%s210 + $0x498] sm:$0xff]
      %v376 = vld [vmem:[%s210 + $0x4a0] sm:$0xff]
      %v377 = vld [vmem:[%s210 + $0x4a8] sm:$0xff]
      %v378 = vld [vmem:[%s210 + $0x4b0] sm:$0xff]
      %v379 = vld [vmem:[%s210 + $0x4b8] sm:$0xff]
      %v380 = vld [vmem:[%s210 + $0x4c0] sm:$0xff]
      %v381 = vld [vmem:[%s210 + $0x4c8] sm:$0xff]
      %v382 = vld [vmem:[%s210 + $0x4d0] sm:$0xff]
      %v383 = vld [vmem:[%s210 + $0x4d8] sm:$0xff]
      %v384 = vld [vmem:[%s210 + $0x4e0] sm:$0xff]
      %v385 = vld [vmem:[%s210 + $0x4e8] sm:$0xff]
      %v386 = vld [vmem:[%s210 + $0x4f0] sm:$0xff]
      %v387 = vld [vmem:[%s210 + $0x4f8] sm:$0xff]
      %v388 = vld [vmem:[%s215] sm:$0xff]
      %v389 = vld [vmem:[%s215 + $0x8] sm:$0xff]
      %v390 = vld [vmem:[%s215 + $0x10] sm:$0xff]
      %v391 = vld [vmem:[%s215 + $0x18] sm:$0xff]
      %v392 = vld [vmem:[%s215 + $0x20] sm:$0xff]
      %v393 = vld [vmem:[%s215 + $0x28] sm:$0xff]
      %v394 = vld [vmem:[%s215 + $0x30] sm:$0xff]
      %v395 = vld [vmem:[%s215 + $0x38] sm:$0xff]
      %v396 = vld [vmem:[%s215 + $0x40] sm:$0xff]
      %v397 = vld [vmem:[%s215 + $0x48] sm:$0xff]
      %v398 = vld [vmem:[%s215 + $0x50] sm:$0xff]
      %v399 = vld [vmem:[%s215 + $0x58] sm:$0xff]
      %v400 = vld [vmem:[%s215 + $0x60] sm:$0xff]
      %v401 = vld [vmem:[%s215 + $0x68] sm:$0xff]
      %v402 = vld [vmem:[%s215 + $0x70] sm:$0xff]
      %v403 = vld [vmem:[%s215 + $0x78] sm:$0xff]
      %v404 = vld [vmem:[%s215 + $0x80] sm:$0xff]
      %v405 = vld [vmem:[%s215 + $0x88] sm:$0xff]
      %v406 = vld [vmem:[%s215 + $0x90] sm:$0xff]
      %v407 = vld [vmem:[%s215 + $0x98] sm:$0xff]
      %v408 = vld [vmem:[%s215 + $0xa0] sm:$0xff]
      %v409 = vld [vmem:[%s215 + $0xa8] sm:$0xff]
      %v410 = vld [vmem:[%s215 + $0xb0] sm:$0xff]
      %v411 = vld [vmem:[%s215 + $0xb8] sm:$0xff]
      %v412 = vld [vmem:[%s215 + $0xc0] sm:$0xff]
      %v413 = vld [vmem:[%s215 + $0xc8] sm:$0xff]
      %v414 = vld [vmem:[%s215 + $0xd0] sm:$0xff]
      %v415 = vld [vmem:[%s215 + $0xd8] sm:$0xff]
      %v416 = vld [vmem:[%s215 + $0xe0] sm:$0xff]
      %v417 = vld [vmem:[%s215 + $0xe8] sm:$0xff]
      %v418 = vld [vmem:[%s215 + $0xf0] sm:$0xff]
      %v419 = vld [vmem:[%s215 + $0xf8] sm:$0xff]
      %v420 = vld [vmem:[%s215 + $0x100] sm:$0xff]
      %v421 = vld [vmem:[%s215 + $0x108] sm:$0xff]
      %v422 = vld [vmem:[%s215 + $0x110] sm:$0xff]
      %v423 = vld [vmem:[%s215 + $0x118] sm:$0xff]
      %v424 = vld [vmem:[%s215 + $0x120] sm:$0xff]
      %v425 = vld [vmem:[%s215 + $0x128] sm:$0xff]
      %v426 = vld [vmem:[%s215 + $0x130] sm:$0xff]
      %v427 = vld [vmem:[%s215 + $0x138] sm:$0xff]
      %v428 = vld [vmem:[%s215 + $0x140] sm:$0xff]
      %v429 = vld [vmem:[%s215 + $0x148] sm:$0xff]
      %v430 = vld [vmem:[%s215 + $0x150] sm:$0xff]
      %v431 = vld [vmem:[%s215 + $0x158] sm:$0xff]
      %v432 = vld [vmem:[%s215 + $0x160] sm:$0xff]
      %v433 = vld [vmem:[%s215 + $0x168] sm:$0xff]
      %v434 = vld [vmem:[%s215 + $0x170] sm:$0xff]
      %v435 = vld [vmem:[%s215 + $0x178] sm:$0xff]
      %v436 = vld [vmem:[%s215 + $0x180] sm:$0xff]
      %v437 = vld [vmem:[%s215 + $0x188] sm:$0xff]
      %v438 = vld [vmem:[%s215 + $0x190] sm:$0xff]
      %v439 = vld [vmem:[%s215 + $0x198] sm:$0xff]
      %v440 = vld [vmem:[%s215 + $0x1a0] sm:$0xff]
      %v441 = vld [vmem:[%s215 + $0x1a8] sm:$0xff]
      %v442 = vld [vmem:[%s215 + $0x1b0] sm:$0xff]
      %v443 = vld [vmem:[%s215 + $0x1b8] sm:$0xff]
      %v444 = vld [vmem:[%s215 + $0x1c0] sm:$0xff]
      %v445 = vld [vmem:[%s215 + $0x1c8] sm:$0xff]
      %v446 = vld [vmem:[%s215 + $0x1d0] sm:$0xff]
      %v447 = vld [vmem:[%s215 + $0x1d8] sm:$0xff]
      %v448 = vld [vmem:[%s215 + $0x1e0] sm:$0xff]
      %v449 = vld [vmem:[%s215 + $0x1e8] sm:$0xff]
      %v450 = vld [vmem:[%s215 + $0x1f0] sm:$0xff]
      %v451 = vld [vmem:[%s215 + $0x1f8] sm:$0xff]
      %v452 = vld [vmem:[%s215 + $0x200] sm:$0xff]
      %v453 = vld [vmem:[%s215 + $0x208] sm:$0xff]
      %v454 = vld [vmem:[%s215 + $0x210] sm:$0xff]
      %v455 = vld [vmem:[%s215 + $0x218] sm:$0xff]
      %v456 = vld [vmem:[%s215 + $0x220] sm:$0xff]
      %v457 = vld [vmem:[%s215 + $0x228] sm:$0xff]
      %v458 = vld [vmem:[%s215 + $0x230] sm:$0xff]
      %v459 = vld [vmem:[%s215 + $0x238] sm:$0xff]
      %v460 = vld [vmem:[%s215 + $0x240] sm:$0xff]
      %v461 = vld [vmem:[%s215 + $0x248] sm:$0xff]
      %v462 = vld [vmem:[%s215 + $0x250] sm:$0xff]
      %v463 = vld [vmem:[%s215 + $0x258] sm:$0xff]
      %v464 = vld [vmem:[%s215 + $0x260] sm:$0xff]
      %v465 = vld [vmem:[%s215 + $0x268] sm:$0xff]
      %v466 = vld [vmem:[%s215 + $0x270] sm:$0xff]
      %v467 = vld [vmem:[%s215 + $0x278] sm:$0xff]
      %v468 = vld [vmem:[%s218] sm:$0x1]
      %v470 = vlaneseq
      %v471 = vshrl.u32 %v470, 7
      %v472 = vsub.s32 0, %v471
      %v473 = vrot.slane %v468, %v472
      %475 = vmatprep.subr.mxu0 0.0
      %476 = vmatpush1.msra.mxu0 %v388
      %477 = vmatprep.subr.mxu0 0.0
      %478 = vmatpush1.msra.mxu0 %v389
      %479 = vmatprep.subr.mxu0 0.0
      %480 = vmatpush1.msra.mxu0 %v390
      %481 = vmatprep.subr.mxu0 0.0
      %482 = vmatpush1.msra.mxu0 %v391
      %483 = vmatprep.subr.mxu0 0.0
      %484 = vmatpush1.msra.mxu0 %v392
      %485 = vmatprep.subr.mxu0 0.0
      %486 = vmatpush1.msra.mxu0 %v393
      %487 = vmatprep.subr.mxu0 0.0
      %488 = vmatpush1.msra.mxu0 %v394
      %489 = vmatprep.subr.mxu0 0.0
      %490 = vmatpush1.msra.mxu0 %v395
      %491 = vmatprep.subr.mxu0 0.0
      %492 = vmatpush1.msra.mxu0 %v396
      %493 = vmatprep.subr.mxu0 0.0
      %494 = vmatpush1.msra.mxu0 %v397
      %495 = vmatprep.subr.mxu0 0.0
      %496 = vmatpush1.msra.mxu0 %v398
      %497 = vmatprep.subr.mxu0 0.0
      %498 = vmatpush1.msra.mxu0 %v399
      %499 = vmatprep.subr.mxu0 0.0
      %500 = vmatpush1.msra.mxu0 %v400
      %501 = vmatprep.subr.mxu0 0.0
      %502 = vmatpush1.msra.mxu0 %v401
      %503 = vmatprep.subr.mxu0 0.0
      %504 = vmatpush1.msra.mxu0 %v402
      %505 = vmatprep.subr.mxu0 0.0
      %506 = vmatpush1.msra.mxu0 %v403
      %507 = vmatprep.subr.mxu0 0.0
      %508 = vmatpush1.msra.mxu0 %v404
      %509 = vmatprep.subr.mxu0 0.0
      %510 = vmatpush1.msra.mxu0 %v405
      %511 = vmatprep.subr.mxu0 0.0
      %512 = vmatpush1.msra.mxu0 %v406
      %513 = vmatprep.subr.mxu0 0.0
      %514 = vmatpush1.msra.mxu0 %v407
      %515 = vmatprep.subr.mxu0 0.0
      %516 = vmatpush1.msra.mxu0 %v408
      %517 = vmatprep.subr.mxu0 0.0
      %518 = vmatpush1.msra.mxu0 %v409
      %519 = vmatprep.subr.mxu0 0.0
      %520 = vmatpush1.msra.mxu0 %v410
      %521 = vmatprep.subr.mxu0 0.0
      %522 = vmatpush1.msra.mxu0 %v411
      %523 = vmatprep.subr.mxu0 0.0
      %524 = vmatpush1.msra.mxu0 %v412
      %525 = vmatprep.subr.mxu0 0.0
      %526 = vmatpush1.msra.mxu0 %v413
      %527 = vmatprep.subr.mxu0 0.0
      %528 = vmatpush1.msra.mxu0 %v414
      %529 = vmatprep.subr.mxu0 0.0
      %530 = vmatpush1.msra.mxu0 %v415
      %531 = vmatprep.subr.mxu0 0.0
      %532 = vmatpush1.msra.mxu0 %v416
      %533 = vmatprep.subr.mxu0 0.0
      %534 = vmatpush1.msra.mxu0 %v417
      %535 = vmatprep.subr.mxu0 0.0
      %536 = vmatpush1.msra.mxu0 %v418
      %537 = vmatprep.subr.mxu0 0.0
      %538 = vmatpush1.msra.mxu0 %v419
      %539 = vmatprep.mubr.f32.mxu0 %v229
      %540 = vmatmul.mubr.f32.gmra.mrb[0].mxu0 %v228
      %v541 = vpop.f32.mrb[0].mxu0
      %v542 = vadd.f32 %v473, %v541
      %v543 = vpop.f32.mrb[0].mxu0
      %544 = vmatprep.mubr.f32.mxu0 %v234
      %545 = vmatmul.mubr.f32.gmra.mrb[0].mxu0 %v233
      %v546 = vpop.f32.mrb[0].mxu0
      %v547 = vadd.f32 %v473, %v546
      %v548 = vpop.f32.mrb[0].mxu0
      %549 = vmatprep.mubr.f32.mxu0 %v239
      %550 = vmatmul.mubr.f32.gmra.mrb[0].mxu0 %v238
      %v551 = vpop.f32.mrb[0].mxu0
      %v552 = vadd.f32 %v473, %v551
      %v553 = vpop.f32.mrb[0].mxu0
      %554 = vmatprep.mubr.f32.mxu0 %v244
      %555 = vmatmul.mubr.f32.gmra.mrb[0].mxu0 %v243
      %v556 = vpop.f32.mrb[0].mxu0
      %v557 = vadd.f32 %v473, %v556
      %v558 = vpop.f32.mrb[0].mxu0
      %559 = vmatprep.mubr.f32.mxu0 %v249
      %560 = vmatmul.mubr.f32.gmra.mrb[0].mxu0 %v248
      %v561 = vpop.f32.mrb[0].mxu0
      %v562 = vadd.f32 %v473, %v561
      %v563 = vpop.f32.mrb[0].mxu0
      %564 = vmatprep.mubr.f32.mxu0 %v254
      %565 = vmatmul.mubr.f32.gmra.mrb[0].mxu0 %v253
      %v566 = vpop.f32.mrb[0].mxu0
      %v567 = vadd.f32 %v473, %v566
      %v568 = vpop.f32.mrb[0].mxu0
      %569 = vmatprep.mubr.f32.mxu0 %v259
      %570 = vmatmul.mubr.f32.gmra.mrb[0].mxu0 %v258
      %v571 = vpop.f32.mrb[0].mxu0
      %v572 = vadd.f32 %v473, %v571
      %v573 = vpop.f32.mrb[0].mxu0
      %574 = vmatprep.mubr.f32.mxu0 %v264
      %575 = vmatmul.mubr.f32.gmra.mrb[0].mxu0 %v263
      %v576 = vpop.f32.mrb[0].mxu0
      %v577 = vadd.f32 %v473, %v576
      %v578 = vpop.f32.mrb[0].mxu0
      %579 = vmatprep.mubr.f32.mxu0 %v269
      %580 = vmatmul.mubr.f32.gmra.mrb[0].mxu0 %v268
      %v581 = vpop.f32.mrb[0].mxu0
      %v582 = vadd.f32 %v473, %v581
      %v583 = vpop.f32.mrb[0].mxu0
      %584 = vmatprep.mubr.f32.mxu0 %v274
      %585 = vmatmul.mubr.f32.gmra.mrb[0].mxu0 %v273
      %v586 = vpop.f32.mrb[0].mxu0
      %v587 = vadd.f32 %v473, %v586
      %v588 = vpop.f32.mrb[0].mxu0
      %589 = vmatprep.mubr.f32.mxu0 %v279
      %590 = vmatmul.mubr.f32.gmra.mrb[0].mxu0 %v278
      %v591 = vpop.f32.mrb[0].mxu0
      %v592 = vadd.f32 %v473, %v591
      %v593 = vpop.f32.mrb[0].mxu0
      %594 = vmatprep.mubr.f32.mxu0 %v284
      %595 = vmatmul.mubr.f32.gmra.mrb[0].mxu0 %v283
      %v596 = vpop.f32.mrb[0].mxu0
      %v597 = vadd.f32 %v473, %v596
      %v598 = vpop.f32.mrb[0].mxu0
      %599 = vmatprep.mubr.f32.mxu0 %v289
      %600 = vmatmul.mubr.f32.gmra.mrb[0].mxu0 %v288
      %v601 = vpop.f32.mrb[0].mxu0
      %v602 = vadd.f32 %v473, %v601
      %v603 = vpop.f32.mrb[0].mxu0
      %604 = vmatprep.mubr.f32.mxu0 %v294
      %605 = vmatmul.mubr.f32.gmra.mrb[0].mxu0 %v293
      %v606 = vpop.f32.mrb[0].mxu0
      %v607 = vadd.f32 %v473, %v606
      %v608 = vpop.f32.mrb[0].mxu0
      %609 = vmatprep.mubr.f32.mxu0 %v299
      %610 = vmatmul.mubr.f32.gmra.mrb[0].mxu0 %v298
      %v611 = vpop.f32.mrb[0].mxu0
      %v612 = vadd.f32 %v473, %v611
      %v613 = vpop.f32.mrb[0].mxu0
      %614 = vmatprep.mubr.f32.mxu0 %v304
      %615 = vmatmul.mubr.f32.gmra.mrb[0].mxu0 %v303
      %v616 = vpop.f32.mrb[0].mxu0
      %v617 = vadd.f32 %v473, %v616
      %v618 = vpop.f32.mrb[0].mxu0
      %619 = vmatprep.mubr.f32.mxu0 %v309
      %620 = vmatmul.mubr.f32.gmra.mrb[0].mxu0 %v308
      %v621 = vpop.f32.mrb[0].mxu0
      %v622 = vadd.f32 %v473, %v621
      %v623 = vpop.f32.mrb[0].mxu0
      %624 = vmatprep.mubr.f32.mxu0 %v314
      %625 = vmatmul.mubr.f32.gmra.mrb[0].mxu0 %v313
      %v626 = vpop.f32.mrb[0].mxu0
      %v627 = vadd.f32 %v473, %v626
      %v628 = vpop.f32.mrb[0].mxu0
      %629 = vmatprep.mubr.f32.mxu0 %v319
      %630 = vmatmul.mubr.f32.gmra.mrb[0].mxu0 %v318
      %v631 = vpop.f32.mrb[0].mxu0
      %v632 = vadd.f32 %v473, %v631
      %v633 = vpop.f32.mrb[0].mxu0
      %634 = vmatprep.mubr.f32.mxu0 %v324
      %635 = vmatmul.mubr.f32.gmra.mrb[0].mxu0 %v323
      %v636 = vpop.f32.mrb[0].mxu0
      %v637 = vadd.f32 %v473, %v636
      %v638 = vpop.f32.mrb[0].mxu0
      %639 = vmatprep.mubr.f32.mxu0 %v329
      %640 = vmatmul.mubr.f32.gmra.mrb[0].mxu0 %v328
      %v641 = vpop.f32.mrb[0].mxu0
      %v642 = vadd.f32 %v473, %v641
      %v643 = vpop.f32.mrb[0].mxu0
      %644 = vmatprep.mubr.f32.mxu0 %v334
      %645 = vmatmul.mubr.f32.gmra.mrb[0].mxu0 %v333
      %v646 = vpop.f32.mrb[0].mxu0
      %v647 = vadd.f32 %v473, %v646
      %v648 = vpop.f32.mrb[0].mxu0
      %649 = vmatprep.mubr.f32.mxu0 %v339
      %650 = vmatmul.mubr.f32.gmra.mrb[0].mxu0 %v338
      %v651 = vpop.f32.mrb[0].mxu0
      %v652 = vadd.f32 %v473, %v651
      %v653 = vpop.f32.mrb[0].mxu0
      %654 = vmatprep.mubr.f32.mxu0 %v344
      %655 = vmatmul.mubr.f32.gmra.mrb[0].mxu0 %v343
      %v656 = vpop.f32.mrb[0].mxu0
      %v657 = vadd.f32 %v473, %v656
      %v658 = vpop.f32.mrb[0].mxu0
      %659 = vmatprep.mubr.f32.mxu0 %v349
      %660 = vmatmul.mubr.f32.gmra.mrb[0].mxu0 %v348
      %v661 = vpop.f32.mrb[0].mxu0
      %v662 = vadd.f32 %v473, %v661
      %v663 = vpop.f32.mrb[0].mxu0
      %664 = vmatprep.mubr.f32.mxu0 %v354
      %665 = vmatmul.mubr.f32.gmra.mrb[0].mxu0 %v353
      %v666 = vpop.f32.mrb[0].mxu0
      %v667 = vadd.f32 %v473, %v666
      %v668 = vpop.f32.mrb[0].mxu0
      %669 = vmatprep.mubr.f32.mxu0 %v359
      %670 = vmatmul.mubr.f32.gmra.mrb[0].mxu0 %v358
      %v671 = vpop.f32.mrb[0].mxu0
      %v672 = vadd.f32 %v473, %v671
      %v673 = vpop.f32.mrb[0].mxu0
      %674 = vmatprep.mubr.f32.mxu0 %v364
      %675 = vmatmul.mubr.f32.gmra.mrb[0].mxu0 %v363
      %v676 = vpop.f32.mrb[0].mxu0
      %v677 = vadd.f32 %v473, %v676
      %v678 = vpop.f32.mrb[0].mxu0
      %679 = vmatprep.mubr.f32.mxu0 %v369
      %680 = vmatmul.mubr.f32.gmra.mrb[0].mxu0 %v368
      %v681 = vpop.f32.mrb[0].mxu0
      %v682 = vadd.f32 %v473, %v681
      %v683 = vpop.f32.mrb[0].mxu0
      %684 = vmatprep.mubr.f32.mxu0 %v374
      %685 = vmatmul.mubr.f32.gmra.mrb[0].mxu0 %v373
      %v686 = vpop.f32.mrb[0].mxu0
      %v687 = vadd.f32 %v473, %v686
      %v688 = vpop.f32.mrb[0].mxu0
      %689 = vmatprep.mubr.f32.mxu0 %v379
      %690 = vmatmul.mubr.f32.gmra.mrb[0].mxu0 %v378
      %v691 = vpop.f32.mrb[0].mxu0
      %v692 = vadd.f32 %v473, %v691
      %v693 = vpop.f32.mrb[0].mxu0
      %694 = vmatprep.mubr.f32.mxu0 %v384
      %695 = vmatmul.mubr.f32.gmra.mrb[0].mxu0 %v383
      %v696 = vpop.f32.mrb[0].mxu0
      %v697 = vadd.f32 %v473, %v696
      %v698 = vpop.f32.mrb[0].mxu0
      %699 = vdwg.mxu0
      %700 = vmatprep.subr.mxu0 0.0
      %701 = vmatpush1.msra.mxu0 %v420
      %702 = vmatprep.subr.mxu0 0.0
      %703 = vmatpush1.msra.mxu0 %v421
      %704 = vmatprep.subr.mxu0 0.0
      %705 = vmatpush1.msra.mxu0 %v422
      %706 = vmatprep.subr.mxu0 0.0
      %707 = vmatpush1.msra.mxu0 %v423
      %708 = vmatprep.subr.mxu0 0.0
      %709 = vmatpush1.msra.mxu0 %v424
      %710 = vmatprep.subr.mxu0 0.0
      %711 = vmatpush1.msra.mxu0 %v425
      %712 = vmatprep.subr.mxu0 0.0
      %713 = vmatpush1.msra.mxu0 %v426
      %714 = vmatprep.subr.mxu0 0.0
      %715 = vmatpush1.msra.mxu0 %v427
      %716 = vmatprep.subr.mxu0 0.0
      %717 = vmatpush1.msra.mxu0 %v428
      %718 = vmatprep.subr.mxu0 0.0
      %719 = vmatpush1.msra.mxu0 %v429
      %720 = vmatprep.subr.mxu0 0.0
      %721 = vmatpush1.msra.mxu0 %v430
      %722 = vmatprep.subr.mxu0 0.0
      %723 = vmatpush1.msra.mxu0 %v431
      %724 = vmatprep.subr.mxu0 0.0
      %725 = vmatpush1.msra.mxu0 %v432
      %726 = vmatprep.subr.mxu0 0.0
      %727 = vmatpush1.msra.mxu0 %v433
      %728 = vmatprep.subr.mxu0 0.0
      %729 = vmatpush1.msra.mxu0 %v434
      %730 = vmatprep.subr.mxu0 0.0
      %731 = vmatpush1.msra.mxu0 %v435
      %732 = vmatprep.subr.mxu0 0.0
      %733 = vmatpush1.msra.mxu0 %v436
      %734 = vmatprep.subr.mxu0 0.0
      %735 = vmatpush1.msra.mxu0 %v437
      %736 = vmatprep.subr.mxu0 0.0
      %737 = vmatpush1.msra.mxu0 %v438
      %738 = vmatprep.subr.mxu0 0.0
      %739 = vmatpush1.msra.mxu0 %v439
      %740 = vmatprep.subr.mxu0 0.0
      %741 = vmatpush1.msra.mxu0 %v440
      %742 = vmatprep.subr.mxu0 0.0
      %743 = vmatpush1.msra.mxu0 %v441
      %744 = vmatprep.subr.mxu0 0.0
      %745 = vmatpush1.msra.mxu0 %v442
      %746 = vmatprep.subr.mxu0 0.0
      %747 = vmatpush1.msra.mxu0 %v443
      %748 = vmatprep.subr.mxu0 0.0
      %749 = vmatpush1.msra.mxu0 %v444
      %750 = vmatprep.subr.mxu0 0.0
      %751 = vmatpush1.msra.mxu0 %v445
      %752 = vmatprep.subr.mxu0 0.0
      %753 = vmatpush1.msra.mxu0 %v446
      %754 = vmatprep.subr.mxu0 0.0
      %755 = vmatpush1.msra.mxu0 %v447
      %756 = vmatprep.subr.mxu0 0.0
      %757 = vmatpush1.msra.mxu0 %v448
      %758 = vmatprep.subr.mxu0 0.0
      %759 = vmatpush1.msra.mxu0 %v449
      %760 = vmatprep.subr.mxu0 0.0
      %761 = vmatpush1.msra.mxu0 %v450
      %762 = vmatprep.subr.mxu0 0.0
      %763 = vmatpush1.msra.mxu0 %v451
      %764 = vmatprep.mubr.f32.mxu0 %v231
      %765 = vmatmul.mubr.f32.gmra.mrb[0].mxu0 %v230
      %v766 = vpop.f32.mrb[0].mxu0
      %v767 = vadd.f32 %v542, %v766
      %v768 = vpop.f32.mrb[0].mxu0
      %769 = vmatprep.mubr.f32.mxu0 %v236
      %770 = vmatmul.mubr.f32.gmra.mrb[0].mxu0 %v235
      %v771 = vpop.f32.mrb[0].mxu0
      %v772 = vadd.f32 %v547, %v771
      %v773 = vpop.f32.mrb[0].mxu0
      %774 = vmatprep.mubr.f32.mxu0 %v241
      %775 = vmatmul.mubr.f32.gmra.mrb[0].mxu0 %v240
      %v776 = vpop.f32.mrb[0].mxu0
      %v777 = vadd.f32 %v552, %v776
      %v778 = vpop.f32.mrb[0].mxu0
      %779 = vmatprep.mubr.f32.mxu0 %v246
      %780 = vmatmul.mubr.f32.gmra.mrb[0].mxu0 %v245
      %v781 = vpop.f32.mrb[0].mxu0
      %v782 = vadd.f32 %v557, %v781
      %v783 = vpop.f32.mrb[0].mxu0
      %784 = vmatprep.mubr.f32.mxu0 %v251
      %785 = vmatmul.mubr.f32.gmra.mrb[0].mxu0 %v250
      %v786 = vpop.f32.mrb[0].mxu0
      %v787 = vadd.f32 %v562, %v786
      %v788 = vpop.f32.mrb[0].mxu0
      %789 = vmatprep.mubr.f32.mxu0 %v256
      %790 = vmatmul.mubr.f32.gmra.mrb[0].mxu0 %v255
      %v791 = vpop.f32.mrb[0].mxu0
      %v792 = vadd.f32 %v567, %v791
      %v793 = vpop.f32.mrb[0].mxu0
      %794 = vmatprep.mubr.f32.mxu0 %v261
      %795 = vmatmul.mubr.f32.gmra.mrb[0].mxu0 %v260
      %v796 = vpop.f32.mrb[0].mxu0
      %v797 = vadd.f32 %v572, %v796
      %v798 = vpop.f32.mrb[0].mxu0
      %799 = vmatprep.mubr.f32.mxu0 %v266
      %800 = vmatmul.mubr.f32.gmra.mrb[0].mxu0 %v265
      %v801 = vpop.f32.mrb[0].mxu0
      %v802 = vadd.f32 %v577, %v801
      %v803 = vpop.f32.mrb[0].mxu0
      %804 = vmatprep.mubr.f32.mxu0 %v271
      %805 = vmatmul.mubr.f32.gmra.mrb[0].mxu0 %v270
      %v806 = vpop.f32.mrb[0].mxu0
      %v807 = vadd.f32 %v582, %v806
      %v808 = vpop.f32.mrb[0].mxu0
      %809 = vmatprep.mubr.f32.mxu0 %v276
      %810 = vmatmul.mubr.f32.gmra.mrb[0].mxu0 %v275
      %v811 = vpop.f32.mrb[0].mxu0
      %v812 = vadd.f32 %v587, %v811
      %v813 = vpop.f32.mrb[0].mxu0
      %814 = vmatprep.mubr.f32.mxu0 %v281
      %815 = vmatmul.mubr.f32.gmra.mrb[0].mxu0 %v280
      %v816 = vpop.f32.mrb[0].mxu0
      %v817 = vadd.f32 %v592, %v816
      %v818 = vpop.f32.mrb[0].mxu0
      %819 = vmatprep.mubr.f32.mxu0 %v286
      %820 = vmatmul.mubr.f32.gmra.mrb[0].mxu0 %v285
      %v821 = vpop.f32.mrb[0].mxu0
      %v822 = vadd.f32 %v597, %v821
      %v823 = vpop.f32.mrb[0].mxu0
      %824 = vmatprep.mubr.f32.mxu0 %v291
      %825 = vmatmul.mubr.f32.gmra.mrb[0].mxu0 %v290
      %v826 = vpop.f32.mrb[0].mxu0
      %v827 = vadd.f32 %v602, %v826
      %v828 = vpop.f32.mrb[0].mxu0
      %829 = vmatprep.mubr.f32.mxu0 %v296
      %830 = vmatmul.mubr.f32.gmra.mrb[0].mxu0 %v295
      %v831 = vpop.f32.mrb[0].mxu0
      %v832 = vadd.f32 %v607, %v831
      %v833 = vpop.f32.mrb[0].mxu0
      %834 = vmatprep.mubr.f32.mxu0 %v301
      %835 = vmatmul.mubr.f32.gmra.mrb[0].mxu0 %v300
      %v836 = vpop.f32.mrb[0].mxu0
      %v837 = vadd.f32 %v612, %v836
      %v838 = vpop.f32.mrb[0].mxu0
      %839 = vmatprep.mubr.f32.mxu0 %v306
      %840 = vmatmul.mubr.f32.gmra.mrb[0].mxu0 %v305
      %v841 = vpop.f32.mrb[0].mxu0
      %v842 = vadd.f32 %v617, %v841
      %v843 = vpop.f32.mrb[0].mxu0
      %844 = vmatprep.mubr.f32.mxu0 %v311
      %845 = vmatmul.mubr.f32.gmra.mrb[0].mxu0 %v310
      %v846 = vpop.f32.mrb[0].mxu0
      %v847 = vadd.f32 %v622, %v846
      %v848 = vpop.f32.mrb[0].mxu0
      %849 = vmatprep.mubr.f32.mxu0 %v316
      %850 = vmatmul.mubr.f32.gmra.mrb[0].mxu0 %v315
      %v851 = vpop.f32.mrb[0].mxu0
      %v852 = vadd.f32 %v627, %v851
      %v853 = vpop.f32.mrb[0].mxu0
      %854 = vmatprep.mubr.f32.mxu0 %v321
      %855 = vmatmul.mubr.f32.gmra.mrb[0].mxu0 %v320
      %v856 = vpop.f32.mrb[0].mxu0
      %v857 = vadd.f32 %v632, %v856
      %v858 = vpop.f32.mrb[0].mxu0
      %859 = vmatprep.mubr.f32.mxu0 %v326
      %860 = vmatmul.mubr.f32.gmra.mrb[0].mxu0 %v325
      %v861 = vpop.f32.mrb[0].mxu0
      %v862 = vadd.f32 %v637, %v861
      %v863 = vpop.f32.mrb[0].mxu0
      %864 = vmatprep.mubr.f32.mxu0 %v331
      %865 = vmatmul.mubr.f32.gmra.mrb[0].mxu0 %v330
      %v866 = vpop.f32.mrb[0].mxu0
      %v867 = vadd.f32 %v642, %v866
      %v868 = vpop.f32.mrb[0].mxu0
      %869 = vmatprep.mubr.f32.mxu0 %v336
      %870 = vmatmul.mubr.f32.gmra.mrb[0].mxu0 %v335
      %v871 = vpop.f32.mrb[0].mxu0
      %v872 = vadd.f32 %v647, %v871
      %v873 = vpop.f32.mrb[0].mxu0
      %874 = vmatprep.mubr.f32.mxu0 %v341
      %875 = vmatmul.mubr.f32.gmra.mrb[0].mxu0 %v340
      %v876 = vpop.f32.mrb[0].mxu0
      %v877 = vadd.f32 %v652, %v876
      %v878 = vpop.f32.mrb[0].mxu0
      %879 = vmatprep.mubr.f32.mxu0 %v346
      %880 = vmatmul.mubr.f32.gmra.mrb[0].mxu0 %v345
      %v881 = vpop.f32.mrb[0].mxu0
      %v882 = vadd.f32 %v657, %v881
      %v883 = vpop.f32.mrb[0].mxu0
      %884 = vmatprep.mubr.f32.mxu0 %v351
      %885 = vmatmul.mubr.f32.gmra.mrb[0].mxu0 %v350
      %v886 = vpop.f32.mrb[0].mxu0
      %v887 = vadd.f32 %v662, %v886
      %v888 = vpop.f32.mrb[0].mxu0
      %889 = vmatprep.mubr.f32.mxu0 %v356
      %890 = vmatmul.mubr.f32.gmra.mrb[0].mxu0 %v355
      %v891 = vpop.f32.mrb[0].mxu0
      %v892 = vadd.f32 %v667, %v891
      %v893 = vpop.f32.mrb[0].mxu0
      %894 = vmatprep.mubr.f32.mxu0 %v361
      %895 = vmatmul.mubr.f32.gmra.mrb[0].mxu0 %v360
      %v896 = vpop.f32.mrb[0].mxu0
      %v897 = vadd.f32 %v672, %v896
      %v898 = vpop.f32.mrb[0].mxu0
      %899 = vmatprep.mubr.f32.mxu0 %v366
      %900 = vmatmul.mubr.f32.gmra.mrb[0].mxu0 %v365
      %v901 = vpop.f32.mrb[0].mxu0
      %v902 = vadd.f32 %v677, %v901
      %v903 = vpop.f32.mrb[0].mxu0
      %904 = vmatprep.mubr.f32.mxu0 %v371
      %905 = vmatmul.mubr.f32.gmra.mrb[0].mxu0 %v370
      %v906 = vpop.f32.mrb[0].mxu0
      %v907 = vadd.f32 %v682, %v906
      %v908 = vpop.f32.mrb[0].mxu0
      %909 = vmatprep.mubr.f32.mxu0 %v376
      %910 = vmatmul.mubr.f32.gmra.mrb[0].mxu0 %v375
      %v911 = vpop.f32.mrb[0].mxu0
      %v912 = vadd.f32 %v687, %v911
      %v913 = vpop.f32.mrb[0].mxu0
      %914 = vmatprep.mubr.f32.mxu0 %v381
      %915 = vmatmul.mubr.f32.gmra.mrb[0].mxu0 %v380
      %v916 = vpop.f32.mrb[0].mxu0
      %v917 = vadd.f32 %v692, %v916
      %v918 = vpop.f32.mrb[0].mxu0
      %919 = vmatprep.mubr.f32.mxu0 %v386
      %920 = vmatmul.mubr.f32.gmra.mrb[0].mxu0 %v385
      %v921 = vpop.f32.mrb[0].mxu0
      %v922 = vadd.f32 %v697, %v921
      %v923 = vpop.f32.mrb[0].mxu0
      %924 = vdwg.mxu0
      %925 = vmatprep.subr.mxu0 0.0
      %926 = vmatpush1.msra.mxu0 %v452
      %927 = vmatprep.subr.mxu0 0.0
      %928 = vmatpush1.msra.mxu0 %v453
      %929 = vmatprep.subr.mxu0 0.0
      %930 = vmatpush1.msra.mxu0 %v454
      %931 = vmatprep.subr.mxu0 0.0
      %932 = vmatpush1.msra.mxu0 %v455
      %933 = vmatprep.subr.mxu0 0.0
      %934 = vmatpush1.msra.mxu0 %v456
      %935 = vmatprep.subr.mxu0 0.0
      %936 = vmatpush1.msra.mxu0 %v457
      %937 = vmatprep.subr.mxu0 0.0
      %938 = vmatpush1.msra.mxu0 %v458
      %939 = vmatprep.subr.mxu0 0.0
      %940 = vmatpush1.msra.mxu0 %v459
      %941 = vmatprep.subr.mxu0 0.0
      %942 = vmatpush1.msra.mxu0 %v460
      %943 = vmatprep.subr.mxu0 0.0
      %944 = vmatpush1.msra.mxu0 %v461
      %945 = vmatprep.subr.mxu0 0.0
      %946 = vmatpush1.msra.mxu0 %v462
      %947 = vmatprep.subr.mxu0 0.0
      %948 = vmatpush1.msra.mxu0 %v463
      %949 = vmatprep.subr.mxu0 0.0
      %950 = vmatpush1.msra.mxu0 %v464
      %951 = vmatprep.subr.mxu0 0.0
      %952 = vmatpush1.msra.mxu0 %v465
      %953 = vmatprep.subr.mxu0 0.0
      %954 = vmatpush1.msra.mxu0 %v466
      %955 = vmatprep.subr.mxu0 0.0
      %956 = vmatpush1.msra.mxu0 %v467
      %957 = vmatprep.subr.mxu0 0.0
      %958 = vmatpush1.msra.mxu0 0.0
      %959 = vmatprep.subr.mxu0 0.0
      %960 = vmatpush1.msra.mxu0 0.0
      %961 = vmatprep.subr.mxu0 0.0
      %962 = vmatpush1.msra.mxu0 0.0
      %963 = vmatprep.subr.mxu0 0.0
      %964 = vmatpush1.msra.mxu0 0.0
      %965 = vmatprep.subr.mxu0 0.0
      %966 = vmatpush1.msra.mxu0 0.0
      %967 = vmatprep.subr.mxu0 0.0
      %968 = vmatpush1.msra.mxu0 0.0
      %969 = vmatprep.subr.mxu0 0.0
      %970 = vmatpush1.msra.mxu0 0.0
      %971 = vmatprep.subr.mxu0 0.0
      %972 = vmatpush1.msra.mxu0 0.0
      %973 = vmatprep.subr.mxu0 0.0
      %974 = vmatpush1.msra.mxu0 0.0
      %975 = vmatprep.subr.mxu0 0.0
      %976 = vmatpush1.msra.mxu0 0.0
      %977 = vmatprep.subr.mxu0 0.0
      %978 = vmatpush1.msra.mxu0 0.0
      %979 = vmatprep.subr.mxu0 0.0
      %980 = vmatpush1.msra.mxu0 0.0
      %981 = vmatprep.subr.mxu0 0.0
      %982 = vmatpush1.msra.mxu0 0.0
      %983 = vmatprep.subr.mxu0 0.0
      %984 = vmatpush1.msra.mxu0 0.0
      %985 = vmatprep.subr.mxu0 0.0
      %986 = vmatpush1.msra.mxu0 0.0
      %987 = vmatprep.subr.mxu0 0.0
      %988 = vmatpush1.msra.mxu0 0.0
      %989 = vmatprep.mubr.f32.mxu0 0.0
      %990 = vmatmul.mubr.f32.gmra.mrb[0].mxu0 %v232
      %v991 = vpop.f32.mrb[0].mxu0
      %v992 = vadd.f32 %v767, %v991
      %v993 = vpop.f32.mrb[0].mxu0
      %994 = vmatprep.mubr.f32.mxu0 0.0
      %995 = vmatmul.mubr.f32.gmra.mrb[0].mxu0 %v237
      %v996 = vpop.f32.mrb[0].mxu0
      %v997 = vadd.f32 %v772, %v996
      %v998 = vpop.f32.mrb[0].mxu0
      %999 = vmatprep.mubr.f32.mxu0 0.0
      %1000 = vmatmul.mubr.f32.gmra.mrb[0].mxu0 %v242
      %v1001 = vpop.f32.mrb[0].mxu0
      %v1002 = vadd.f32 %v777, %v1001
      %v1003 = vpop.f32.mrb[0].mxu0
      %1004 = vmatprep.mubr.f32.mxu0 0.0
      %1005 = vmatmul.mubr.f32.gmra.mrb[0].mxu0 %v247
      %v1006 = vpop.f32.mrb[0].mxu0
      %v1007 = vadd.f32 %v782, %v1006
      %v1008 = vpop.f32.mrb[0].mxu0
      %1009 = vmatprep.mubr.f32.mxu0 0.0
      %1010 = vmatmul.mubr.f32.gmra.mrb[0].mxu0 %v252
      %v1011 = vpop.f32.mrb[0].mxu0
      %v1012 = vadd.f32 %v787, %v1011
      %v1013 = vpop.f32.mrb[0].mxu0
      %1014 = vmatprep.mubr.f32.mxu0 0.0
      %1015 = vmatmul.mubr.f32.gmra.mrb[0].mxu0 %v257
      %v1016 = vpop.f32.mrb[0].mxu0
      %v1017 = vadd.f32 %v792, %v1016
      %v1018 = vpop.f32.mrb[0].mxu0
      %1019 = vmatprep.mubr.f32.mxu0 0.0
      %1020 = vmatmul.mubr.f32.gmra.mrb[0].mxu0 %v262
      %v1021 = vpop.f32.mrb[0].mxu0
      %v1022 = vadd.f32 %v797, %v1021
      %v1023 = vpop.f32.mrb[0].mxu0
      %1024 = vmatprep.mubr.f32.mxu0 0.0
      %1025 = vmatmul.mubr.f32.gmra.mrb[0].mxu0 %v267
      %v1026 = vpop.f32.mrb[0].mxu0
      %v1027 = vadd.f32 %v802, %v1026
      %v1028 = vpop.f32.mrb[0].mxu0
      %1029 = vmatprep.mubr.f32.mxu0 0.0
      %1030 = vmatmul.mubr.f32.gmra.mrb[0].mxu0 %v272
      %v1031 = vpop.f32.mrb[0].mxu0
      %v1032 = vadd.f32 %v807, %v1031
      %v1033 = vpop.f32.mrb[0].mxu0
      %1034 = vmatprep.mubr.f32.mxu0 0.0
      %1035 = vmatmul.mubr.f32.gmra.mrb[0].mxu0 %v277
      %v1036 = vpop.f32.mrb[0].mxu0
      %v1037 = vadd.f32 %v812, %v1036
      %v1038 = vpop.f32.mrb[0].mxu0
      %1039 = vmatprep.mubr.f32.mxu0 0.0
      %1040 = vmatmul.mubr.f32.gmra.mrb[0].mxu0 %v282
      %v1041 = vpop.f32.mrb[0].mxu0
      %v1042 = vadd.f32 %v817, %v1041
      %v1043 = vpop.f32.mrb[0].mxu0
      %1044 = vmatprep.mubr.f32.mxu0 0.0
      %1045 = vmatmul.mubr.f32.gmra.mrb[0].mxu0 %v287
      %v1046 = vpop.f32.mrb[0].mxu0
      %v1047 = vadd.f32 %v822, %v1046
      %v1048 = vpop.f32.mrb[0].mxu0
      %1049 = vmatprep.mubr.f32.mxu0 0.0
      %1050 = vmatmul.mubr.f32.gmra.mrb[0].mxu0 %v292
      %v1051 = vpop.f32.mrb[0].mxu0
      %v1052 = vadd.f32 %v827, %v1051
      %v1053 = vpop.f32.mrb[0].mxu0
      %1054 = vmatprep.mubr.f32.mxu0 0.0
      %1055 = vmatmul.mubr.f32.gmra.mrb[0].mxu0 %v297
      %v1056 = vpop.f32.mrb[0].mxu0
      %v1057 = vadd.f32 %v832, %v1056
      %v1058 = vpop.f32.mrb[0].mxu0
      %1059 = vmatprep.mubr.f32.mxu0 0.0
      %1060 = vmatmul.mubr.f32.gmra.mrb[0].mxu0 %v302
      %v1061 = vpop.f32.mrb[0].mxu0
      %v1062 = vadd.f32 %v837, %v1061
      %v1063 = vpop.f32.mrb[0].mxu0
      %1064 = vmatprep.mubr.f32.mxu0 0.0
      %1065 = vmatmul.mubr.f32.gmra.mrb[0].mxu0 %v307
      %v1066 = vpop.f32.mrb[0].mxu0
      %v1067 = vadd.f32 %v842, %v1066
      %v1068 = vpop.f32.mrb[0].mxu0
      %1069 = vmatprep.mubr.f32.mxu0 0.0
      %1070 = vmatmul.mubr.f32.gmra.mrb[0].mxu0 %v312
      %v1071 = vpop.f32.mrb[0].mxu0
      %v1072 = vadd.f32 %v847, %v1071
      %v1073 = vpop.f32.mrb[0].mxu0
      %1074 = vmatprep.mubr.f32.mxu0 0.0
      %1075 = vmatmul.mubr.f32.gmra.mrb[0].mxu0 %v317
      %v1076 = vpop.f32.mrb[0].mxu0
      %v1077 = vadd.f32 %v852, %v1076
      %v1078 = vpop.f32.mrb[0].mxu0
      %1079 = vmatprep.mubr.f32.mxu0 0.0
      %1080 = vmatmul.mubr.f32.gmra.mrb[0].mxu0 %v322
      %v1081 = vpop.f32.mrb[0].mxu0
      %v1082 = vadd.f32 %v857, %v1081
      %v1083 = vpop.f32.mrb[0].mxu0
      %1084 = vmatprep.mubr.f32.mxu0 0.0
      %1085 = vmatmul.mubr.f32.gmra.mrb[0].mxu0 %v327
      %v1086 = vpop.f32.mrb[0].mxu0
      %v1087 = vadd.f32 %v862, %v1086
      %v1088 = vpop.f32.mrb[0].mxu0
      %1089 = vmatprep.mubr.f32.mxu0 0.0
      %1090 = vmatmul.mubr.f32.gmra.mrb[0].mxu0 %v332
      %v1091 = vpop.f32.mrb[0].mxu0
      %v1092 = vadd.f32 %v867, %v1091
      %v1093 = vpop.f32.mrb[0].mxu0
      %1094 = vmatprep.mubr.f32.mxu0 0.0
      %1095 = vmatmul.mubr.f32.gmra.mrb[0].mxu0 %v337
      %v1096 = vpop.f32.mrb[0].mxu0
      %v1097 = vadd.f32 %v872, %v1096
      %v1098 = vpop.f32.mrb[0].mxu0
      %1099 = vmatprep.mubr.f32.mxu0 0.0
      %1100 = vmatmul.mubr.f32.gmra.mrb[0].mxu0 %v342
      %v1101 = vpop.f32.mrb[0].mxu0
      %v1102 = vadd.f32 %v877, %v1101
      %v1103 = vpop.f32.mrb[0].mxu0
      %1104 = vmatprep.mubr.f32.mxu0 0.0
      %1105 = vmatmul.mubr.f32.gmra.mrb[0].mxu0 %v347
      %v1106 = vpop.f32.mrb[0].mxu0
      %v1107 = vadd.f32 %v882, %v1106
      %v1108 = vpop.f32.mrb[0].mxu0
      %1109 = vmatprep.mubr.f32.mxu0 0.0
      %1110 = vmatmul.mubr.f32.gmra.mrb[0].mxu0 %v352
      %v1111 = vpop.f32.mrb[0].mxu0
      %v1112 = vadd.f32 %v887, %v1111
      %v1113 = vpop.f32.mrb[0].mxu0
      %1114 = vmatprep.mubr.f32.mxu0 0.0
      %1115 = vmatmul.mubr.f32.gmra.mrb[0].mxu0 %v357
      %v1116 = vpop.f32.mrb[0].mxu0
      %v1117 = vadd.f32 %v892, %v1116
      %v1118 = vpop.f32.mrb[0].mxu0
      %1119 = vmatprep.mubr.f32.mxu0 0.0
      %1120 = vmatmul.mubr.f32.gmra.mrb[0].mxu0 %v362
      %v1121 = vpop.f32.mrb[0].mxu0
      %v1122 = vadd.f32 %v897, %v1121
      %v1123 = vpop.f32.mrb[0].mxu0
      %1124 = vmatprep.mubr.f32.mxu0 0.0
      %1125 = vmatmul.mubr.f32.gmra.mrb[0].mxu0 %v367
      %v1126 = vpop.f32.mrb[0].mxu0
      %v1127 = vadd.f32 %v902, %v1126
      %v1128 = vpop.f32.mrb[0].mxu0
      %1129 = vmatprep.mubr.f32.mxu0 0.0
      %1130 = vmatmul.mubr.f32.gmra.mrb[0].mxu0 %v372
      %v1131 = vpop.f32.mrb[0].mxu0
      %v1132 = vadd.f32 %v907, %v1131
      %v1133 = vpop.f32.mrb[0].mxu0
      %1134 = vmatprep.mubr.f32.mxu0 0.0
      %1135 = vmatmul.mubr.f32.gmra.mrb[0].mxu0 %v377
      %v1136 = vpop.f32.mrb[0].mxu0
      %v1137 = vadd.f32 %v912, %v1136
      %v1138 = vpop.f32.mrb[0].mxu0
      %1139 = vmatprep.mubr.f32.mxu0 0.0
      %1140 = vmatmul.mubr.f32.gmra.mrb[0].mxu0 %v382
      %v1141 = vpop.f32.mrb[0].mxu0
      %v1142 = vadd.f32 %v917, %v1141
      %v1143 = vpop.f32.mrb[0].mxu0
      %1144 = vmatprep.mubr.f32.mxu0 0.0
      %1145 = vmatmul.mubr.f32.gmra.mrb[0].mxu0 %v387
      %v1146 = vpop.f32.mrb[0].mxu0
      %v1147 = vadd.f32 %v922, %v1146
      %v1148 = vpop.f32.mrb[0].mxu0
      %1149 = vdwg.mxu0
      %v1150 = vtanh.pop %v992
      %v1151 = vtanh.pop %v997
      %v1152 = vtanh.pop %v1002
      %v1153 = vtanh.pop %v1007
      %v1154 = vtanh.pop %v1012
      %v1155 = vtanh.pop %v1017
      %v1156 = vtanh.pop %v1022
      %v1157 = vtanh.pop %v1027
      %v1158 = vtanh.pop %v1032
      %v1159 = vtanh.pop %v1037
      %v1160 = vtanh.pop %v1042
      %v1161 = vtanh.pop %v1047
      %v1162 = vtanh.pop %v1052
      %v1163 = vtanh.pop %v1057
      %v1164 = vtanh.pop %v1062
      %v1165 = vtanh.pop %v1067
      %v1166 = vtanh.pop %v1072
      %v1167 = vtanh.pop %v1077
      %v1168 = vtanh.pop %v1082
      %v1169 = vtanh.pop %v1087
      %v1170 = vtanh.pop %v1092
      %v1171 = vtanh.pop %v1097
      %v1172 = vtanh.pop %v1102
      %v1173 = vtanh.pop %v1107
      %v1174 = vtanh.pop %v1112
      %v1175 = vtanh.pop %v1117
      %v1176 = vtanh.pop %v1122
      %v1177 = vtanh.pop %v1127
      %v1178 = vtanh.pop %v1132
      %v1179 = vtanh.pop %v1137
      %v1180 = vtanh.pop %v1142
      %v1181 = vtanh.pop %v1147
      %1182 = vst [vmem:[%s226] sm:$0xff] %v1150
      %1183 = vst [vmem:[%s226 + $0x8] sm:$0xff] %v1151
      %1184 = vst [vmem:[%s226 + $0x10] sm:$0xff] %v1152
      %1185 = vst [vmem:[%s226 + $0x18] sm:$0xff] %v1153
      %1186 = vst [vmem:[%s226 + $0x20] sm:$0xff] %v1154
      %1187 = vst [vmem:[%s226 + $0x28] sm:$0xff] %v1155
      %1188 = vst [vmem:[%s226 + $0x30] sm:$0xff] %v1156
      %1189 = vst [vmem:[%s226 + $0x38] sm:$0xff] %v1157
      %1190 = vst [vmem:[%s226 + $0x40] sm:$0xff] %v1158
      %1191 = vst [vmem:[%s226 + $0x48] sm:$0xff] %v1159
      %1192 = vst [vmem:[%s226 + $0x50] sm:$0xff] %v1160
      %1193 = vst [vmem:[%s226 + $0x58] sm:$0xff] %v1161
      %1194 = vst [vmem:[%s226 + $0x60] sm:$0xff] %v1162
      %1195 = vst [vmem:[%s226 + $0x68] sm:$0xff] %v1163
      %1196 = vst [vmem:[%s226 + $0x70] sm:$0xff] %v1164
      %1197 = vst [vmem:[%s226 + $0x78] sm:$0xff] %v1165
      %1198 = vst [vmem:[%s226 + $0x80] sm:$0xff] %v1166
      %1199 = vst [vmem:[%s226 + $0x88] sm:$0xff] %v1167
      %1200 = vst [vmem:[%s226 + $0x90] sm:$0xff] %v1168
      %1201 = vst [vmem:[%s226 + $0x98] sm:$0xff] %v1169
      %1202 = vst [vmem:[%s226 + $0xa0] sm:$0xff] %v1170
      %1203 = vst [vmem:[%s226 + $0xa8] sm:$0xff] %v1171
      %1204 = vst [vmem:[%s226 + $0xb0] sm:$0xff] %v1172
      %1205 = vst [vmem:[%s226 + $0xb8] sm:$0xff] %v1173
      %1206 = vst [vmem:[%s226 + $0xc0] sm:$0xff] %v1174
      %1207 = vst [vmem:[%s226 + $0xc8] sm:$0xff] %v1175
      %1208 = vst [vmem:[%s226 + $0xd0] sm:$0xff] %v1176
      %1209 = vst [vmem:[%s226 + $0xd8] sm:$0xff] %v1177
      %1210 = vst [vmem:[%s226 + $0xe0] sm:$0xff] %v1178
      %1211 = vst [vmem:[%s226 + $0xe8] sm:$0xff] %v1179
      %1212 = vst [vmem:[%s226 + $0xf0] sm:$0xff] %v1180
      %1213 = vst [vmem:[%s226 + $0xf8] sm:$0xff] %v1181
      %s1214 = smul.u32 32, %s18
      %p1215 = scmp.lt.s32.totalorder %s1214, 63
      %s1216 = scalar_select %p1215, %s1214, 63
      %p1217 = scmp.lt.s32.totalorder %s19, 0
      %s1218 = scalar_select %p1217, %s19, 0
      %s1219 = sadd.s32 %s1218, %s1216
      %s1220 = smul.addr %s1219, 8
      %s1221 = scalar_lea.vmem %s3, %s1220
      // Predicated region
      $region33: #{espcn_forward.4} parent=31 // pred_check
        %p1222 = pneg %p124
      $region34: #{espcn_forward.4} parent=31 // pred_check_branch
        %1224 = sbr.rel (%p1222) target = $region36
      $region35: #{espcn_forward.4} parent=31 // pred_region
        %s1225 = smul.u32 32, %s18
      $region36: #{espcn_forward.4} parent=31 // pred_fallthru
        _
    $region32: #{espcn_forward.4} parent=5 // pred_fallthru
      _
    %p1226 = scmp.le.s32.totalorder 2, %s9
    // Predicated region
    $region37: #{espcn_forward.4} parent=5 // pred_check
      %p1227 = pneg %p1226
    $region38: #{espcn_forward.4} parent=5 // pred_check_branch
      %1229 = sbr.rel (%p1227) target = $region40
    $region39: #{espcn_forward.4} parent=5 // pred_region
      %s1230 = ssub.s32 %s9, 2
      // Predicated region
      $region41: #{espcn_forward.4} parent=39 // pred_check
        %p1231 = pneg %p130
      $region42: #{espcn_forward.4} parent=39 // pred_check_branch
        %1233 = sbr.rel (%p1231) target = $region44
      $region43: #{espcn_forward.4} parent=39 // pred_region
        %s1234 = smul.u32 32, %s20
        %p1235 = scmp.lt.s32.totalorder %s1234, 63
        %s1236 = scalar_select %p1235, %s1234, 63
        %p1237 = scmp.lt.s32.totalorder %s21, 0
        %s1238 = scalar_select %p1237, %s21, 0
        %s1239 = sadd.s32 %s1238, %s1236
        %s1240 = smul.addr %s1239, 8
        %s1241 = scalar_lea.vmem %s3, %s1240
      $region44: #{espcn_forward.4} parent=39 // pred_fallthru
        _
    $region40: #{espcn_forward.4} parent=5 // pred_fallthru
      _
  $region6: #{espcn_forward.4} parent=0 // loop_footer
    %s13 = sadd.s32 1, %s9
  $region7: #{espcn_forward.4} parent=0 // loop_footer_branch
    %8 = sbr.rel target = $region3
  $region8: #{espcn_forward.4} parent=0 // loop_exit
    _

// kernel: espcn_forward.5
$region0: #{espcn_forward.5}
  #allocation0 [shape = 'u32[]', space=smem, size = 0x4, offset = 0x4, fixed_abs, tag = 'smem constant byte address 0x4 - core index']
  #allocation1 [shape = 'u32[144,128]{1,0:T(1,128)}', space=vmem, size = 0x12000, scoped, tag = 'internal scratch']
  %s0 = inlined_call_operand.vmem [shape: f32[512,384], index: 0, kind: input, shape index: {}]
  %s1 = inlined_call_operand.vmem [shape: f32[384,128], index: 1, kind: input, shape index: {}]
  %s2 = inlined_call_operand.vmem [shape: f32[1,128], index: 2, kind: input, shape index: {}]
  %s3 = inlined_call_operand.vmem [shape: f32[512,128], index: 3, kind: output, shape index: {}]
  %s4 = sld [smem:[#allocation0]]
  $region45: #{espcn_forward.5} parent=0
    _
  %s6 = ssub.s32 1, %s4
  %s7 = scalar_select 0, %s6, %s4
  loop: start=0, step=1, limit=4
  $region2: #{espcn_forward.5} parent=0 // loop_pre_header
    _
  $region3: #{espcn_forward.5} parent=0 // loop_header
    %s9 = sphi 0, %s13
    %p10 = scmp.ge.s32.totalorder %s9, 4
    %s16 = sphi 0, %s28
    %s17 = sphi 0, %s24
    %s18 = sphi 0, %s16
    %s19 = sphi 0, %s17
    %s20 = sphi 0, %s18
    %s21 = sphi 0, %s19
    %s31 = sphi 0, %s33
    %s34 = sphi 0, %s31
    %s35 = sphi 0, %s34
    %s51 = sphi 0, %s35
    %s57 = sphi 0, %s59
    %s60 = sphi 0, %s57
    %s61 = sphi 0, %s60
    %s77 = sphi 0, %s61
    %s83 = sphi 0, %s85
    %s86 = sphi 0, %s83
    %s87 = sphi 0, %s86
    %s103 = sphi 0, %s87
    %s111 = sphi 0, %s113
    %s114 = sphi 0, %s111
    %s115 = sphi 0, %s114
    %s131 = sphi 0, %s115
  $region4: #{espcn_forward.5} parent=0 // loop_header_branch
    %12 = sbr.rel (%p10) target = $region8
  $region5: #{espcn_forward.5} parent=0 // loop_body
    %s14 = ssub.s32 %s9, 1
    %s15 = ssub.s32 %s9, 2
    %s22 = sadd.s32 1, %s17
    %p23 = scmp.ge.s32.totalorder %s22, 1
    %s24 = scalar_select %p23, 0, %s22
    %s25 = sadd.s32 1, %s16
    %s26 = scalar_select %p23, %s25, %s16
    %p27 = scmp.ge.s32.totalorder %s26, 2
    %s28 = scalar_select %p27, 0, %s26
    %s29 = ssub.s32 %s16, %s28
    %p30 = scmp.eq.s32.totalorder %s29, 0
    %s32 = sadd.s32 %s31, 1
    %s33 = scalar_select %p30, %s31, %s32
    %p36 = pneg %p30
    %p37 = scmp.eq.s32.totalorder %s9, 1
    %p38 = por %p36, %p37
    %p39 = scmp.ne.s32.totalorder %s31, %s34
    %p40 = scmp.eq.s32.totalorder %s9, 0
    %p41 = por %p39, %p40
    %p42 = scmp.ne.s32.totalorder %s31, %s34
    %p43 = scmp.eq.s32.totalorder %s14, 1
    %p44 = por %p42, %p43
    %p45 = scmp.ne.s32.totalorder %s34, %s35
    %p46 = scmp.eq.s32.totalorder %s14, 0
    %p47 = por %p45, %p46
    %p48 = scmp.ne.s32.totalorder %s34, %s35
    %p49 = scmp.eq.s32.totalorder %s15, 1
    %p50 = por %p48, %p49
    %p52 = scmp.ne.s32.totalorder %s35, %s51
    %p53 = scmp.eq.s32.totalorder %s15, 0
    %p54 = por %p52, %p53
    %s55 = ssub.s32 %s17, %s24
    %p56 = scmp.eq.s32.totalorder %s55, 0
    %s58 = sadd.s32 %s57, 1
    %s59 = scalar_select %p56, %s57, %s58
    %p62 = pneg %p56
    %p63 = scmp.eq.s32.totalorder %s9, 1
    %p64 = por %p62, %p63
    %p65 = scmp.ne.s32.totalorder %s57, %s60
    %p66 = scmp.eq.s32.totalorder %s9, 0
    %p67 = por %p65, %p66
    %p68 = scmp.ne.s32.totalorder %s57, %s60
    %p69 = scmp.eq.s32.totalorder %s14, 1
    %p70 = por %p68, %p69
    %p71 = scmp.ne.s32.totalorder %s60, %s61
    %p72 = scmp.eq.s32.totalorder %s14, 0
    %p73 = por %p71, %p72
    %p74 = scmp.ne.s32.totalorder %s60, %s61
    %p75 = scmp.eq.s32.totalorder %s15, 1
    %p76 = por %p74, %p75
    %p78 = scmp.ne.s32.totalorder %s61, %s77
    %p79 = scmp.eq.s32.totalorder %s15, 0
    %p80 = por %p78, %p79
    %s81 = ssub.s32 %s17, %s24
    %p82 = scmp.eq.s32.totalorder %s81, 0
    %s84 = sadd.s32 %s83, 1
    %s85 = scalar_select %p82, %s83, %s84
    %p88 = pneg %p82
    %p89 = scmp.eq.s32.totalorder %s9, 1
    %p90 = por %p88, %p89
    %p91 = scmp.ne.s32.totalorder %s83, %s86
    %p92 = scmp.eq.s32.totalorder %s9, 0
    %p93 = por %p91, %p92
    %p94 = scmp.ne.s32.totalorder %s83, %s86
    %p95 = scmp.eq.s32.totalorder %s14, 1
    %p96 = por %p94, %p95
    %p97 = scmp.ne.s32.totalorder %s86, %s87
    %p98 = scmp.eq.s32.totalorder %s14, 0
    %p99 = por %p97, %p98
    %p100 = scmp.ne.s32.totalorder %s86, %s87
    %p101 = scmp.eq.s32.totalorder %s15, 1
    %p102 = por %p100, %p101
    %p104 = scmp.ne.s32.totalorder %s87, %s103
    %p105 = scmp.eq.s32.totalorder %s15, 0
    %p106 = por %p104, %p105
    %s107 = ssub.s32 %s16, %s28
    %s108 = ssub.s32 %s17, %s24
    %s109 = sor.u32 %s107, %s108
    %p110 = scmp.eq.s32.totalorder %s109, 0
    %s112 = sadd.s32 %s111, 1
    %s113 = scalar_select %p110, %s111, %s112
    %p116 = pneg %p110
    %p117 = scmp.eq.s32.totalorder %s9, 1
    %p118 = por %p116, %p117
    %p119 = scmp.ne.s32.totalorder %s111, %s114
    %p120 = scmp.eq.s32.totalorder %s9, 0
    %p121 = por %p119, %p120
    %p122 = scmp.ne.s32.totalorder %s111, %s114
    %p123 = scmp.eq.s32.totalorder %s14, 1
    %p124 = por %p122, %p123
    %p125 = scmp.ne.s32.totalorder %s114, %s115
    %p126 = scmp.eq.s32.totalorder %s14, 0
    %p127 = por %p125, %p126
    %p128 = scmp.ne.s32.totalorder %s114, %s115
    %p129 = scmp.eq.s32.totalorder %s15, 1
    %p130 = por %p128, %p129
    %p132 = scmp.ne.s32.totalorder %s115, %s131
    %p133 = scmp.eq.s32.totalorder %s15, 0
    %p134 = por %p132, %p133
    %p135 = scmp.le.s32.totalorder 1, %s9
    %p136 = scmp.lt.s32.totalorder %s9, 3
    %p137 = pnand %p135, %p136
    %p138 = pneg %p137
    // Predicated region
    $region9: #{espcn_forward.5} parent=5 // pred_check
      _
    $region10: #{espcn_forward.5} parent=5 // pred_check_branch
      %140 = sbr.rel (%p137) target = $region12
    $region11: #{espcn_forward.5} parent=5 // pred_region
      %s141 = ssub.s32 %s9, 1
      // Predicated region
      $region13: #{espcn_forward.5} parent=11 // pred_check
        %p142 = pneg %p73
      $region14: #{espcn_forward.5} parent=11 // pred_check_branch
        %144 = sbr.rel (%p142) target = $region16
      $region15: #{espcn_forward.5} parent=11 // pred_region
        %p145 = scmp.lt.s32.totalorder %s19, 0
        %s146 = scalar_select %p145, %s19, 0
        %s147 = smul.addr %s146, 8
        %s148 = scalar_lea.vmem %s1, %s147
      $region16: #{espcn_forward.5} parent=11 // pred_fallthru
        _
      // Predicated region
      $region17: #{espcn_forward.5} parent=11 // pred_check
        %p149 = pneg %p99
      $region18: #{espcn_forward.5} parent=11 // pred_check_branch
        %151 = sbr.rel (%p149) target = $region20
      $region19: #{espcn_forward.5} parent=11 // pred_region
        %p152 = scmp.lt.s32.totalorder %s19, 0
        %s153 = scalar_select %p152, %s19, 0
        %s154 = scalar_lea.vmem %s2, %s153
      $region20: #{espcn_forward.5} parent=11 // pred_fallthru
        _
    $region12: #{espcn_forward.5} parent=5 // pred_fallthru
      _
    %p155 = scmp.lt.s32.totalorder %s9, 2
    // Predicated region
    $region21: #{espcn_forward.5} parent=5 // pred_check
      %p156 = pneg %p155
    $region22: #{espcn_forward.5} parent=5 // pred_check_branch
      %158 = sbr.rel (%p156) target = $region24
    $region23: #{espcn_forward.5} parent=5 // pred_region
      // Predicated region
      $region25: #{espcn_forward.5} parent=23 // pred_check
        %p159 = pneg %p41
      $region26: #{espcn_forward.5} parent=23 // pred_check_branch
        %161 = sbr.rel (%p159) target = $region28
      $region27: #{espcn_forward.5} parent=23 // pred_region
        %s162 = smul.u32 32, %s16
        %p163 = scmp.lt.s32.totalorder %s162, 63
        %s164 = scalar_select %p163, %s162, 63
        %s165 = smul.addr %s164, 3
        %s166 = smul.addr %s165, 8
        %s167 = scalar_lea.vmem %s0, %s166
        %s168 = smul.u32 32, %s16
      $region28: #{espcn_forward.5} parent=23 // pred_fallthru
        _
    $region24: #{espcn_forward.5} parent=5 // pred_fallthru
      _
    %p169 = scmp.le.s32.totalorder 1, %s9
    %p170 = scmp.lt.s32.totalorder %s9, 3
    %p171 = pnand %p169, %p170
    %p172 = pneg %p171
    // Predicated region
    $region29: #{espcn_forward.5} parent=5 // pred_check
      _
    $region30: #{espcn_forward.5} parent=5 // pred_check_branch
      %174 = sbr.rel (%p171) target = $region32
    $region31: #{espcn_forward.5} parent=5 // pred_region
      %s175 = ssub.s32 %s9, 1
      %s176 = smul.u32 32, %s18
      %p177 = scmp.lt.s32.totalorder %s176, 63
      %s178 = scalar_select %p177, %s176, 63
      %s179 = smul.addr %s178, 3
      %s180 = smul.addr %s179, 8
      %s181 = scalar_lea.vmem %s0, %s180
      %p182 = pneg %p47
      %p183 = pneg %p44
      %p184 = scmp.lt.s32.totalorder %s19, 0
      %s185 = scalar_select %p184, %s19, 0
      %s186 = smul.addr %s185, 8
      %s187 = scalar_lea.vmem %s1, %s186
      %p188 = pneg %p73
      %p189 = pneg %p70
      %p190 = scmp.lt.s32.totalorder %s19, 0
      %s191 = scalar_select %p190, %s19, 0
      %s192 = scalar_lea.vmem %s2, %s191
      %p193 = pneg %p99
      %p194 = pneg %p96
      %p195 = pneg %p127
      %p196 = pneg %p124
      %s197 = smul.u32 32, %s18
      %p198 = scmp.lt.s32.totalorder %s197, 63
      %s199 = scalar_select %p198, %s197, 63
      %p200 = scmp.lt.s32.totalorder %s19, 0
      %s201 = scalar_select %p200, %s19, 0
      %s202 = sadd.s32 %s201, %s199
      %s203 = smul.addr %s202, 8
      %s204 = scalar_lea.vmem %s3, %s203
      %s205 = smul.u32 32, %s18
      %p206 = scmp.lt.s32.totalorder %s205, 63
      %s207 = scalar_select %p206, %s205, 63
      %s208 = smul.addr %s207, 3
      %s209 = smul.addr %s208, 8
      %s210 = scalar_lea.vmem %s0, %s209
      %s211 = smul.u32 32, %s18
      %p212 = scmp.lt.s32.totalorder %s19, 0
      %s213 = scalar_select %p212, %s19, 0
      %s214 = smul.addr %s213, 8
      %s215 = scalar_lea.vmem %s1, %s214
      %p216 = scmp.lt.s32.totalorder %s19, 0
      %s217 = scalar_select %p216, %s19, 0
      %s218 = scalar_lea.vmem %s2, %s217
      %s219 = smul.u32 32, %s18
      %p220 = scmp.lt.s32.totalorder %s219, 63
      %s221 = scalar_select %p220, %s219, 63
      %p222 = scmp.lt.s32.totalorder %s19, 0
      %s223 = scalar_select %p222, %s19, 0
      %s224 = sadd.s32 %s223, %s221
      %s225 = smul.addr %s224, 8
      %s226 = scalar_lea.vmem %s3, %s225
      %s227 = smul.u32 32, %s18
      %v228 = vld [vmem:[%s210] sm:$0xff]
      %v229 = vld [vmem:[%s210 + $0x8] sm:$0xff]
      %v230 = vld [vmem:[%s210 + $0x10] sm:$0xff]
      %v231 = vld [vmem:[%s210 + $0x18] sm:$0xff]
      %v232 = vld [vmem:[%s210 + $0x20] sm:$0xff]
      %v233 = vld [vmem:[%s210 + $0x28] sm:$0xff]
      %v234 = vld [vmem:[%s210 + $0x30] sm:$0xff]
      %v235 = vld [vmem:[%s210 + $0x38] sm:$0xff]
      %v236 = vld [vmem:[%s210 + $0x40] sm:$0xff]
      %v237 = vld [vmem:[%s210 + $0x48] sm:$0xff]
      %v238 = vld [vmem:[%s210 + $0x50] sm:$0xff]
      %v239 = vld [vmem:[%s210 + $0x58] sm:$0xff]
      %v240 = vld [vmem:[%s210 + $0x60] sm:$0xff]
      %v241 = vld [vmem:[%s210 + $0x68] sm:$0xff]
      %v242 = vld [vmem:[%s210 + $0x70] sm:$0xff]
      %v243 = vld [vmem:[%s210 + $0x78] sm:$0xff]
      %v244 = vld [vmem:[%s210 + $0x80] sm:$0xff]
      %v245 = vld [vmem:[%s210 + $0x88] sm:$0xff]
      %v246 = vld [vmem:[%s210 + $0x90] sm:$0xff]
      %v247 = vld [vmem:[%s210 + $0x98] sm:$0xff]
      %v248 = vld [vmem:[%s210 + $0xa0] sm:$0xff]
      %v249 = vld [vmem:[%s210 + $0xa8] sm:$0xff]
      %v250 = vld [vmem:[%s210 + $0xb0] sm:$0xff]
      %v251 = vld [vmem:[%s210 + $0xb8] sm:$0xff]
      %v252 = vld [vmem:[%s210 + $0xc0] sm:$0xff]
      %v253 = vld [vmem:[%s210 + $0xc8] sm:$0xff]
      %v254 = vld [vmem:[%s210 + $0xd0] sm:$0xff]
      %v255 = vld [vmem:[%s210 + $0xd8] sm:$0xff]
      %v256 = vld [vmem:[%s210 + $0xe0] sm:$0xff]
      %v257 = vld [vmem:[%s210 + $0xe8] sm:$0xff]
      %v258 = vld [vmem:[%s210 + $0xf0] sm:$0xff]
      %v259 = vld [vmem:[%s210 + $0xf8] sm:$0xff]
      %v260 = vld [vmem:[%s210 + $0x100] sm:$0xff]
      %v261 = vld [vmem:[%s210 + $0x108] sm:$0xff]
      %v262 = vld [vmem:[%s210 + $0x110] sm:$0xff]
      %v263 = vld [vmem:[%s210 + $0x118] sm:$0xff]
      %v264 = vld [vmem:[%s210 + $0x120] sm:$0xff]
      %v265 = vld [vmem:[%s210 + $0x128] sm:$0xff]
      %v266 = vld [vmem:[%s210 + $0x130] sm:$0xff]
      %v267 = vld [vmem:[%s210 + $0x138] sm:$0xff]
      %v268 = vld [vmem:[%s210 + $0x140] sm:$0xff]
      %v269 = vld [vmem:[%s210 + $0x148] sm:$0xff]
      %v270 = vld [vmem:[%s210 + $0x150] sm:$0xff]
      %v271 = vld [vmem:[%s210 + $0x158] sm:$0xff]
      %v272 = vld [vmem:[%s210 + $0x160] sm:$0xff]
      %v273 = vld [vmem:[%s210 + $0x168] sm:$0xff]
      %v274 = vld [vmem:[%s210 + $0x170] sm:$0xff]
      %v275 = vld [vmem:[%s210 + $0x178] sm:$0xff]
      %v276 = vld [vmem:[%s210 + $0x180] sm:$0xff]
      %v277 = vld [vmem:[%s210 + $0x188] sm:$0xff]
      %v278 = vld [vmem:[%s210 + $0x190] sm:$0xff]
      %v279 = vld [vmem:[%s210 + $0x198] sm:$0xff]
      %v280 = vld [vmem:[%s210 + $0x1a0] sm:$0xff]
      %v281 = vld [vmem:[%s210 + $0x1a8] sm:$0xff]
      %v282 = vld [vmem:[%s210 + $0x1b0] sm:$0xff]
      %v283 = vld [vmem:[%s210 + $0x1b8] sm:$0xff]
      %v284 = vld [vmem:[%s210 + $0x1c0] sm:$0xff]
      %v285 = vld [vmem:[%s210 + $0x1c8] sm:$0xff]
      %v286 = vld [vmem:[%s210 + $0x1d0] sm:$0xff]
      %v287 = vld [vmem:[%s210 + $0x1d8] sm:$0xff]
      %v288 = vld [vmem:[%s210 + $0x1e0] sm:$0xff]
      %v289 = vld [vmem:[%s210 + $0x1e8] sm:$0xff]
      %v290 = vld [vmem:[%s210 + $0x1f0] sm:$0xff]
      %v291 = vld [vmem:[%s210 + $0x1f8] sm:$0xff]
      %v292 = vld [vmem:[%s210 + $0x200] sm:$0xff]
      %v293 = vld [vmem:[%s210 + $0x208] sm:$0xff]
      %v294 = vld [vmem:[%s210 + $0x210] sm:$0xff]
      %v295 = vld [vmem:[%s210 + $0x218] sm:$0xff]
      %v296 = vld [vmem:[%s210 + $0x220] sm:$0xff]
      %v297 = vld [vmem:[%s210 + $0x228] sm:$0xff]
      %v298 = vld [vmem:[%s210 + $0x230] sm:$0xff]
      %v299 = vld [vmem:[%s210 + $0x238] sm:$0xff]
      %v300 = vld [vmem:[%s210 + $0x240] sm:$0xff]
      %v301 = vld [vmem:[%s210 + $0x248] sm:$0xff]
      %v302 = vld [vmem:[%s210 + $0x250] sm:$0xff]
      %v303 = vld [vmem:[%s210 + $0x258] sm:$0xff]
      %v304 = vld [vmem:[%s210 + $0x260] sm:$0xff]
      %v305 = vld [vmem:[%s210 + $0x268] sm:$0xff]
      %v306 = vld [vmem:[%s210 + $0x270] sm:$0xff]
      %v307 = vld [vmem:[%s210 + $0x278] sm:$0xff]
      %v308 = vld [vmem:[%s210 + $0x280] sm:$0xff]
      %v309 = vld [vmem:[%s210 + $0x288] sm:$0xff]
      %v310 = vld [vmem:[%s210 + $0x290] sm:$0xff]
      %v311 = vld [vmem:[%s210 + $0x298] sm:$0xff]
      %v312 = vld [vmem:[%s210 + $0x2a0] sm:$0xff]
      %v313 = vld [vmem:[%s210 + $0x2a8] sm:$0xff]
      %v314 = vld [vmem:[%s210 + $0x2b0] sm:$0xff]
      %v315 = vld [vmem:[%s210 + $0x2b8] sm:$0xff]
      %v316 = vld [vmem:[%s210 + $0x2c0] sm:$0xff]
      %v317 = vld [vmem:[%s210 + $0x2c8] sm:$0xff]
      %v318 = vld [vmem:[%s210 + $0x2d0] sm:$0xff]
      %v319 = vld [vmem:[%s210 + $0x2d8] sm:$0xff]
      %v320 = vld [vmem:[%s210 + $0x2e0] sm:$0xff]
      %v321 = vld [vmem:[%s210 + $0x2e8] sm:$0xff]
      %v322 = vld [vmem:[%s210 + $0x2f0] sm:$0xff]
      %v323 = vld [vmem:[%s210 + $0x2f8] sm:$0xff]
      %v324 = vld [vmem:[%s215] sm:$0xff]
      %v325 = vld [vmem:[%s215 + $0x8] sm:$0xff]
      %v326 = vld [vmem:[%s215 + $0x10] sm:$0xff]
      %v327 = vld [vmem:[%s215 + $0x18] sm:$0xff]
      %v328 = vld [vmem:[%s215 + $0x20] sm:$0xff]
      %v329 = vld [vmem:[%s215 + $0x28] sm:$0xff]
      %v330 = vld [vmem:[%s215 + $0x30] sm:$0xff]
      %v331 = vld [vmem:[%s215 + $0x38] sm:$0xff]
      %v332 = vld [vmem:[%s215 + $0x40] sm:$0xff]
      %v333 = vld [vmem:[%s215 + $0x48] sm:$0xff]
      %v334 = vld [vmem:[%s215 + $0x50] sm:$0xff]
      %v335 = vld [vmem:[%s215 + $0x58] sm:$0xff]
      %v336 = vld [vmem:[%s215 + $0x60] sm:$0xff]
      %v337 = vld [vmem:[%s215 + $0x68] sm:$0xff]
      %v338 = vld [vmem:[%s215 + $0x70] sm:$0xff]
      %v339 = vld [vmem:[%s215 + $0x78] sm:$0xff]
      %v340 = vld [vmem:[%s215 + $0x80] sm:$0xff]
      %v341 = vld [vmem:[%s215 + $0x88] sm:$0xff]
      %v342 = vld [vmem:[%s215 + $0x90] sm:$0xff]
      %v343 = vld [vmem:[%s215 + $0x98] sm:$0xff]
      %v344 = vld [vmem:[%s215 + $0xa0] sm:$0xff]
      %v345 = vld [vmem:[%s215 + $0xa8] sm:$0xff]
      %v346 = vld [vmem:[%s215 + $0xb0] sm:$0xff]
      %v347 = vld [vmem:[%s215 + $0xb8] sm:$0xff]
      %v348 = vld [vmem:[%s215 + $0xc0] sm:$0xff]
      %v349 = vld [vmem:[%s215 + $0xc8] sm:$0xff]
      %v350 = vld [vmem:[%s215 + $0xd0] sm:$0xff]
      %v351 = vld [vmem:[%s215 + $0xd8] sm:$0xff]
      %v352 = vld [vmem:[%s215 + $0xe0] sm:$0xff]
      %v353 = vld [vmem:[%s215 + $0xe8] sm:$0xff]
      %v354 = vld [vmem:[%s215 + $0xf0] sm:$0xff]
      %v355 = vld [vmem:[%s215 + $0xf8] sm:$0xff]
      %v356 = vld [vmem:[%s215 + $0x100] sm:$0xff]
      %v357 = vld [vmem:[%s215 + $0x108] sm:$0xff]
      %v358 = vld [vmem:[%s215 + $0x110] sm:$0xff]
      %v359 = vld [vmem:[%s215 + $0x118] sm:$0xff]
      %v360 = vld [vmem:[%s215 + $0x120] sm:$0xff]
      %v361 = vld [vmem:[%s215 + $0x128] sm:$0xff]
      %v362 = vld [vmem:[%s215 + $0x130] sm:$0xff]
      %v363 = vld [vmem:[%s215 + $0x138] sm:$0xff]
      %v364 = vld [vmem:[%s215 + $0x140] sm:$0xff]
      %v365 = vld [vmem:[%s215 + $0x148] sm:$0xff]
      %v366 = vld [vmem:[%s215 + $0x150] sm:$0xff]
      %v367 = vld [vmem:[%s215 + $0x158] sm:$0xff]
      %v368 = vld [vmem:[%s215 + $0x160] sm:$0xff]
      %v369 = vld [vmem:[%s215 + $0x168] sm:$0xff]
      %v370 = vld [vmem:[%s215 + $0x170] sm:$0xff]
      %v371 = vld [vmem:[%s215 + $0x178] sm:$0xff]
      %v372 = vld [vmem:[%s218] sm:$0x1]
      %v374 = vlaneseq
      %v375 = vshrl.u32 %v374, 7
      %v376 = vsub.s32 0, %v375
      %v377 = vrot.slane %v372, %v376
      %379 = vmatprep.subr.mxu0 0.0
      %380 = vmatpush1.msra.mxu0 %v324
      %381 = vmatprep.subr.mxu0 0.0
      %382 = vmatpush1.msra.mxu0 %v325
      %383 = vmatprep.subr.mxu0 0.0
      %384 = vmatpush1.msra.mxu0 %v326
      %385 = vmatprep.subr.mxu0 0.0
      %386 = vmatpush1.msra.mxu0 %v327
      %387 = vmatprep.subr.mxu0 0.0
      %388 = vmatpush1.msra.mxu0 %v328
      %389 = vmatprep.subr.mxu0 0.0
      %390 = vmatpush1.msra.mxu0 %v329
      %391 = vmatprep.subr.mxu0 0.0
      %392 = vmatpush1.msra.mxu0 %v330
      %393 = vmatprep.subr.mxu0 0.0
      %394 = vmatpush1.msra.mxu0 %v331
      %395 = vmatprep.subr.mxu0 0.0
      %396 = vmatpush1.msra.mxu0 %v332
      %397 = vmatprep.subr.mxu0 0.0
      %398 = vmatpush1.msra.mxu0 %v333
      %399 = vmatprep.subr.mxu0 0.0
      %400 = vmatpush1.msra.mxu0 %v334
      %401 = vmatprep.subr.mxu0 0.0
      %402 = vmatpush1.msra.mxu0 %v335
      %403 = vmatprep.subr.mxu0 0.0
      %404 = vmatpush1.msra.mxu0 %v336
      %405 = vmatprep.subr.mxu0 0.0
      %406 = vmatpush1.msra.mxu0 %v337
      %407 = vmatprep.subr.mxu0 0.0
      %408 = vmatpush1.msra.mxu0 %v338
      %409 = vmatprep.subr.mxu0 0.0
      %410 = vmatpush1.msra.mxu0 %v339
      %411 = vmatprep.subr.mxu0 0.0
      %412 = vmatpush1.msra.mxu0 %v340
      %413 = vmatprep.subr.mxu0 0.0
      %414 = vmatpush1.msra.mxu0 %v341
      %415 = vmatprep.subr.mxu0 0.0
      %416 = vmatpush1.msra.mxu0 %v342
      %417 = vmatprep.subr.mxu0 0.0
      %418 = vmatpush1.msra.mxu0 %v343
      %419 = vmatprep.subr.mxu0 0.0
      %420 = vmatpush1.msra.mxu0 %v344
      %421 = vmatprep.subr.mxu0 0.0
      %422 = vmatpush1.msra.mxu0 %v345
      %423 = vmatprep.subr.mxu0 0.0
      %424 = vmatpush1.msra.mxu0 %v346
      %425 = vmatprep.subr.mxu0 0.0
      %426 = vmatpush1.msra.mxu0 %v347
      %427 = vmatprep.subr.mxu0 0.0
      %428 = vmatpush1.msra.mxu0 %v348
      %429 = vmatprep.subr.mxu0 0.0
      %430 = vmatpush1.msra.mxu0 %v349
      %431 = vmatprep.subr.mxu0 0.0
      %432 = vmatpush1.msra.mxu0 %v350
      %433 = vmatprep.subr.mxu0 0.0
      %434 = vmatpush1.msra.mxu0 %v351
      %435 = vmatprep.subr.mxu0 0.0
      %436 = vmatpush1.msra.mxu0 %v352
      %437 = vmatprep.subr.mxu0 0.0
      %438 = vmatpush1.msra.mxu0 %v353
      %439 = vmatprep.subr.mxu0 0.0
      %440 = vmatpush1.msra.mxu0 %v354
      %441 = vmatprep.subr.mxu0 0.0
      %442 = vmatpush1.msra.mxu0 %v355
      %443 = vmatprep.mubr.f32.mxu0 %v229
      %444 = vmatmul.mubr.f32.gmra.mrb[0].mxu0 %v228
      %v445 = vpop.f32.mrb[0].mxu0
      %v446 = vadd.f32 %v377, %v445
      %v447 = vpop.f32.mrb[0].mxu0
      %448 = vmatprep.mubr.f32.mxu0 %v232
      %449 = vmatmul.mubr.f32.gmra.mrb[0].mxu0 %v231
      %v450 = vpop.f32.mrb[0].mxu0
      %v451 = vadd.f32 %v377, %v450
      %v452 = vpop.f32.mrb[0].mxu0
      %453 = vmatprep.mubr.f32.mxu0 %v235
      %454 = vmatmul.mubr.f32.gmra.mrb[0].mxu0 %v234
      %v455 = vpop.f32.mrb[0].mxu0
      %v456 = vadd.f32 %v377, %v455
      %v457 = vpop.f32.mrb[0].mxu0
      %458 = vmatprep.mubr.f32.mxu0 %v238
      %459 = vmatmul.mubr.f32.gmra.mrb[0].mxu0 %v237
      %v460 = vpop.f32.mrb[0].mxu0
      %v461 = vadd.f32 %v377, %v460
      %v462 = vpop.f32.mrb[0].mxu0
      %463 = vmatprep.mubr.f32.mxu0 %v241
      %464 = vmatmul.mubr.f32.gmra.mrb[0].mxu0 %v240
      %v465 = vpop.f32.mrb[0].mxu0
      %v466 = vadd.f32 %v377, %v465
      %v467 = vpop.f32.mrb[0].mxu0
      %468 = vmatprep.mubr.f32.mxu0 %v244
      %469 = vmatmul.mubr.f32.gmra.mrb[0].mxu0 %v243
      %v470 = vpop.f32.mrb[0].mxu0
      %v471 = vadd.f32 %v377, %v470
      %v472 = vpop.f32.mrb[0].mxu0
      %473 = vmatprep.mubr.f32.mxu0 %v247
      %474 = vmatmul.mubr.f32.gmra.mrb[0].mxu0 %v246
      %v475 = vpop.f32.mrb[0].mxu0
      %v476 = vadd.f32 %v377, %v475
      %v477 = vpop.f32.mrb[0].mxu0
      %478 = vmatprep.mubr.f32.mxu0 %v250
      %479 = vmatmul.mubr.f32.gmra.mrb[0].mxu0 %v249
      %v480 = vpop.f32.mrb[0].mxu0
      %v481 = vadd.f32 %v377, %v480
      %v482 = vpop.f32.mrb[0].mxu0
      %483 = vmatprep.mubr.f32.mxu0 %v253
      %484 = vmatmul.mubr.f32.gmra.mrb[0].mxu0 %v252
      %v485 = vpop.f32.mrb[0].mxu0
      %v486 = vadd.f32 %v377, %v485
      %v487 = vpop.f32.mrb[0].mxu0
      %488 = vmatprep.mubr.f32.mxu0 %v256
      %489 = vmatmul.mubr.f32.gmra.mrb[0].mxu0 %v255
      %v490 = vpop.f32.mrb[0].mxu0
      %v491 = vadd.f32 %v377, %v490
      %v492 = vpop.f32.mrb[0].mxu0
      %493 = vmatprep.mubr.f32.mxu0 %v259
      %494 = vmatmul.mubr.f32.gmra.mrb[0].mxu0 %v258
      %v495 = vpop.f32.mrb[0].mxu0
      %v496 = vadd.f32 %v377, %v495
      %v497 = vpop.f32.mrb[0].mxu0
      %498 = vmatprep.mubr.f32.mxu0 %v262
      %499 = vmatmul.mubr.f32.gmra.mrb[0].mxu0 %v261
      %v500 = vpop.f32.mrb[0].mxu0
      %v501 = vadd.f32 %v377, %v500
      %v502 = vpop.f32.mrb[0].mxu0
      %503 = vmatprep.mubr.f32.mxu0 %v265
      %504 = vmatmul.mubr.f32.gmra.mrb[0].mxu0 %v264
      %v505 = vpop.f32.mrb[0].mxu0
      %v506 = vadd.f32 %v377, %v505
      %v507 = vpop.f32.mrb[0].mxu0
      %508 = vmatprep.mubr.f32.mxu0 %v268
      %509 = vmatmul.mubr.f32.gmra.mrb[0].mxu0 %v267
      %v510 = vpop.f32.mrb[0].mxu0
      %v511 = vadd.f32 %v377, %v510
      %v512 = vpop.f32.mrb[0].mxu0
      %513 = vmatprep.mubr.f32.mxu0 %v271
      %514 = vmatmul.mubr.f32.gmra.mrb[0].mxu0 %v270
      %v515 = vpop.f32.mrb[0].mxu0
      %v516 = vadd.f32 %v377, %v515
      %v517 = vpop.f32.mrb[0].mxu0
      %518 = vmatprep.mubr.f32.mxu0 %v274
      %519 = vmatmul.mubr.f32.gmra.mrb[0].mxu0 %v273
      %v520 = vpop.f32.mrb[0].mxu0
      %v521 = vadd.f32 %v377, %v520
      %v522 = vpop.f32.mrb[0].mxu0
      %523 = vmatprep.mubr.f32.mxu0 %v277
      %524 = vmatmul.mubr.f32.gmra.mrb[0].mxu0 %v276
      %v525 = vpop.f32.mrb[0].mxu0
      %v526 = vadd.f32 %v377, %v525
      %v527 = vpop.f32.mrb[0].mxu0
      %528 = vmatprep.mubr.f32.mxu0 %v280
      %529 = vmatmul.mubr.f32.gmra.mrb[0].mxu0 %v279
      %v530 = vpop.f32.mrb[0].mxu0
      %v531 = vadd.f32 %v377, %v530
      %v532 = vpop.f32.mrb[0].mxu0
      %533 = vmatprep.mubr.f32.mxu0 %v283
      %534 = vmatmul.mubr.f32.gmra.mrb[0].mxu0 %v282
      %v535 = vpop.f32.mrb[0].mxu0
      %v536 = vadd.f32 %v377, %v535
      %v537 = vpop.f32.mrb[0].mxu0
      %538 = vmatprep.mubr.f32.mxu0 %v286
      %539 = vmatmul.mubr.f32.gmra.mrb[0].mxu0 %v285
      %v540 = vpop.f32.mrb[0].mxu0
      %v541 = vadd.f32 %v377, %v540
      %v542 = vpop.f32.mrb[0].mxu0
      %543 = vmatprep.mubr.f32.mxu0 %v289
      %544 = vmatmul.mubr.f32.gmra.mrb[0].mxu0 %v288
      %v545 = vpop.f32.mrb[0].mxu0
      %v546 = vadd.f32 %v377, %v545
      %v547 = vpop.f32.mrb[0].mxu0
      %548 = vmatprep.mubr.f32.mxu0 %v292
      %549 = vmatmul.mubr.f32.gmra.mrb[0].mxu0 %v291
      %v550 = vpop.f32.mrb[0].mxu0
      %v551 = vadd.f32 %v377, %v550
      %v552 = vpop.f32.mrb[0].mxu0
      %553 = vmatprep.mubr.f32.mxu0 %v295
      %554 = vmatmul.mubr.f32.gmra.mrb[0].mxu0 %v294
      %v555 = vpop.f32.mrb[0].mxu0
      %v556 = vadd.f32 %v377, %v555
      %v557 = vpop.f32.mrb[0].mxu0
      %558 = vmatprep.mubr.f32.mxu0 %v298
      %559 = vmatmul.mubr.f32.gmra.mrb[0].mxu0 %v297
      %v560 = vpop.f32.mrb[0].mxu0
      %v561 = vadd.f32 %v377, %v560
      %v562 = vpop.f32.mrb[0].mxu0
      %563 = vmatprep.mubr.f32.mxu0 %v301
      %564 = vmatmul.mubr.f32.gmra.mrb[0].mxu0 %v300
      %v565 = vpop.f32.mrb[0].mxu0
      %v566 = vadd.f32 %v377, %v565
      %v567 = vpop.f32.mrb[0].mxu0
      %568 = vmatprep.mubr.f32.mxu0 %v304
      %569 = vmatmul.mubr.f32.gmra.mrb[0].mxu0 %v303
      %v570 = vpop.f32.mrb[0].mxu0
      %v571 = vadd.f32 %v377, %v570
      %v572 = vpop.f32.mrb[0].mxu0
      %573 = vmatprep.mubr.f32.mxu0 %v307
      %574 = vmatmul.mubr.f32.gmra.mrb[0].mxu0 %v306
      %v575 = vpop.f32.mrb[0].mxu0
      %v576 = vadd.f32 %v377, %v575
      %v577 = vpop.f32.mrb[0].mxu0
      %578 = vmatprep.mubr.f32.mxu0 %v310
      %579 = vmatmul.mubr.f32.gmra.mrb[0].mxu0 %v309
      %v580 = vpop.f32.mrb[0].mxu0
      %v581 = vadd.f32 %v377, %v580
      %v582 = vpop.f32.mrb[0].mxu0
      %583 = vmatprep.mubr.f32.mxu0 %v313
      %584 = vmatmul.mubr.f32.gmra.mrb[0].mxu0 %v312
      %v585 = vpop.f32.mrb[0].mxu0
      %v586 = vadd.f32 %v377, %v585
      %v587 = vpop.f32.mrb[0].mxu0
      %588 = vmatprep.mubr.f32.mxu0 %v316
      %589 = vmatmul.mubr.f32.gmra.mrb[0].mxu0 %v315
      %v590 = vpop.f32.mrb[0].mxu0
      %v591 = vadd.f32 %v377, %v590
      %v592 = vpop.f32.mrb[0].mxu0
      %593 = vmatprep.mubr.f32.mxu0 %v319
      %594 = vmatmul.mubr.f32.gmra.mrb[0].mxu0 %v318
      %v595 = vpop.f32.mrb[0].mxu0
      %v596 = vadd.f32 %v377, %v595
      %v597 = vpop.f32.mrb[0].mxu0
      %598 = vmatprep.mubr.f32.mxu0 %v322
      %599 = vmatmul.mubr.f32.gmra.mrb[0].mxu0 %v321
      %v600 = vpop.f32.mrb[0].mxu0
      %v601 = vadd.f32 %v377, %v600
      %v602 = vpop.f32.mrb[0].mxu0
      %603 = vdwg.mxu0
      %604 = vmatprep.subr.mxu0 0.0
      %605 = vmatpush1.msra.mxu0 %v356
      %606 = vmatprep.subr.mxu0 0.0
      %607 = vmatpush1.msra.mxu0 %v357
      %608 = vmatprep.subr.mxu0 0.0
      %609 = vmatpush1.msra.mxu0 %v358
      %610 = vmatprep.subr.mxu0 0.0
      %611 = vmatpush1.msra.mxu0 %v359
      %612 = vmatprep.subr.mxu0 0.0
      %613 = vmatpush1.msra.mxu0 %v360
      %614 = vmatprep.subr.mxu0 0.0
      %615 = vmatpush1.msra.mxu0 %v361
      %616 = vmatprep.subr.mxu0 0.0
      %617 = vmatpush1.msra.mxu0 %v362
      %618 = vmatprep.subr.mxu0 0.0
      %619 = vmatpush1.msra.mxu0 %v363
      %620 = vmatprep.subr.mxu0 0.0
      %621 = vmatpush1.msra.mxu0 %v364
      %622 = vmatprep.subr.mxu0 0.0
      %623 = vmatpush1.msra.mxu0 %v365
      %624 = vmatprep.subr.mxu0 0.0
      %625 = vmatpush1.msra.mxu0 %v366
      %626 = vmatprep.subr.mxu0 0.0
      %627 = vmatpush1.msra.mxu0 %v367
      %628 = vmatprep.subr.mxu0 0.0
      %629 = vmatpush1.msra.mxu0 %v368
      %630 = vmatprep.subr.mxu0 0.0
      %631 = vmatpush1.msra.mxu0 %v369
      %632 = vmatprep.subr.mxu0 0.0
      %633 = vmatpush1.msra.mxu0 %v370
      %634 = vmatprep.subr.mxu0 0.0
      %635 = vmatpush1.msra.mxu0 %v371
      %636 = vmatprep.subr.mxu0 0.0
      %637 = vmatpush1.msra.mxu0 0.0
      %638 = vmatprep.subr.mxu0 0.0
      %639 = vmatpush1.msra.mxu0 0.0
      %640 = vmatprep.subr.mxu0 0.0
      %641 = vmatpush1.msra.mxu0 0.0
      %642 = vmatprep.subr.mxu0 0.0
      %643 = vmatpush1.msra.mxu0 0.0
      %644 = vmatprep.subr.mxu0 0.0
      %645 = vmatpush1.msra.mxu0 0.0
      %646 = vmatprep.subr.mxu0 0.0
      %647 = vmatpush1.msra.mxu0 0.0
      %648 = vmatprep.subr.mxu0 0.0
      %649 = vmatpush1.msra.mxu0 0.0
      %650 = vmatprep.subr.mxu0 0.0
      %651 = vmatpush1.msra.mxu0 0.0
      %652 = vmatprep.subr.mxu0 0.0
      %653 = vmatpush1.msra.mxu0 0.0
      %654 = vmatprep.subr.mxu0 0.0
      %655 = vmatpush1.msra.mxu0 0.0
      %656 = vmatprep.subr.mxu0 0.0
      %657 = vmatpush1.msra.mxu0 0.0
      %658 = vmatprep.subr.mxu0 0.0
      %659 = vmatpush1.msra.mxu0 0.0
      %660 = vmatprep.subr.mxu0 0.0
      %661 = vmatpush1.msra.mxu0 0.0
      %662 = vmatprep.subr.mxu0 0.0
      %663 = vmatpush1.msra.mxu0 0.0
      %664 = vmatprep.subr.mxu0 0.0
      %665 = vmatpush1.msra.mxu0 0.0
      %666 = vmatprep.subr.mxu0 0.0
      %667 = vmatpush1.msra.mxu0 0.0
      %668 = vmatprep.mubr.f32.mxu0 0.0
      %669 = vmatmul.mubr.f32.gmra.mrb[0].mxu0 %v230
      %v670 = vpop.f32.mrb[0].mxu0
      %v671 = vadd.f32 %v446, %v670
      %v672 = vpop.f32.mrb[0].mxu0
      %673 = vmatprep.mubr.f32.mxu0 0.0
      %674 = vmatmul.mubr.f32.gmra.mrb[0].mxu0 %v233
      %v675 = vpop.f32.mrb[0].mxu0
      %v676 = vadd.f32 %v451, %v675
      %v677 = vpop.f32.mrb[0].mxu0
      %678 = vmatprep.mubr.f32.mxu0 0.0
      %679 = vmatmul.mubr.f32.gmra.mrb[0].mxu0 %v236
      %v680 = vpop.f32.mrb[0].mxu0
      %v681 = vadd.f32 %v456, %v680
      %v682 = vpop.f32.mrb[0].mxu0
      %683 = vmatprep.mubr.f32.mxu0 0.0
      %684 = vmatmul.mubr.f32.gmra.mrb[0].mxu0 %v239
      %v685 = vpop.f32.mrb[0].mxu0
      %v686 = vadd.f32 %v461, %v685
      %v687 = vpop.f32.mrb[0].mxu0
      %688 = vmatprep.mubr.f32.mxu0 0.0
      %689 = vmatmul.mubr.f32.gmra.mrb[0].mxu0 %v242
      %v690 = vpop.f32.mrb[0].mxu0
      %v691 = vadd.f32 %v466, %v690
      %v692 = vpop.f32.mrb[0].mxu0
      %693 = vmatprep.mubr.f32.mxu0 0.0
      %694 = vmatmul.mubr.f32.gmra.mrb[0].mxu0 %v245
      %v695 = vpop.f32.mrb[0].mxu0
      %v696 = vadd.f32 %v471, %v695
      %v697 = vpop.f32.mrb[0].mxu0
      %698 = vmatprep.mubr.f32.mxu0 0.0
      %699 = vmatmul.mubr.f32.gmra.mrb[0].mxu0 %v248
      %v700 = vpop.f32.mrb[0].mxu0
      %v701 = vadd.f32 %v476, %v700
      %v702 = vpop.f32.mrb[0].mxu0
      %703 = vmatprep.mubr.f32.mxu0 0.0
      %704 = vmatmul.mubr.f32.gmra.mrb[0].mxu0 %v251
      %v705 = vpop.f32.mrb[0].mxu0
      %v706 = vadd.f32 %v481, %v705
      %v707 = vpop.f32.mrb[0].mxu0
      %708 = vmatprep.mubr.f32.mxu0 0.0
      %709 = vmatmul.mubr.f32.gmra.mrb[0].mxu0 %v254
      %v710 = vpop.f32.mrb[0].mxu0
      %v711 = vadd.f32 %v486, %v710
      %v712 = vpop.f32.mrb[0].mxu0
      %713 = vmatprep.mubr.f32.mxu0 0.0
      %714 = vmatmul.mubr.f32.gmra.mrb[0].mxu0 %v257
      %v715 = vpop.f32.mrb[0].mxu0
      %v716 = vadd.f32 %v491, %v715
      %v717 = vpop.f32.mrb[0].mxu0
      %718 = vmatprep.mubr.f32.mxu0 0.0
      %719 = vmatmul.mubr.f32.gmra.mrb[0].mxu0 %v260
      %v720 = vpop.f32.mrb[0].mxu0
      %v721 = vadd.f32 %v496, %v720
      %v722 = vpop.f32.mrb[0].mxu0
      %723 = vmatprep.mubr.f32.mxu0 0.0
      %724 = vmatmul.mubr.f32.gmra.mrb[0].mxu0 %v263
      %v725 = vpop.f32.mrb[0].mxu0
      %v726 = vadd.f32 %v501, %v725
      %v727 = vpop.f32.mrb[0].mxu0
      %728 = vmatprep.mubr.f32.mxu0 0.0
      %729 = vmatmul.mubr.f32.gmra.mrb[0].mxu0 %v266
      %v730 = vpop.f32.mrb[0].mxu0
      %v731 = vadd.f32 %v506, %v730
      %v732 = vpop.f32.mrb[0].mxu0
      %733 = vmatprep.mubr.f32.mxu0 0.0
      %734 = vmatmul.mubr.f32.gmra.mrb[0].mxu0 %v269
      %v735 = vpop.f32.mrb[0].mxu0
      %v736 = vadd.f32 %v511, %v735
      %v737 = vpop.f32.mrb[0].mxu0
      %738 = vmatprep.mubr.f32.mxu0 0.0
      %739 = vmatmul.mubr.f32.gmra.mrb[0].mxu0 %v272
      %v740 = vpop.f32.mrb[0].mxu0
      %v741 = vadd.f32 %v516, %v740
      %v742 = vpop.f32.mrb[0].mxu0
      %743 = vmatprep.mubr.f32.mxu0 0.0
      %744 = vmatmul.mubr.f32.gmra.mrb[0].mxu0 %v275
      %v745 = vpop.f32.mrb[0].mxu0
      %v746 = vadd.f32 %v521, %v745
      %v747 = vpop.f32.mrb[0].mxu0
      %748 = vmatprep.mubr.f32.mxu0 0.0
      %749 = vmatmul.mubr.f32.gmra.mrb[0].mxu0 %v278
      %v750 = vpop.f32.mrb[0].mxu0
      %v751 = vadd.f32 %v526, %v750
      %v752 = vpop.f32.mrb[0].mxu0
      %753 = vmatprep.mubr.f32.mxu0 0.0
      %754 = vmatmul.mubr.f32.gmra.mrb[0].mxu0 %v281
      %v755 = vpop.f32.mrb[0].mxu0
      %v756 = vadd.f32 %v531, %v755
      %v757 = vpop.f32.mrb[0].mxu0
      %758 = vmatprep.mubr.f32.mxu0 0.0
      %759 = vmatmul.mubr.f32.gmra.mrb[0].mxu0 %v284
      %v760 = vpop.f32.mrb[0].mxu0
      %v761 = vadd.f32 %v536, %v760
      %v762 = vpop.f32.mrb[0].mxu0
      %763 = vmatprep.mubr.f32.mxu0 0.0
      %764 = vmatmul.mubr.f32.gmra.mrb[0].mxu0 %v287
      %v765 = vpop.f32.mrb[0].mxu0
      %v766 = vadd.f32 %v541, %v765
      %v767 = vpop.f32.mrb[0].mxu0
      %768 = vmatprep.mubr.f32.mxu0 0.0
      %769 = vmatmul.mubr.f32.gmra.mrb[0].mxu0 %v290
      %v770 = vpop.f32.mrb[0].mxu0
      %v771 = vadd.f32 %v546, %v770
      %v772 = vpop.f32.mrb[0].mxu0
      %773 = vmatprep.mubr.f32.mxu0 0.0
      %774 = vmatmul.mubr.f32.gmra.mrb[0].mxu0 %v293
      %v775 = vpop.f32.mrb[0].mxu0
      %v776 = vadd.f32 %v551, %v775
      %v777 = vpop.f32.mrb[0].mxu0
      %778 = vmatprep.mubr.f32.mxu0 0.0
      %779 = vmatmul.mubr.f32.gmra.mrb[0].mxu0 %v296
      %v780 = vpop.f32.mrb[0].mxu0
      %v781 = vadd.f32 %v556, %v780
      %v782 = vpop.f32.mrb[0].mxu0
      %783 = vmatprep.mubr.f32.mxu0 0.0
      %784 = vmatmul.mubr.f32.gmra.mrb[0].mxu0 %v299
      %v785 = vpop.f32.mrb[0].mxu0
      %v786 = vadd.f32 %v561, %v785
      %v787 = vpop.f32.mrb[0].mxu0
      %788 = vmatprep.mubr.f32.mxu0 0.0
      %789 = vmatmul.mubr.f32.gmra.mrb[0].mxu0 %v302
      %v790 = vpop.f32.mrb[0].mxu0
      %v791 = vadd.f32 %v566, %v790
      %v792 = vpop.f32.mrb[0].mxu0
      %793 = vmatprep.mubr.f32.mxu0 0.0
      %794 = vmatmul.mubr.f32.gmra.mrb[0].mxu0 %v305
      %v795 = vpop.f32.mrb[0].mxu0
      %v796 = vadd.f32 %v571, %v795
      %v797 = vpop.f32.mrb[0].mxu0
      %798 = vmatprep.mubr.f32.mxu0 0.0
      %799 = vmatmul.mubr.f32.gmra.mrb[0].mxu0 %v308
      %v800 = vpop.f32.mrb[0].mxu0
      %v801 = vadd.f32 %v576, %v800
      %v802 = vpop.f32.mrb[0].mxu0
      %803 = vmatprep.mubr.f32.mxu0 0.0
      %804 = vmatmul.mubr.f32.gmra.mrb[0].mxu0 %v311
      %v805 = vpop.f32.mrb[0].mxu0
      %v806 = vadd.f32 %v581, %v805
      %v807 = vpop.f32.mrb[0].mxu0
      %808 = vmatprep.mubr.f32.mxu0 0.0
      %809 = vmatmul.mubr.f32.gmra.mrb[0].mxu0 %v314
      %v810 = vpop.f32.mrb[0].mxu0
      %v811 = vadd.f32 %v586, %v810
      %v812 = vpop.f32.mrb[0].mxu0
      %813 = vmatprep.mubr.f32.mxu0 0.0
      %814 = vmatmul.mubr.f32.gmra.mrb[0].mxu0 %v317
      %v815 = vpop.f32.mrb[0].mxu0
      %v816 = vadd.f32 %v591, %v815
      %v817 = vpop.f32.mrb[0].mxu0
      %818 = vmatprep.mubr.f32.mxu0 0.0
      %819 = vmatmul.mubr.f32.gmra.mrb[0].mxu0 %v320
      %v820 = vpop.f32.mrb[0].mxu0
      %v821 = vadd.f32 %v596, %v820
      %v822 = vpop.f32.mrb[0].mxu0
      %823 = vmatprep.mubr.f32.mxu0 0.0
      %824 = vmatmul.mubr.f32.gmra.mrb[0].mxu0 %v323
      %v825 = vpop.f32.mrb[0].mxu0
      %v826 = vadd.f32 %v601, %v825
      %v827 = vpop.f32.mrb[0].mxu0
      %828 = vdwg.mxu0
      %v829 = vsub.f32 0.0, %v671
      %v830 = vsub.f32 0.0, %v676
      %v831 = vsub.f32 0.0, %v681
      %v832 = vsub.f32 0.0, %v686
      %v833 = vsub.f32 0.0, %v691
      %v834 = vsub.f32 0.0, %v696
      %v835 = vsub.f32 0.0, %v701
      %v836 = vsub.f32 0.0, %v706
      %v837 = vsub.f32 0.0, %v711
      %v838 = vsub.f32 0.0, %v716
      %v839 = vsub.f32 0.0, %v721
      %v840 = vsub.f32 0.0, %v726
      %v841 = vsub.f32 0.0, %v731
      %v842 = vsub.f32 0.0, %v736
      %v843 = vsub.f32 0.0, %v741
      %v844 = vsub.f32 0.0, %v746
      %v845 = vsub.f32 0.0, %v751
      %v846 = vsub.f32 0.0, %v756
      %v847 = vsub.f32 0.0, %v761
      %v848 = vsub.f32 0.0, %v766
      %v849 = vsub.f32 0.0, %v771
      %v850 = vsub.f32 0.0, %v776
      %v851 = vsub.f32 0.0, %v781
      %v852 = vsub.f32 0.0, %v786
      %v853 = vsub.f32 0.0, %v791
      %v854 = vsub.f32 0.0, %v796
      %v855 = vsub.f32 0.0, %v801
      %v856 = vsub.f32 0.0, %v806
      %v857 = vsub.f32 0.0, %v811
      %v858 = vsub.f32 0.0, %v816
      %v859 = vsub.f32 0.0, %v821
      %v860 = vsub.f32 0.0, %v826
      %v861 = vmul.f32 %v829, 1.442695
      %v862 = vpow.pop %v861
      %v863 = vmul.f32 %v830, 1.442695
      %v864 = vpow.pop %v863
      %v865 = vmul.f32 %v831, 1.442695
      %v866 = vpow.pop %v865
      %v867 = vmul.f32 %v832, 1.442695
      %v868 = vpow.pop %v867
      %v869 = vmul.f32 %v833, 1.442695
      %v870 = vpow.pop %v869
      %v871 = vmul.f32 %v834, 1.442695
      %v872 = vpow.pop %v871
      %v873 = vmul.f32 %v835, 1.442695
      %v874 = vpow.pop %v873
      %v875 = vmul.f32 %v836, 1.442695
      %v876 = vpow.pop %v875
      %v877 = vmul.f32 %v837, 1.442695
      %v878 = vpow.pop %v877
      %v879 = vmul.f32 %v838, 1.442695
      %v880 = vpow.pop %v879
      %v881 = vmul.f32 %v839, 1.442695
      %v882 = vpow.pop %v881
      %v883 = vmul.f32 %v840, 1.442695
      %v884 = vpow.pop %v883
      %v885 = vmul.f32 %v841, 1.442695
      %v886 = vpow.pop %v885
      %v887 = vmul.f32 %v842, 1.442695
      %v888 = vpow.pop %v887
      %v889 = vmul.f32 %v843, 1.442695
      %v890 = vpow.pop %v889
      %v891 = vmul.f32 %v844, 1.442695
      %v892 = vpow.pop %v891
      %v893 = vmul.f32 %v845, 1.442695
      %v894 = vpow.pop %v893
      %v895 = vmul.f32 %v846, 1.442695
      %v896 = vpow.pop %v895
      %v897 = vmul.f32 %v847, 1.442695
      %v898 = vpow.pop %v897
      %v899 = vmul.f32 %v848, 1.442695
      %v900 = vpow.pop %v899
      %v901 = vmul.f32 %v849, 1.442695
      %v902 = vpow.pop %v901
      %v903 = vmul.f32 %v850, 1.442695
      %v904 = vpow.pop %v903
      %v905 = vmul.f32 %v851, 1.442695
      %v906 = vpow.pop %v905
      %v907 = vmul.f32 %v852, 1.442695
      %v908 = vpow.pop %v907
      %v909 = vmul.f32 %v853, 1.442695
      %v910 = vpow.pop %v909
      %v911 = vmul.f32 %v854, 1.442695
      %v912 = vpow.pop %v911
      %v913 = vmul.f32 %v855, 1.442695
      %v914 = vpow.pop %v913
      %v915 = vmul.f32 %v856, 1.442695
      %v916 = vpow.pop %v915
      %v917 = vmul.f32 %v857, 1.442695
      %v918 = vpow.pop %v917
      %v919 = vmul.f32 %v858, 1.442695
      %v920 = vpow.pop %v919
      %v921 = vmul.f32 %v859, 1.442695
      %v922 = vpow.pop %v921
      %v923 = vmul.f32 %v860, 1.442695
      %v924 = vpow.pop %v923
      %v925 = vadd.f32 %v862, 1.0
      %v926 = vadd.f32 %v864, 1.0
      %v927 = vadd.f32 %v866, 1.0
      %v928 = vadd.f32 %v868, 1.0
      %v929 = vadd.f32 %v870, 1.0
      %v930 = vadd.f32 %v872, 1.0
      %v931 = vadd.f32 %v874, 1.0
      %v932 = vadd.f32 %v876, 1.0
      %v933 = vadd.f32 %v878, 1.0
      %v934 = vadd.f32 %v880, 1.0
      %v935 = vadd.f32 %v882, 1.0
      %v936 = vadd.f32 %v884, 1.0
      %v937 = vadd.f32 %v886, 1.0
      %v938 = vadd.f32 %v888, 1.0
      %v939 = vadd.f32 %v890, 1.0
      %v940 = vadd.f32 %v892, 1.0
      %v941 = vadd.f32 %v894, 1.0
      %v942 = vadd.f32 %v896, 1.0
      %v943 = vadd.f32 %v898, 1.0
      %v944 = vadd.f32 %v900, 1.0
      %v945 = vadd.f32 %v902, 1.0
      %v946 = vadd.f32 %v904, 1.0
      %v947 = vadd.f32 %v906, 1.0
      %v948 = vadd.f32 %v908, 1.0
      %v949 = vadd.f32 %v910, 1.0
      %v950 = vadd.f32 %v912, 1.0
      %v951 = vadd.f32 %v914, 1.0
      %v952 = vadd.f32 %v916, 1.0
      %v953 = vadd.f32 %v918, 1.0
      %v954 = vadd.f32 %v920, 1.0
      %v955 = vadd.f32 %v922, 1.0
      %v956 = vadd.f32 %v924, 1.0
      %v957 = vrcp.pop %v925
      %v958 = vmul.f32 1.0, %v957
      %v959 = vrcp.pop %v926
      %v960 = vmul.f32 1.0, %v959
      %v961 = vrcp.pop %v927
      %v962 = vmul.f32 1.0, %v961
      %v963 = vrcp.pop %v928
      %v964 = vmul.f32 1.0, %v963
      %v965 = vrcp.pop %v929
      %v966 = vmul.f32 1.0, %v965
      %v967 = vrcp.pop %v930
      %v968 = vmul.f32 1.0, %v967
      %v969 = vrcp.pop %v931
      %v970 = vmul.f32 1.0, %v969
      %v971 = vrcp.pop %v932
      %v972 = vmul.f32 1.0, %v971
      %v973 = vrcp.pop %v933
      %v974 = vmul.f32 1.0, %v973
      %v975 = vrcp.pop %v934
      %v976 = vmul.f32 1.0, %v975
      %v977 = vrcp.pop %v935
      %v978 = vmul.f32 1.0, %v977
      %v979 = vrcp.pop %v936
      %v980 = vmul.f32 1.0, %v979
      %v981 = vrcp.pop %v937
      %v982 = vmul.f32 1.0, %v981
      %v983 = vrcp.pop %v938
      %v984 = vmul.f32 1.0, %v983
      %v985 = vrcp.pop %v939
      %v986 = vmul.f32 1.0, %v985
      %v987 = vrcp.pop %v940
      %v988 = vmul.f32 1.0, %v987
      %v989 = vrcp.pop %v941
      %v990 = vmul.f32 1.0, %v989
      %v991 = vrcp.pop %v942
      %v992 = vmul.f32 1.0, %v991
      %v993 = vrcp.pop %v943
      %v994 = vmul.f32 1.0, %v993
      %v995 = vrcp.pop %v944
      %v996 = vmul.f32 1.0, %v995
      %v997 = vrcp.pop %v945
      %v998 = vmul.f32 1.0, %v997
      %v999 = vrcp.pop %v946
      %v1000 = vmul.f32 1.0, %v999
      %v1001 = vrcp.pop %v947
      %v1002 = vmul.f32 1.0, %v1001
      %v1003 = vrcp.pop %v948
      %v1004 = vmul.f32 1.0, %v1003
      %v1005 = vrcp.pop %v949
      %v1006 = vmul.f32 1.0, %v1005
      %v1007 = vrcp.pop %v950
      %v1008 = vmul.f32 1.0, %v1007
      %v1009 = vrcp.pop %v951
      %v1010 = vmul.f32 1.0, %v1009
      %v1011 = vrcp.pop %v952
      %v1012 = vmul.f32 1.0, %v1011
      %v1013 = vrcp.pop %v953
      %v1014 = vmul.f32 1.0, %v1013
      %v1015 = vrcp.pop %v954
      %v1016 = vmul.f32 1.0, %v1015
      %v1017 = vrcp.pop %v955
      %v1018 = vmul.f32 1.0, %v1017
      %v1019 = vrcp.pop %v956
      %v1020 = vmul.f32 1.0, %v1019
      %1021 = vst [vmem:[%s226] sm:$0xff] %v958
      %1022 = vst [vmem:[%s226 + $0x8] sm:$0xff] %v960
      %1023 = vst [vmem:[%s226 + $0x10] sm:$0xff] %v962
      %1024 = vst [vmem:[%s226 + $0x18] sm:$0xff] %v964
      %1025 = vst [vmem:[%s226 + $0x20] sm:$0xff] %v966
      %1026 = vst [vmem:[%s226 + $0x28] sm:$0xff] %v968
      %1027 = vst [vmem:[%s226 + $0x30] sm:$0xff] %v970
      %1028 = vst [vmem:[%s226 + $0x38] sm:$0xff] %v972
      %1029 = vst [vmem:[%s226 + $0x40] sm:$0xff] %v974
      %1030 = vst [vmem:[%s226 + $0x48] sm:$0xff] %v976
      %1031 = vst [vmem:[%s226 + $0x50] sm:$0xff] %v978
      %1032 = vst [vmem:[%s226 + $0x58] sm:$0xff] %v980
      %1033 = vst [vmem:[%s226 + $0x60] sm:$0xff] %v982
      %1034 = vst [vmem:[%s226 + $0x68] sm:$0xff] %v984
      %1035 = vst [vmem:[%s226 + $0x70] sm:$0xff] %v986
      %1036 = vst [vmem:[%s226 + $0x78] sm:$0xff] %v988
      %1037 = vst [vmem:[%s226 + $0x80] sm:$0xff] %v990
      %1038 = vst [vmem:[%s226 + $0x88] sm:$0xff] %v992
      %1039 = vst [vmem:[%s226 + $0x90] sm:$0xff] %v994
      %1040 = vst [vmem:[%s226 + $0x98] sm:$0xff] %v996
      %1041 = vst [vmem:[%s226 + $0xa0] sm:$0xff] %v998
      %1042 = vst [vmem:[%s226 + $0xa8] sm:$0xff] %v1000
      %1043 = vst [vmem:[%s226 + $0xb0] sm:$0xff] %v1002
      %1044 = vst [vmem:[%s226 + $0xb8] sm:$0xff] %v1004
      %1045 = vst [vmem:[%s226 + $0xc0] sm:$0xff] %v1006
      %1046 = vst [vmem:[%s226 + $0xc8] sm:$0xff] %v1008
      %1047 = vst [vmem:[%s226 + $0xd0] sm:$0xff] %v1010
      %1048 = vst [vmem:[%s226 + $0xd8] sm:$0xff] %v1012
      %1049 = vst [vmem:[%s226 + $0xe0] sm:$0xff] %v1014
      %1050 = vst [vmem:[%s226 + $0xe8] sm:$0xff] %v1016
      %1051 = vst [vmem:[%s226 + $0xf0] sm:$0xff] %v1018
      %1052 = vst [vmem:[%s226 + $0xf8] sm:$0xff] %v1020
      %s1053 = smul.u32 32, %s18
      %p1054 = scmp.lt.s32.totalorder %s1053, 63
      %s1055 = scalar_select %p1054, %s1053, 63
      %p1056 = scmp.lt.s32.totalorder %s19, 0
      %s1057 = scalar_select %p1056, %s19, 0
      %s1058 = sadd.s32 %s1057, %s1055
      %s1059 = smul.addr %s1058, 8
      %s1060 = scalar_lea.vmem %s3, %s1059
      // Predicated region
      $region33: #{espcn_forward.5} parent=31 // pred_check
        %p1061 = pneg %p124
      $region34: #{espcn_forward.5} parent=31 // pred_check_branch
        %1063 = sbr.rel (%p1061) target = $region36
      $region35: #{espcn_forward.5} parent=31 // pred_region
        %s1064 = smul.u32 32, %s18
      $region36: #{espcn_forward.5} parent=31 // pred_fallthru
        _
    $region32: #{espcn_forward.5} parent=5 // pred_fallthru
      _
    %p1065 = scmp.le.s32.totalorder 2, %s9
    // Predicated region
    $region37: #{espcn_forward.5} parent=5 // pred_check
      %p1066 = pneg %p1065
    $region38: #{espcn_forward.5} parent=5 // pred_check_branch
      %1068 = sbr.rel (%p1066) target = $region40
    $region39: #{espcn_forward.5} parent=5 // pred_region
      %s1069 = ssub.s32 %s9, 2
      // Predicated region
      $region41: #{espcn_forward.5} parent=39 // pred_check
        %p1070 = pneg %p130
      $region42: #{espcn_forward.5} parent=39 // pred_check_branch
        %1072 = sbr.rel (%p1070) target = $region44
      $region43: #{espcn_forward.5} parent=39 // pred_region
        %s1073 = smul.u32 32, %s20
        %p1074 = scmp.lt.s32.totalorder %s1073, 63
        %s1075 = scalar_select %p1074, %s1073, 63
        %p1076 = scmp.lt.s32.totalorder %s21, 0
        %s1077 = scalar_select %p1076, %s21, 0
        %s1078 = sadd.s32 %s1077, %s1075
        %s1079 = smul.addr %s1078, 8
        %s1080 = scalar_lea.vmem %s3, %s1079
      $region44: #{espcn_forward.5} parent=39 // pred_fallthru
        _
    $region40: #{espcn_forward.5} parent=5 // pred_fallthru
      _
  $region6: #{espcn_forward.5} parent=0 // loop_footer
    %s13 = sadd.s32 1, %s9
  $region7: #{espcn_forward.5} parent=0 // loop_footer_branch
    %8 = sbr.rel target = $region3
  $region8: #{espcn_forward.5} parent=0 // loop_exit
    _

</llo_original>
